<compile_context>
chip_gen: v5e
topology: v5e:2x2
jax: 0.10.0
libtpu: 0.0.40
codegen_flags: <defaults>
</compile_context>

<pallas_src>
import functools

import jax
import jax.numpy as jnp
import numpy as np
from jax import lax
from jax.experimental import pallas as pl
from jax.experimental.pallas import tpu as pltpu

K1 = 27          # conv1 im2col depth per pool-window position: 3*3*3
K1Q = 4 * K1     # conv1 lanes with the 4 pool-window positions packed: 108
K2 = 144         # conv2 im2col depth: 3*3*16


# ----------------------------------------------------------------------------
# Fused whole-network kernel (one grid step = one block of `bt` images)
# ----------------------------------------------------------------------------
def _fused_cifar_kernel(p1_ref, w1_ref, b1_ref, w2_ref, b2_ref,
                        wf1_ref, bf1_ref, wf2_ref, bf2_ref, out_ref, *, bt):
    f32 = jnp.float32
    bf16 = jnp.bfloat16

    # ---- conv1 + 2x2 max-pool + bias + ReLU (one K=108 matmul) -------------
    # p1_ref block: (64, bt, 108) = (pooled spatial m=oh2*8+ow2, n, q*27 + k)
    lhs1 = p1_ref[...].reshape(64 * bt, K1Q)                       # bf16
    c1 = jnp.dot(lhs1, w1_ref[...], preferred_element_type=f32)    # (64*bt, 64)
    # Block-diagonal weight => column group q holds conv1 output for window
    # position q.  Max over the four 16-lane groups == 2x2 max-pool; bias and
    # ReLU commute with the max, so apply them once after pooling.
    pool1 = jnp.maximum(jnp.maximum(c1[:, 0:16], c1[:, 16:32]),
                        jnp.maximum(c1[:, 32:48], c1[:, 48:64]))   # (64*bt, 16)
    pool1 = jnp.maximum(pool1 + b1_ref[...], 0.0)
    pool1 = pool1.astype(bf16).reshape(64, bt, 16)                 # (m=ih*8+iw, n, c)

    # ---- conv2 (in-VMEM K=144 im2col, stride 2, pad 1) — one matmul ---------
    zero16 = jnp.zeros((bt, 16), bf16)
    tap_slabs = []
    for kh in range(3):
        for kw in range(3):
            chunks = []
            for oh in range(4):
                for ow in range(4):
                    ih = 2 * oh + kh - 1
                    iw = 2 * ow + kw - 1
                    if 0 <= ih < 8 and 0 <= iw < 8:
                        chunks.append(pool1[ih * 8 + iw])          # (bt, 16)
                    else:
                        chunks.append(zero16)                      # zero-padding tap
            tap_slabs.append(jnp.concatenate(chunks, axis=0))      # (16*bt, 16)
    lhs2 = jnp.concatenate(tap_slabs, axis=-1)                     # (16*bt, 144) bf16
    c2 = jnp.dot(lhs2, w2_ref[...], preferred_element_type=f32)    # (16*bt, 32)
    c2 = c2.reshape(16, bt, 32)                                    # (p=oh*4+ow, n, c)

    # ---- 2x2 max-pool + bias + ReLU, fc1 input assembled lane-dense ---------
    blocks = []
    for i in range(2):
        for j in range(2):
            p = 8 * i + 2 * j
            blocks.append(jnp.maximum(jnp.maximum(c2[p], c2[p + 1]),
                                      jnp.maximum(c2[p + 4], c2[p + 5])))
    feat = jnp.concatenate(blocks, axis=-1)                        # (bt, 128) f32
    feat = jnp.maximum(feat + b2_ref[...], 0.0).astype(bf16)       # b2 pre-tiled x4

    # ---- fc1 (flatten perm folded into weight) + ReLU -----------------------
    h = jnp.dot(feat, wf1_ref[...], preferred_element_type=f32) + bf1_ref[...]
    h = jnp.maximum(h, 0.0).astype(bf16)                           # (bt, 64)
    # TODO(synk): Dropout(p=0.5) treated as eval-mode identity (no RNG mask/scale).

    # ---- fc2 (output lane-padded to 128; real logits are columns 0..9) ------
    out_ref[...] = jnp.dot(h, wf2_ref[...], preferred_element_type=f32) + bf2_ref[...]


# ----------------------------------------------------------------------------
# Parameters (PyTorch layout) and one-time conversion to the kernel layout
# ----------------------------------------------------------------------------
def init_params(key):
    ks = jax.random.split(key, 8)
    return {
        "conv1_w": jax.random.normal(ks[0], (16, 3, 3, 3), jnp.float32) * 0.1,
        "conv1_b": jax.random.normal(ks[1], (16,), jnp.float32) * 0.1,
        "conv2_w": jax.random.normal(ks[2], (32, 16, 3, 3), jnp.float32) * 0.1,
        "conv2_b": jax.random.normal(ks[3], (32,), jnp.float32) * 0.1,
        "fc1_w": jax.random.normal(ks[4], (64, 128), jnp.float32) * 0.1,
        "fc1_b": jax.random.normal(ks[5], (64,), jnp.float32) * 0.1,
        "fc2_w": jax.random.normal(ks[6], (10, 64), jnp.float32) * 0.1,
        "fc2_b": jax.random.normal(ks[7], (10,), jnp.float32) * 0.1,
    }


def prepare_params(p):
    """Fold transposes / flatten perm / padding / block-diag into the weights."""
    # conv1: (O,I,kh,kw) -> rows (kh*3+kw)*3+ci, then block-diagonal over the
    # four pool-window positions so conv1 + pool become one K=108 matmul.
    w1 = jnp.transpose(p["conv1_w"], (2, 3, 1, 0)).reshape(K1, 16).astype(jnp.float32)
    w1bd = jnp.zeros((K1Q, 64), jnp.float32)
    for q in range(4):
        w1bd = w1bd.at[q * K1:(q + 1) * K1, q * 16:(q + 1) * 16].set(w1)
    w1bd = w1bd.astype(jnp.bfloat16)
    b1 = p["conv1_b"].reshape(1, 16).astype(jnp.float32)

    # conv2: rows ordered (kh*3+kw)*16 + cin to match the in-kernel im2col.
    w2 = jnp.transpose(p["conv2_w"], (2, 3, 1, 0)).reshape(K2, 32).astype(jnp.bfloat16)
    # Bias is applied after the 2x2 pool on the lane-concatenated (bt,128)
    # feature block (4 pooled positions x 32 channels) -> tile it 4x.
    b2 = jnp.tile(p["conv2_b"].reshape(1, 32), (1, 4)).astype(jnp.float32)     # (1,128)

    # fc1: kernel feeds lanes g = (h*2+w)*32 + c; PyTorch's x.view(N,-1)
    # flattens NCHW as f = c*4 + h*2 + w.  Fold perm + transpose into weight.
    perm = np.array([(g % 32) * 4 + g // 32 for g in range(128)], dtype=np.int32)
    wf1 = p["fc1_w"].T[perm, :].astype(jnp.bfloat16)                           # (128, 64)
    bf1 = p["fc1_b"].reshape(1, 64).astype(jnp.float32)

    # fc2: pre-transpose and lane-pad the 10-wide output to 128 (dense stores).
    wf2 = jnp.zeros((64, 128), jnp.float32).at[:, :10].set(
        p["fc2_w"].T).astype(jnp.bfloat16)
    bf2 = jnp.zeros((1, 128), jnp.float32).at[:, :10].set(p["fc2_b"].reshape(1, 10))
    return dict(w1bd=w1bd, b1=b1, w2=w2, b2=b2, wf1=wf1, bf1=bf1, wf2=wf2, bf2=bf2)


# ----------------------------------------------------------------------------
# JAX glue: conv1 im2col with the 4 pool-window positions packed into lanes
# ----------------------------------------------------------------------------
def _round_up(x, m):
    return (x + m - 1) // m * m


def _conv1_pool_patches(x_nchw):
    """Returns (64, N, 108):
       [oh2*8+ow2, n, (2a+b)*27 + (kh*3+kw)*3+ci] =
           xpad_nhwc[n, 2*(2*oh2+a)+kh, 2*(2*ow2+b)+kw, ci]
    """
    n = x_nchw.shape[0]
    x = jnp.transpose(x_nchw, (0, 2, 3, 1)).astype(jnp.float32)      # (n,32,32,3)
    xp = jnp.pad(x, ((0, 0), (1, 1), (1, 1), (0, 0)))                # (n,34,34,3)
    cols = []
    for kh in range(3):
        for kw in range(3):
            cols.append(xp[:, kh:kh + 32:2, kw:kw + 32:2, :])        # (n,16,16,3)
    patches = jnp.concatenate(cols, axis=-1)                         # (n,16,16,27)
    patches = patches.reshape(n, 8, 2, 8, 2, K1)                     # (n,oh2,a,ow2,b,k)
    patches = jnp.transpose(patches, (1, 3, 0, 2, 4, 5))             # (oh2,ow2,n,a,b,k)
    return patches.reshape(64, n, K1Q).astype(jnp.bfloat16)


def cifar_classifier_forward(prep, x_nchw, *, block_batch=256):
    n = x_nchw.shape[0]
    p1 = _conv1_pool_patches(x_nchw)                                 # (64, n, 108)

    # Batch tile: multiple of 16 (tile-aligned bf16 reshapes); keep the grid
    # length >= 2 whenever possible so v7x's two TensorCores both get work.
    n16 = _round_up(n, 16)
    bt = min(_round_up(max(block_batch, 16), 16), n16)
    if n16 >= 32:
        bt = min(bt, _round_up(n16 // 2, 16))
    n_pad = _round_up(n16, bt)
    if n_pad != n:
        p1 = jnp.pad(p1, ((0, 0), (0, n_pad - n), (0, 0)))

    kernel = functools.partial(_fused_cifar_kernel, bt=bt)
    out = pl.pallas_call(
        kernel,
        out_shape=jax.ShapeDtypeStruct((n_pad, 128), jnp.float32),
        grid=(n_pad // bt,),
        in_specs=[
            pl.BlockSpec((64, bt, K1Q), lambda i: (0, i, 0)),        # patches
            pl.BlockSpec((K1Q, 64), lambda i: (0, 0)),               # conv1 w (blk-diag)
            pl.BlockSpec((1, 16), lambda i: (0, 0)),                 # conv1 b
            pl.BlockSpec((K2, 32), lambda i: (0, 0)),                # conv2 w
            pl.BlockSpec((1, 128), lambda i: (0, 0)),                # conv2 b (tiled x4)
            pl.BlockSpec((128, 64), lambda i: (0, 0)),               # fc1 w (permuted)
            pl.BlockSpec((1, 64), lambda i: (0, 0)),                 # fc1 b
            pl.BlockSpec((64, 128), lambda i: (0, 0)),               # fc2 w (padded)
            pl.BlockSpec((1, 128), lambda i: (0, 0)),                # fc2 b (padded)
        ],
        out_specs=pl.BlockSpec((bt, 128), lambda i: (i, 0)),
        compiler_params=pltpu.CompilerParams(
            dimension_semantics=("parallel",),
            vmem_limit_bytes=48 * 1024 * 1024,
        ),
    )(p1, prep["w1bd"], prep["b1"], prep["w2"], prep["b2"],
      prep["wf1"], prep["bf1"], prep["wf2"], prep["bf2"])
    return out[:n, :10]


# ----------------------------------------------------------------------------
# Pure-JAX reference (mirrors the PyTorch module) for validation
# ----------------------------------------------------------------------------
def reference_forward(p, x):
    def conv(x, w, b, stride):
        dn = lax.conv_dimension_numbers(x.shape, w.shape, ("NCHW", "OIHW", "NCHW"))
        y = lax.conv_general_dilated(x, w, (stride, stride), ((1, 1), (1, 1)),
                                     dimension_numbers=dn)
        return y + b[None, :, None, None]

    y = jax.nn.relu(conv(x, p["conv1_w"], p["conv1_b"], 2))
    y = lax.reduce_window(y, -jnp.inf, lax.max, (1, 1, 2, 2), (1, 1, 2, 2), "VALID")
    y = jax.nn.relu(conv(y, p["conv2_w"], p["conv2_b"], 2))
    y = lax.reduce_window(y, -jnp.inf, lax.max, (1, 1, 2, 2), (1, 1, 2, 2), "VALID")
    feat = y.reshape(y.shape[0], -1)
    h = jax.nn.relu(feat @ p["fc1_w"].T + p["fc1_b"])
    return h @ p["fc2_w"].T + p["fc2_b"]


if __name__ == "__main__":
    key = jax.random.PRNGKey(0)
    k_params, k_x = jax.random.split(key)
    params = init_params(k_params)
    prep = prepare_params(params)

    # CIFAR-sized input (fc1 = 32*2*2 -> 64 implies 3x32x32).  Batch 32 with
    # the default block_batch gives bt=16 and a 2-step grid, so the fused
    # kernel exercises multi-step pipelining / both v7x TensorCores.
    x = jax.random.normal(k_x, (32, 3, 32, 32), jnp.float32)

    fwd = jax.jit(functools.partial(cifar_classifier_forward))
    logits = fwd(prep, x)
    jax.block_until_ready(logits)
    assert logits.shape == (32, 10)

    ref = reference_forward(params, x)
    assert bool(jnp.allclose(logits, ref, rtol=1e-1, atol=1e-1)), (
        "Pallas kernel diverged from the XLA reference")
    print("KERNEL_OK")
</pallas_src>

<mosaic_0001>
module attributes {stable_mosaic.version = 11 : i64} {
  func.func @_fused_cifar_kernel(%arg0: i32, %arg1: memref<64x16x108xbf16, #tpu.memory_space<vmem>>, %arg2: memref<108x64xbf16, #tpu.memory_space<vmem>>, %arg3: memref<1x16xf32, #tpu.memory_space<vmem>>, %arg4: memref<144x32xbf16, #tpu.memory_space<vmem>>, %arg5: memref<1x128xf32, #tpu.memory_space<vmem>>, %arg6: memref<128x64xbf16, #tpu.memory_space<vmem>>, %arg7: memref<1x64xf32, #tpu.memory_space<vmem>>, %arg8: memref<64x128xbf16, #tpu.memory_space<vmem>>, %arg9: memref<1x128xf32, #tpu.memory_space<vmem>>, %arg10: memref<16x128xf32, #tpu.memory_space<vmem>>) attributes {dimension_semantics = [#tpu.dimension_semantics<parallel>], iteration_bounds = array<i64: 2>, scalar_prefetch = 0 : i64, scratch_operands = 0 : i64, tpu.core_type = #tpu.core_type<tc>, window_params = [{transform_indices = @transform_0, window_bounds = array<i64: 64, 16, 108>}, {pipeline_mode = #tpu.pipeline_mode<synchronous>, transform_indices = @transform_1, window_bounds = array<i64: 108, 64>}, {pipeline_mode = #tpu.pipeline_mode<synchronous>, transform_indices = @transform_2, window_bounds = array<i64: 1, 16>}, {pipeline_mode = #tpu.pipeline_mode<synchronous>, transform_indices = @transform_3, window_bounds = array<i64: 144, 32>}, {pipeline_mode = #tpu.pipeline_mode<synchronous>, transform_indices = @transform_4, window_bounds = array<i64: 1, 128>}, {pipeline_mode = #tpu.pipeline_mode<synchronous>, transform_indices = @transform_5, window_bounds = array<i64: 128, 64>}, {pipeline_mode = #tpu.pipeline_mode<synchronous>, transform_indices = @transform_6, window_bounds = array<i64: 1, 64>}, {pipeline_mode = #tpu.pipeline_mode<synchronous>, transform_indices = @transform_7, window_bounds = array<i64: 64, 128>}, {pipeline_mode = #tpu.pipeline_mode<synchronous>, transform_indices = @transform_8, window_bounds = array<i64: 1, 128>}, {transform_indices = @transform_9, window_bounds = array<i64: 16, 128>}]} {
    %c0 = arith.constant 0 : index
    %c0_0 = arith.constant 0 : index
    %c0_1 = arith.constant 0 : index
    %0 = vector.load %arg1[%c0, %c0_0, %c0_1] : memref<64x16x108xbf16, #tpu.memory_space<vmem>>, vector<64x16x108xbf16>
    %1 = vector.shape_cast %0 : vector<64x16x108xbf16> to vector<1024x108xbf16>
    %c0_2 = arith.constant 0 : index
    %c0_3 = arith.constant 0 : index
    %2 = vector.load %arg2[%c0_2, %c0_3] : memref<108x64xbf16, #tpu.memory_space<vmem>>, vector<108x64xbf16>
    %cst = arith.constant dense<0.000000e+00> : vector<1024x64xf32>
    %3 = tpu.matmul %1, %2, %cst {dimension_numbers = #tpu.dot_dimension_numbers<[1], [0], [0], [1], [0, 0, 1, 1], [], []>} : vector<1024x108xbf16>, vector<108x64xbf16>, vector<1024x64xf32> -> vector<1024x64xf32>
    %4 = vector.extract_strided_slice %3 {offsets = [0, 0], sizes = [1024, 16], strides = [1, 1]} : vector<1024x64xf32> to vector<1024x16xf32>
    %5 = vector.extract_strided_slice %3 {offsets = [0, 16], sizes = [1024, 16], strides = [1, 1]} : vector<1024x64xf32> to vector<1024x16xf32>
    %6 = arith.maximumf %4, %5 : vector<1024x16xf32>
    %7 = vector.extract_strided_slice %3 {offsets = [0, 32], sizes = [1024, 16], strides = [1, 1]} : vector<1024x64xf32> to vector<1024x16xf32>
    %8 = vector.extract_strided_slice %3 {offsets = [0, 48], sizes = [1024, 16], strides = [1, 1]} : vector<1024x64xf32> to vector<1024x16xf32>
    %9 = arith.maximumf %7, %8 : vector<1024x16xf32>
    %10 = arith.maximumf %6, %9 : vector<1024x16xf32>
    %c0_4 = arith.constant 0 : index
    %c0_5 = arith.constant 0 : index
    %11 = vector.load %arg3[%c0_4, %c0_5] : memref<1x16xf32, #tpu.memory_space<vmem>>, vector<1x16xf32>
    %12 = vector.broadcast %11 : vector<1x16xf32> to vector<1024x16xf32>
    %13 = arith.addf %10, %12 : vector<1024x16xf32>
    %cst_6 = arith.constant 0.000000e+00 : f32
    %14 = vector.broadcast %cst_6 : f32 to vector<1024x16xf32>
    %15 = arith.maximumf %13, %14 : vector<1024x16xf32>
    %16 = arith.truncf %15 : vector<1024x16xf32> to vector<1024x16xbf16>
    %17 = vector.shape_cast %16 : vector<1024x16xbf16> to vector<64x16x16xbf16>
    %cst_7 = arith.constant 0.000000e+00 : bf16
    %18 = vector.broadcast %cst_7 : bf16 to vector<16x16xbf16>
    %19 = vector.extract_strided_slice %17 {offsets = [9, 0, 0], sizes = [1, 16, 16], strides = [1, 1, 1]} : vector<64x16x16xbf16> to vector<1x16x16xbf16>
    %20 = vector.shape_cast %19 : vector<1x16x16xbf16> to vector<16x16xbf16>
    %21 = vector.extract_strided_slice %17 {offsets = [11, 0, 0], sizes = [1, 16, 16], strides = [1, 1, 1]} : vector<64x16x16xbf16> to vector<1x16x16xbf16>
    %22 = vector.shape_cast %21 : vector<1x16x16xbf16> to vector<16x16xbf16>
    %23 = vector.extract_strided_slice %17 {offsets = [13, 0, 0], sizes = [1, 16, 16], strides = [1, 1, 1]} : vector<64x16x16xbf16> to vector<1x16x16xbf16>
    %24 = vector.shape_cast %23 : vector<1x16x16xbf16> to vector<16x16xbf16>
    %25 = vector.extract_strided_slice %17 {offsets = [25, 0, 0], sizes = [1, 16, 16], strides = [1, 1, 1]} : vector<64x16x16xbf16> to vector<1x16x16xbf16>
    %26 = vector.shape_cast %25 : vector<1x16x16xbf16> to vector<16x16xbf16>
    %27 = vector.extract_strided_slice %17 {offsets = [27, 0, 0], sizes = [1, 16, 16], strides = [1, 1, 1]} : vector<64x16x16xbf16> to vector<1x16x16xbf16>
    %28 = vector.shape_cast %27 : vector<1x16x16xbf16> to vector<16x16xbf16>
    %29 = vector.extract_strided_slice %17 {offsets = [29, 0, 0], sizes = [1, 16, 16], strides = [1, 1, 1]} : vector<64x16x16xbf16> to vector<1x16x16xbf16>
    %30 = vector.shape_cast %29 : vector<1x16x16xbf16> to vector<16x16xbf16>
    %31 = vector.extract_strided_slice %17 {offsets = [41, 0, 0], sizes = [1, 16, 16], strides = [1, 1, 1]} : vector<64x16x16xbf16> to vector<1x16x16xbf16>
    %32 = vector.shape_cast %31 : vector<1x16x16xbf16> to vector<16x16xbf16>
    %33 = vector.extract_strided_slice %17 {offsets = [43, 0, 0], sizes = [1, 16, 16], strides = [1, 1, 1]} : vector<64x16x16xbf16> to vector<1x16x16xbf16>
    %34 = vector.shape_cast %33 : vector<1x16x16xbf16> to vector<16x16xbf16>
    %35 = vector.extract_strided_slice %17 {offsets = [45, 0, 0], sizes = [1, 16, 16], strides = [1, 1, 1]} : vector<64x16x16xbf16> to vector<1x16x16xbf16>
    %36 = vector.shape_cast %35 : vector<1x16x16xbf16> to vector<16x16xbf16>
    %37 = tpu.concatenate %18, %18, %18, %18, %18, %20, %22, %24, %18, %26, %28, %30, %18, %32, %34, %36 in 0 : vector<16x16xbf16>, vector<16x16xbf16>, vector<16x16xbf16>, vector<16x16xbf16>, vector<16x16xbf16>, vector<16x16xbf16>, vector<16x16xbf16>, vector<16x16xbf16>, vector<16x16xbf16>, vector<16x16xbf16>, vector<16x16xbf16>, vector<16x16xbf16>, vector<16x16xbf16>, vector<16x16xbf16>, vector<16x16xbf16>, vector<16x16xbf16> -> vector<256x16xbf16>
    %38 = vector.extract_strided_slice %17 {offsets = [8, 0, 0], sizes = [1, 16, 16], strides = [1, 1, 1]} : vector<64x16x16xbf16> to vector<1x16x16xbf16>
    %39 = vector.shape_cast %38 : vector<1x16x16xbf16> to vector<16x16xbf16>
    %40 = vector.extract_strided_slice %17 {offsets = [10, 0, 0], sizes = [1, 16, 16], strides = [1, 1, 1]} : vector<64x16x16xbf16> to vector<1x16x16xbf16>
    %41 = vector.shape_cast %40 : vector<1x16x16xbf16> to vector<16x16xbf16>
    %42 = vector.extract_strided_slice %17 {offsets = [12, 0, 0], sizes = [1, 16, 16], strides = [1, 1, 1]} : vector<64x16x16xbf16> to vector<1x16x16xbf16>
    %43 = vector.shape_cast %42 : vector<1x16x16xbf16> to vector<16x16xbf16>
    %44 = vector.extract_strided_slice %17 {offsets = [14, 0, 0], sizes = [1, 16, 16], strides = [1, 1, 1]} : vector<64x16x16xbf16> to vector<1x16x16xbf16>
    %45 = vector.shape_cast %44 : vector<1x16x16xbf16> to vector<16x16xbf16>
    %46 = vector.extract_strided_slice %17 {offsets = [24, 0, 0], sizes = [1, 16, 16], strides = [1, 1, 1]} : vector<64x16x16xbf16> to vector<1x16x16xbf16>
    %47 = vector.shape_cast %46 : vector<1x16x16xbf16> to vector<16x16xbf16>
    %48 = vector.extract_strided_slice %17 {offsets = [26, 0, 0], sizes = [1, 16, 16], strides = [1, 1, 1]} : vector<64x16x16xbf16> to vector<1x16x16xbf16>
    %49 = vector.shape_cast %48 : vector<1x16x16xbf16> to vector<16x16xbf16>
    %50 = vector.extract_strided_slice %17 {offsets = [28, 0, 0], sizes = [1, 16, 16], strides = [1, 1, 1]} : vector<64x16x16xbf16> to vector<1x16x16xbf16>
    %51 = vector.shape_cast %50 : vector<1x16x16xbf16> to vector<16x16xbf16>
    %52 = vector.extract_strided_slice %17 {offsets = [30, 0, 0], sizes = [1, 16, 16], strides = [1, 1, 1]} : vector<64x16x16xbf16> to vector<1x16x16xbf16>
    %53 = vector.shape_cast %52 : vector<1x16x16xbf16> to vector<16x16xbf16>
    %54 = vector.extract_strided_slice %17 {offsets = [40, 0, 0], sizes = [1, 16, 16], strides = [1, 1, 1]} : vector<64x16x16xbf16> to vector<1x16x16xbf16>
    %55 = vector.shape_cast %54 : vector<1x16x16xbf16> to vector<16x16xbf16>
    %56 = vector.extract_strided_slice %17 {offsets = [42, 0, 0], sizes = [1, 16, 16], strides = [1, 1, 1]} : vector<64x16x16xbf16> to vector<1x16x16xbf16>
    %57 = vector.shape_cast %56 : vector<1x16x16xbf16> to vector<16x16xbf16>
    %58 = vector.extract_strided_slice %17 {offsets = [44, 0, 0], sizes = [1, 16, 16], strides = [1, 1, 1]} : vector<64x16x16xbf16> to vector<1x16x16xbf16>
    %59 = vector.shape_cast %58 : vector<1x16x16xbf16> to vector<16x16xbf16>
    %60 = vector.extract_strided_slice %17 {offsets = [46, 0, 0], sizes = [1, 16, 16], strides = [1, 1, 1]} : vector<64x16x16xbf16> to vector<1x16x16xbf16>
    %61 = vector.shape_cast %60 : vector<1x16x16xbf16> to vector<16x16xbf16>
    %62 = tpu.concatenate %18, %18, %18, %18, %39, %41, %43, %45, %47, %49, %51, %53, %55, %57, %59, %61 in 0 : vector<16x16xbf16>, vector<16x16xbf16>, vector<16x16xbf16>, vector<16x16xbf16>, vector<16x16xbf16>, vector<16x16xbf16>, vector<16x16xbf16>, vector<16x16xbf16>, vector<16x16xbf16>, vector<16x16xbf16>, vector<16x16xbf16>, vector<16x16xbf16>, vector<16x16xbf16>, vector<16x16xbf16>, vector<16x16xbf16>, vector<16x16xbf16> -> vector<256x16xbf16>
    %63 = vector.extract_strided_slice %17 {offsets = [9, 0, 0], sizes = [1, 16, 16], strides = [1, 1, 1]} : vector<64x16x16xbf16> to vector<1x16x16xbf16>
    %64 = vector.shape_cast %63 : vector<1x16x16xbf16> to vector<16x16xbf16>
    %65 = vector.extract_strided_slice %17 {offsets = [11, 0, 0], sizes = [1, 16, 16], strides = [1, 1, 1]} : vector<64x16x16xbf16> to vector<1x16x16xbf16>
    %66 = vector.shape_cast %65 : vector<1x16x16xbf16> to vector<16x16xbf16>
    %67 = vector.extract_strided_slice %17 {offsets = [13, 0, 0], sizes = [1, 16, 16], strides = [1, 1, 1]} : vector<64x16x16xbf16> to vector<1x16x16xbf16>
    %68 = vector.shape_cast %67 : vector<1x16x16xbf16> to vector<16x16xbf16>
    %69 = vector.extract_strided_slice %17 {offsets = [15, 0, 0], sizes = [1, 16, 16], strides = [1, 1, 1]} : vector<64x16x16xbf16> to vector<1x16x16xbf16>
    %70 = vector.shape_cast %69 : vector<1x16x16xbf16> to vector<16x16xbf16>
    %71 = vector.extract_strided_slice %17 {offsets = [25, 0, 0], sizes = [1, 16, 16], strides = [1, 1, 1]} : vector<64x16x16xbf16> to vector<1x16x16xbf16>
    %72 = vector.shape_cast %71 : vector<1x16x16xbf16> to vector<16x16xbf16>
    %73 = vector.extract_strided_slice %17 {offsets = [27, 0, 0], sizes = [1, 16, 16], strides = [1, 1, 1]} : vector<64x16x16xbf16> to vector<1x16x16xbf16>
    %74 = vector.shape_cast %73 : vector<1x16x16xbf16> to vector<16x16xbf16>
    %75 = vector.extract_strided_slice %17 {offsets = [29, 0, 0], sizes = [1, 16, 16], strides = [1, 1, 1]} : vector<64x16x16xbf16> to vector<1x16x16xbf16>
    %76 = vector.shape_cast %75 : vector<1x16x16xbf16> to vector<16x16xbf16>
    %77 = vector.extract_strided_slice %17 {offsets = [31, 0, 0], sizes = [1, 16, 16], strides = [1, 1, 1]} : vector<64x16x16xbf16> to vector<1x16x16xbf16>
    %78 = vector.shape_cast %77 : vector<1x16x16xbf16> to vector<16x16xbf16>
    %79 = vector.extract_strided_slice %17 {offsets = [41, 0, 0], sizes = [1, 16, 16], strides = [1, 1, 1]} : vector<64x16x16xbf16> to vector<1x16x16xbf16>
    %80 = vector.shape_cast %79 : vector<1x16x16xbf16> to vector<16x16xbf16>
    %81 = vector.extract_strided_slice %17 {offsets = [43, 0, 0], sizes = [1, 16, 16], strides = [1, 1, 1]} : vector<64x16x16xbf16> to vector<1x16x16xbf16>
    %82 = vector.shape_cast %81 : vector<1x16x16xbf16> to vector<16x16xbf16>
    %83 = vector.extract_strided_slice %17 {offsets = [45, 0, 0], sizes = [1, 16, 16], strides = [1, 1, 1]} : vector<64x16x16xbf16> to vector<1x16x16xbf16>
    %84 = vector.shape_cast %83 : vector<1x16x16xbf16> to vector<16x16xbf16>
    %85 = vector.extract_strided_slice %17 {offsets = [47, 0, 0], sizes = [1, 16, 16], strides = [1, 1, 1]} : vector<64x16x16xbf16> to vector<1x16x16xbf16>
    %86 = vector.shape_cast %85 : vector<1x16x16xbf16> to vector<16x16xbf16>
    %87 = tpu.concatenate %18, %18, %18, %18, %64, %66, %68, %70, %72, %74, %76, %78, %80, %82, %84, %86 in 0 : vector<16x16xbf16>, vector<16x16xbf16>, vector<16x16xbf16>, vector<16x16xbf16>, vector<16x16xbf16>, vector<16x16xbf16>, vector<16x16xbf16>, vector<16x16xbf16>, vector<16x16xbf16>, vector<16x16xbf16>, vector<16x16xbf16>, vector<16x16xbf16>, vector<16x16xbf16>, vector<16x16xbf16>, vector<16x16xbf16>, vector<16x16xbf16> -> vector<256x16xbf16>
    %88 = vector.extract_strided_slice %17 {offsets = [1, 0, 0], sizes = [1, 16, 16], strides = [1, 1, 1]} : vector<64x16x16xbf16> to vector<1x16x16xbf16>
    %89 = vector.shape_cast %88 : vector<1x16x16xbf16> to vector<16x16xbf16>
    %90 = vector.extract_strided_slice %17 {offsets = [3, 0, 0], sizes = [1, 16, 16], strides = [1, 1, 1]} : vector<64x16x16xbf16> to vector<1x16x16xbf16>
    %91 = vector.shape_cast %90 : vector<1x16x16xbf16> to vector<16x16xbf16>
    %92 = vector.extract_strided_slice %17 {offsets = [5, 0, 0], sizes = [1, 16, 16], strides = [1, 1, 1]} : vector<64x16x16xbf16> to vector<1x16x16xbf16>
    %93 = vector.shape_cast %92 : vector<1x16x16xbf16> to vector<16x16xbf16>
    %94 = vector.extract_strided_slice %17 {offsets = [17, 0, 0], sizes = [1, 16, 16], strides = [1, 1, 1]} : vector<64x16x16xbf16> to vector<1x16x16xbf16>
    %95 = vector.shape_cast %94 : vector<1x16x16xbf16> to vector<16x16xbf16>
    %96 = vector.extract_strided_slice %17 {offsets = [19, 0, 0], sizes = [1, 16, 16], strides = [1, 1, 1]} : vector<64x16x16xbf16> to vector<1x16x16xbf16>
    %97 = vector.shape_cast %96 : vector<1x16x16xbf16> to vector<16x16xbf16>
    %98 = vector.extract_strided_slice %17 {offsets = [21, 0, 0], sizes = [1, 16, 16], strides = [1, 1, 1]} : vector<64x16x16xbf16> to vector<1x16x16xbf16>
    %99 = vector.shape_cast %98 : vector<1x16x16xbf16> to vector<16x16xbf16>
    %100 = vector.extract_strided_slice %17 {offsets = [33, 0, 0], sizes = [1, 16, 16], strides = [1, 1, 1]} : vector<64x16x16xbf16> to vector<1x16x16xbf16>
    %101 = vector.shape_cast %100 : vector<1x16x16xbf16> to vector<16x16xbf16>
    %102 = vector.extract_strided_slice %17 {offsets = [35, 0, 0], sizes = [1, 16, 16], strides = [1, 1, 1]} : vector<64x16x16xbf16> to vector<1x16x16xbf16>
    %103 = vector.shape_cast %102 : vector<1x16x16xbf16> to vector<16x16xbf16>
    %104 = vector.extract_strided_slice %17 {offsets = [37, 0, 0], sizes = [1, 16, 16], strides = [1, 1, 1]} : vector<64x16x16xbf16> to vector<1x16x16xbf16>
    %105 = vector.shape_cast %104 : vector<1x16x16xbf16> to vector<16x16xbf16>
    %106 = vector.extract_strided_slice %17 {offsets = [49, 0, 0], sizes = [1, 16, 16], strides = [1, 1, 1]} : vector<64x16x16xbf16> to vector<1x16x16xbf16>
    %107 = vector.shape_cast %106 : vector<1x16x16xbf16> to vector<16x16xbf16>
    %108 = vector.extract_strided_slice %17 {offsets = [51, 0, 0], sizes = [1, 16, 16], strides = [1, 1, 1]} : vector<64x16x16xbf16> to vector<1x16x16xbf16>
    %109 = vector.shape_cast %108 : vector<1x16x16xbf16> to vector<16x16xbf16>
    %110 = vector.extract_strided_slice %17 {offsets = [53, 0, 0], sizes = [1, 16, 16], strides = [1, 1, 1]} : vector<64x16x16xbf16> to vector<1x16x16xbf16>
    %111 = vector.shape_cast %110 : vector<1x16x16xbf16> to vector<16x16xbf16>
    %112 = tpu.concatenate %18, %89, %91, %93, %18, %95, %97, %99, %18, %101, %103, %105, %18, %107, %109, %111 in 0 : vector<16x16xbf16>, vector<16x16xbf16>, vector<16x16xbf16>, vector<16x16xbf16>, vector<16x16xbf16>, vector<16x16xbf16>, vector<16x16xbf16>, vector<16x16xbf16>, vector<16x16xbf16>, vector<16x16xbf16>, vector<16x16xbf16>, vector<16x16xbf16>, vector<16x16xbf16>, vector<16x16xbf16>, vector<16x16xbf16>, vector<16x16xbf16> -> vector<256x16xbf16>
    %113 = vector.extract_strided_slice %17 {offsets = [0, 0, 0], sizes = [1, 16, 16], strides = [1, 1, 1]} : vector<64x16x16xbf16> to vector<1x16x16xbf16>
    %114 = vector.shape_cast %113 : vector<1x16x16xbf16> to vector<16x16xbf16>
    %115 = vector.extract_strided_slice %17 {offsets = [2, 0, 0], sizes = [1, 16, 16], strides = [1, 1, 1]} : vector<64x16x16xbf16> to vector<1x16x16xbf16>
    %116 = vector.shape_cast %115 : vector<1x16x16xbf16> to vector<16x16xbf16>
    %117 = vector.extract_strided_slice %17 {offsets = [4, 0, 0], sizes = [1, 16, 16], strides = [1, 1, 1]} : vector<64x16x16xbf16> to vector<1x16x16xbf16>
    %118 = vector.shape_cast %117 : vector<1x16x16xbf16> to vector<16x16xbf16>
    %119 = vector.extract_strided_slice %17 {offsets = [6, 0, 0], sizes = [1, 16, 16], strides = [1, 1, 1]} : vector<64x16x16xbf16> to vector<1x16x16xbf16>
    %120 = vector.shape_cast %119 : vector<1x16x16xbf16> to vector<16x16xbf16>
    %121 = vector.extract_strided_slice %17 {offsets = [16, 0, 0], sizes = [1, 16, 16], strides = [1, 1, 1]} : vector<64x16x16xbf16> to vector<1x16x16xbf16>
    %122 = vector.shape_cast %121 : vector<1x16x16xbf16> to vector<16x16xbf16>
    %123 = vector.extract_strided_slice %17 {offsets = [18, 0, 0], sizes = [1, 16, 16], strides = [1, 1, 1]} : vector<64x16x16xbf16> to vector<1x16x16xbf16>
    %124 = vector.shape_cast %123 : vector<1x16x16xbf16> to vector<16x16xbf16>
    %125 = vector.extract_strided_slice %17 {offsets = [20, 0, 0], sizes = [1, 16, 16], strides = [1, 1, 1]} : vector<64x16x16xbf16> to vector<1x16x16xbf16>
    %126 = vector.shape_cast %125 : vector<1x16x16xbf16> to vector<16x16xbf16>
    %127 = vector.extract_strided_slice %17 {offsets = [22, 0, 0], sizes = [1, 16, 16], strides = [1, 1, 1]} : vector<64x16x16xbf16> to vector<1x16x16xbf16>
    %128 = vector.shape_cast %127 : vector<1x16x16xbf16> to vector<16x16xbf16>
    %129 = vector.extract_strided_slice %17 {offsets = [32, 0, 0], sizes = [1, 16, 16], strides = [1, 1, 1]} : vector<64x16x16xbf16> to vector<1x16x16xbf16>
    %130 = vector.shape_cast %129 : vector<1x16x16xbf16> to vector<16x16xbf16>
    %131 = vector.extract_strided_slice %17 {offsets = [34, 0, 0], sizes = [1, 16, 16], strides = [1, 1, 1]} : vector<64x16x16xbf16> to vector<1x16x16xbf16>
    %132 = vector.shape_cast %131 : vector<1x16x16xbf16> to vector<16x16xbf16>
    %133 = vector.extract_strided_slice %17 {offsets = [36, 0, 0], sizes = [1, 16, 16], strides = [1, 1, 1]} : vector<64x16x16xbf16> to vector<1x16x16xbf16>
    %134 = vector.shape_cast %133 : vector<1x16x16xbf16> to vector<16x16xbf16>
    %135 = vector.extract_strided_slice %17 {offsets = [38, 0, 0], sizes = [1, 16, 16], strides = [1, 1, 1]} : vector<64x16x16xbf16> to vector<1x16x16xbf16>
    %136 = vector.shape_cast %135 : vector<1x16x16xbf16> to vector<16x16xbf16>
    %137 = vector.extract_strided_slice %17 {offsets = [48, 0, 0], sizes = [1, 16, 16], strides = [1, 1, 1]} : vector<64x16x16xbf16> to vector<1x16x16xbf16>
    %138 = vector.shape_cast %137 : vector<1x16x16xbf16> to vector<16x16xbf16>
    %139 = vector.extract_strided_slice %17 {offsets = [50, 0, 0], sizes = [1, 16, 16], strides = [1, 1, 1]} : vector<64x16x16xbf16> to vector<1x16x16xbf16>
    %140 = vector.shape_cast %139 : vector<1x16x16xbf16> to vector<16x16xbf16>
    %141 = vector.extract_strided_slice %17 {offsets = [52, 0, 0], sizes = [1, 16, 16], strides = [1, 1, 1]} : vector<64x16x16xbf16> to vector<1x16x16xbf16>
    %142 = vector.shape_cast %141 : vector<1x16x16xbf16> to vector<16x16xbf16>
    %143 = vector.extract_strided_slice %17 {offsets = [54, 0, 0], sizes = [1, 16, 16], strides = [1, 1, 1]} : vector<64x16x16xbf16> to vector<1x16x16xbf16>
    %144 = vector.shape_cast %143 : vector<1x16x16xbf16> to vector<16x16xbf16>
    %145 = tpu.concatenate %114, %116, %118, %120, %122, %124, %126, %128, %130, %132, %134, %136, %138, %140, %142, %144 in 0 : vector<16x16xbf16>, vector<16x16xbf16>, vector<16x16xbf16>, vector<16x16xbf16>, vector<16x16xbf16>, vector<16x16xbf16>, vector<16x16xbf16>, vector<16x16xbf16>, vector<16x16xbf16>, vector<16x16xbf16>, vector<16x16xbf16>, vector<16x16xbf16>, vector<16x16xbf16>, vector<16x16xbf16>, vector<16x16xbf16>, vector<16x16xbf16> -> vector<256x16xbf16>
    %146 = vector.extract_strided_slice %17 {offsets = [1, 0, 0], sizes = [1, 16, 16], strides = [1, 1, 1]} : vector<64x16x16xbf16> to vector<1x16x16xbf16>
    %147 = vector.shape_cast %146 : vector<1x16x16xbf16> to vector<16x16xbf16>
    %148 = vector.extract_strided_slice %17 {offsets = [3, 0, 0], sizes = [1, 16, 16], strides = [1, 1, 1]} : vector<64x16x16xbf16> to vector<1x16x16xbf16>
    %149 = vector.shape_cast %148 : vector<1x16x16xbf16> to vector<16x16xbf16>
    %150 = vector.extract_strided_slice %17 {offsets = [5, 0, 0], sizes = [1, 16, 16], strides = [1, 1, 1]} : vector<64x16x16xbf16> to vector<1x16x16xbf16>
    %151 = vector.shape_cast %150 : vector<1x16x16xbf16> to vector<16x16xbf16>
    %152 = vector.extract_strided_slice %17 {offsets = [7, 0, 0], sizes = [1, 16, 16], strides = [1, 1, 1]} : vector<64x16x16xbf16> to vector<1x16x16xbf16>
    %153 = vector.shape_cast %152 : vector<1x16x16xbf16> to vector<16x16xbf16>
    %154 = vector.extract_strided_slice %17 {offsets = [17, 0, 0], sizes = [1, 16, 16], strides = [1, 1, 1]} : vector<64x16x16xbf16> to vector<1x16x16xbf16>
    %155 = vector.shape_cast %154 : vector<1x16x16xbf16> to vector<16x16xbf16>
    %156 = vector.extract_strided_slice %17 {offsets = [19, 0, 0], sizes = [1, 16, 16], strides = [1, 1, 1]} : vector<64x16x16xbf16> to vector<1x16x16xbf16>
    %157 = vector.shape_cast %156 : vector<1x16x16xbf16> to vector<16x16xbf16>
    %158 = vector.extract_strided_slice %17 {offsets = [21, 0, 0], sizes = [1, 16, 16], strides = [1, 1, 1]} : vector<64x16x16xbf16> to vector<1x16x16xbf16>
    %159 = vector.shape_cast %158 : vector<1x16x16xbf16> to vector<16x16xbf16>
    %160 = vector.extract_strided_slice %17 {offsets = [23, 0, 0], sizes = [1, 16, 16], strides = [1, 1, 1]} : vector<64x16x16xbf16> to vector<1x16x16xbf16>
    %161 = vector.shape_cast %160 : vector<1x16x16xbf16> to vector<16x16xbf16>
    %162 = vector.extract_strided_slice %17 {offsets = [33, 0, 0], sizes = [1, 16, 16], strides = [1, 1, 1]} : vector<64x16x16xbf16> to vector<1x16x16xbf16>
    %163 = vector.shape_cast %162 : vector<1x16x16xbf16> to vector<16x16xbf16>
    %164 = vector.extract_strided_slice %17 {offsets = [35, 0, 0], sizes = [1, 16, 16], strides = [1, 1, 1]} : vector<64x16x16xbf16> to vector<1x16x16xbf16>
    %165 = vector.shape_cast %164 : vector<1x16x16xbf16> to vector<16x16xbf16>
    %166 = vector.extract_strided_slice %17 {offsets = [37, 0, 0], sizes = [1, 16, 16], strides = [1, 1, 1]} : vector<64x16x16xbf16> to vector<1x16x16xbf16>
    %167 = vector.shape_cast %166 : vector<1x16x16xbf16> to vector<16x16xbf16>
    %168 = vector.extract_strided_slice %17 {offsets = [39, 0, 0], sizes = [1, 16, 16], strides = [1, 1, 1]} : vector<64x16x16xbf16> to vector<1x16x16xbf16>
    %169 = vector.shape_cast %168 : vector<1x16x16xbf16> to vector<16x16xbf16>
    %170 = vector.extract_strided_slice %17 {offsets = [49, 0, 0], sizes = [1, 16, 16], strides = [1, 1, 1]} : vector<64x16x16xbf16> to vector<1x16x16xbf16>
    %171 = vector.shape_cast %170 : vector<1x16x16xbf16> to vector<16x16xbf16>
    %172 = vector.extract_strided_slice %17 {offsets = [51, 0, 0], sizes = [1, 16, 16], strides = [1, 1, 1]} : vector<64x16x16xbf16> to vector<1x16x16xbf16>
    %173 = vector.shape_cast %172 : vector<1x16x16xbf16> to vector<16x16xbf16>
    %174 = vector.extract_strided_slice %17 {offsets = [53, 0, 0], sizes = [1, 16, 16], strides = [1, 1, 1]} : vector<64x16x16xbf16> to vector<1x16x16xbf16>
    %175 = vector.shape_cast %174 : vector<1x16x16xbf16> to vector<16x16xbf16>
    %176 = vector.extract_strided_slice %17 {offsets = [55, 0, 0], sizes = [1, 16, 16], strides = [1, 1, 1]} : vector<64x16x16xbf16> to vector<1x16x16xbf16>
    %177 = vector.shape_cast %176 : vector<1x16x16xbf16> to vector<16x16xbf16>
    %178 = tpu.concatenate %147, %149, %151, %153, %155, %157, %159, %161, %163, %165, %167, %169, %171, %173, %175, %177 in 0 : vector<16x16xbf16>, vector<16x16xbf16>, vector<16x16xbf16>, vector<16x16xbf16>, vector<16x16xbf16>, vector<16x16xbf16>, vector<16x16xbf16>, vector<16x16xbf16>, vector<16x16xbf16>, vector<16x16xbf16>, vector<16x16xbf16>, vector<16x16xbf16>, vector<16x16xbf16>, vector<16x16xbf16>, vector<16x16xbf16>, vector<16x16xbf16> -> vector<256x16xbf16>
    %179 = vector.extract_strided_slice %17 {offsets = [9, 0, 0], sizes = [1, 16, 16], strides = [1, 1, 1]} : vector<64x16x16xbf16> to vector<1x16x16xbf16>
    %180 = vector.shape_cast %179 : vector<1x16x16xbf16> to vector<16x16xbf16>
    %181 = vector.extract_strided_slice %17 {offsets = [11, 0, 0], sizes = [1, 16, 16], strides = [1, 1, 1]} : vector<64x16x16xbf16> to vector<1x16x16xbf16>
    %182 = vector.shape_cast %181 : vector<1x16x16xbf16> to vector<16x16xbf16>
    %183 = vector.extract_strided_slice %17 {offsets = [13, 0, 0], sizes = [1, 16, 16], strides = [1, 1, 1]} : vector<64x16x16xbf16> to vector<1x16x16xbf16>
    %184 = vector.shape_cast %183 : vector<1x16x16xbf16> to vector<16x16xbf16>
    %185 = vector.extract_strided_slice %17 {offsets = [25, 0, 0], sizes = [1, 16, 16], strides = [1, 1, 1]} : vector<64x16x16xbf16> to vector<1x16x16xbf16>
    %186 = vector.shape_cast %185 : vector<1x16x16xbf16> to vector<16x16xbf16>
    %187 = vector.extract_strided_slice %17 {offsets = [27, 0, 0], sizes = [1, 16, 16], strides = [1, 1, 1]} : vector<64x16x16xbf16> to vector<1x16x16xbf16>
    %188 = vector.shape_cast %187 : vector<1x16x16xbf16> to vector<16x16xbf16>
    %189 = vector.extract_strided_slice %17 {offsets = [29, 0, 0], sizes = [1, 16, 16], strides = [1, 1, 1]} : vector<64x16x16xbf16> to vector<1x16x16xbf16>
    %190 = vector.shape_cast %189 : vector<1x16x16xbf16> to vector<16x16xbf16>
    %191 = vector.extract_strided_slice %17 {offsets = [41, 0, 0], sizes = [1, 16, 16], strides = [1, 1, 1]} : vector<64x16x16xbf16> to vector<1x16x16xbf16>
    %192 = vector.shape_cast %191 : vector<1x16x16xbf16> to vector<16x16xbf16>
    %193 = vector.extract_strided_slice %17 {offsets = [43, 0, 0], sizes = [1, 16, 16], strides = [1, 1, 1]} : vector<64x16x16xbf16> to vector<1x16x16xbf16>
    %194 = vector.shape_cast %193 : vector<1x16x16xbf16> to vector<16x16xbf16>
    %195 = vector.extract_strided_slice %17 {offsets = [45, 0, 0], sizes = [1, 16, 16], strides = [1, 1, 1]} : vector<64x16x16xbf16> to vector<1x16x16xbf16>
    %196 = vector.shape_cast %195 : vector<1x16x16xbf16> to vector<16x16xbf16>
    %197 = vector.extract_strided_slice %17 {offsets = [57, 0, 0], sizes = [1, 16, 16], strides = [1, 1, 1]} : vector<64x16x16xbf16> to vector<1x16x16xbf16>
    %198 = vector.shape_cast %197 : vector<1x16x16xbf16> to vector<16x16xbf16>
    %199 = vector.extract_strided_slice %17 {offsets = [59, 0, 0], sizes = [1, 16, 16], strides = [1, 1, 1]} : vector<64x16x16xbf16> to vector<1x16x16xbf16>
    %200 = vector.shape_cast %199 : vector<1x16x16xbf16> to vector<16x16xbf16>
    %201 = vector.extract_strided_slice %17 {offsets = [61, 0, 0], sizes = [1, 16, 16], strides = [1, 1, 1]} : vector<64x16x16xbf16> to vector<1x16x16xbf16>
    %202 = vector.shape_cast %201 : vector<1x16x16xbf16> to vector<16x16xbf16>
    %203 = tpu.concatenate %18, %180, %182, %184, %18, %186, %188, %190, %18, %192, %194, %196, %18, %198, %200, %202 in 0 : vector<16x16xbf16>, vector<16x16xbf16>, vector<16x16xbf16>, vector<16x16xbf16>, vector<16x16xbf16>, vector<16x16xbf16>, vector<16x16xbf16>, vector<16x16xbf16>, vector<16x16xbf16>, vector<16x16xbf16>, vector<16x16xbf16>, vector<16x16xbf16>, vector<16x16xbf16>, vector<16x16xbf16>, vector<16x16xbf16>, vector<16x16xbf16> -> vector<256x16xbf16>
    %204 = vector.extract_strided_slice %17 {offsets = [8, 0, 0], sizes = [1, 16, 16], strides = [1, 1, 1]} : vector<64x16x16xbf16> to vector<1x16x16xbf16>
    %205 = vector.shape_cast %204 : vector<1x16x16xbf16> to vector<16x16xbf16>
    %206 = vector.extract_strided_slice %17 {offsets = [10, 0, 0], sizes = [1, 16, 16], strides = [1, 1, 1]} : vector<64x16x16xbf16> to vector<1x16x16xbf16>
    %207 = vector.shape_cast %206 : vector<1x16x16xbf16> to vector<16x16xbf16>
    %208 = vector.extract_strided_slice %17 {offsets = [12, 0, 0], sizes = [1, 16, 16], strides = [1, 1, 1]} : vector<64x16x16xbf16> to vector<1x16x16xbf16>
    %209 = vector.shape_cast %208 : vector<1x16x16xbf16> to vector<16x16xbf16>
    %210 = vector.extract_strided_slice %17 {offsets = [14, 0, 0], sizes = [1, 16, 16], strides = [1, 1, 1]} : vector<64x16x16xbf16> to vector<1x16x16xbf16>
    %211 = vector.shape_cast %210 : vector<1x16x16xbf16> to vector<16x16xbf16>
    %212 = vector.extract_strided_slice %17 {offsets = [24, 0, 0], sizes = [1, 16, 16], strides = [1, 1, 1]} : vector<64x16x16xbf16> to vector<1x16x16xbf16>
    %213 = vector.shape_cast %212 : vector<1x16x16xbf16> to vector<16x16xbf16>
    %214 = vector.extract_strided_slice %17 {offsets = [26, 0, 0], sizes = [1, 16, 16], strides = [1, 1, 1]} : vector<64x16x16xbf16> to vector<1x16x16xbf16>
    %215 = vector.shape_cast %214 : vector<1x16x16xbf16> to vector<16x16xbf16>
    %216 = vector.extract_strided_slice %17 {offsets = [28, 0, 0], sizes = [1, 16, 16], strides = [1, 1, 1]} : vector<64x16x16xbf16> to vector<1x16x16xbf16>
    %217 = vector.shape_cast %216 : vector<1x16x16xbf16> to vector<16x16xbf16>
    %218 = vector.extract_strided_slice %17 {offsets = [30, 0, 0], sizes = [1, 16, 16], strides = [1, 1, 1]} : vector<64x16x16xbf16> to vector<1x16x16xbf16>
    %219 = vector.shape_cast %218 : vector<1x16x16xbf16> to vector<16x16xbf16>
    %220 = vector.extract_strided_slice %17 {offsets = [40, 0, 0], sizes = [1, 16, 16], strides = [1, 1, 1]} : vector<64x16x16xbf16> to vector<1x16x16xbf16>
    %221 = vector.shape_cast %220 : vector<1x16x16xbf16> to vector<16x16xbf16>
    %222 = vector.extract_strided_slice %17 {offsets = [42, 0, 0], sizes = [1, 16, 16], strides = [1, 1, 1]} : vector<64x16x16xbf16> to vector<1x16x16xbf16>
    %223 = vector.shape_cast %222 : vector<1x16x16xbf16> to vector<16x16xbf16>
    %224 = vector.extract_strided_slice %17 {offsets = [44, 0, 0], sizes = [1, 16, 16], strides = [1, 1, 1]} : vector<64x16x16xbf16> to vector<1x16x16xbf16>
    %225 = vector.shape_cast %224 : vector<1x16x16xbf16> to vector<16x16xbf16>
    %226 = vector.extract_strided_slice %17 {offsets = [46, 0, 0], sizes = [1, 16, 16], strides = [1, 1, 1]} : vector<64x16x16xbf16> to vector<1x16x16xbf16>
    %227 = vector.shape_cast %226 : vector<1x16x16xbf16> to vector<16x16xbf16>
    %228 = vector.extract_strided_slice %17 {offsets = [56, 0, 0], sizes = [1, 16, 16], strides = [1, 1, 1]} : vector<64x16x16xbf16> to vector<1x16x16xbf16>
    %229 = vector.shape_cast %228 : vector<1x16x16xbf16> to vector<16x16xbf16>
    %230 = vector.extract_strided_slice %17 {offsets = [58, 0, 0], sizes = [1, 16, 16], strides = [1, 1, 1]} : vector<64x16x16xbf16> to vector<1x16x16xbf16>
    %231 = vector.shape_cast %230 : vector<1x16x16xbf16> to vector<16x16xbf16>
    %232 = vector.extract_strided_slice %17 {offsets = [60, 0, 0], sizes = [1, 16, 16], strides = [1, 1, 1]} : vector<64x16x16xbf16> to vector<1x16x16xbf16>
    %233 = vector.shape_cast %232 : vector<1x16x16xbf16> to vector<16x16xbf16>
    %234 = vector.extract_strided_slice %17 {offsets = [62, 0, 0], sizes = [1, 16, 16], strides = [1, 1, 1]} : vector<64x16x16xbf16> to vector<1x16x16xbf16>
    %235 = vector.shape_cast %234 : vector<1x16x16xbf16> to vector<16x16xbf16>
    %236 = tpu.concatenate %205, %207, %209, %211, %213, %215, %217, %219, %221, %223, %225, %227, %229, %231, %233, %235 in 0 : vector<16x16xbf16>, vector<16x16xbf16>, vector<16x16xbf16>, vector<16x16xbf16>, vector<16x16xbf16>, vector<16x16xbf16>, vector<16x16xbf16>, vector<16x16xbf16>, vector<16x16xbf16>, vector<16x16xbf16>, vector<16x16xbf16>, vector<16x16xbf16>, vector<16x16xbf16>, vector<16x16xbf16>, vector<16x16xbf16>, vector<16x16xbf16> -> vector<256x16xbf16>
    %237 = vector.extract_strided_slice %17 {offsets = [9, 0, 0], sizes = [1, 16, 16], strides = [1, 1, 1]} : vector<64x16x16xbf16> to vector<1x16x16xbf16>
    %238 = vector.shape_cast %237 : vector<1x16x16xbf16> to vector<16x16xbf16>
    %239 = vector.extract_strided_slice %17 {offsets = [11, 0, 0], sizes = [1, 16, 16], strides = [1, 1, 1]} : vector<64x16x16xbf16> to vector<1x16x16xbf16>
    %240 = vector.shape_cast %239 : vector<1x16x16xbf16> to vector<16x16xbf16>
    %241 = vector.extract_strided_slice %17 {offsets = [13, 0, 0], sizes = [1, 16, 16], strides = [1, 1, 1]} : vector<64x16x16xbf16> to vector<1x16x16xbf16>
    %242 = vector.shape_cast %241 : vector<1x16x16xbf16> to vector<16x16xbf16>
    %243 = vector.extract_strided_slice %17 {offsets = [15, 0, 0], sizes = [1, 16, 16], strides = [1, 1, 1]} : vector<64x16x16xbf16> to vector<1x16x16xbf16>
    %244 = vector.shape_cast %243 : vector<1x16x16xbf16> to vector<16x16xbf16>
    %245 = vector.extract_strided_slice %17 {offsets = [25, 0, 0], sizes = [1, 16, 16], strides = [1, 1, 1]} : vector<64x16x16xbf16> to vector<1x16x16xbf16>
    %246 = vector.shape_cast %245 : vector<1x16x16xbf16> to vector<16x16xbf16>
    %247 = vector.extract_strided_slice %17 {offsets = [27, 0, 0], sizes = [1, 16, 16], strides = [1, 1, 1]} : vector<64x16x16xbf16> to vector<1x16x16xbf16>
    %248 = vector.shape_cast %247 : vector<1x16x16xbf16> to vector<16x16xbf16>
    %249 = vector.extract_strided_slice %17 {offsets = [29, 0, 0], sizes = [1, 16, 16], strides = [1, 1, 1]} : vector<64x16x16xbf16> to vector<1x16x16xbf16>
    %250 = vector.shape_cast %249 : vector<1x16x16xbf16> to vector<16x16xbf16>
    %251 = vector.extract_strided_slice %17 {offsets = [31, 0, 0], sizes = [1, 16, 16], strides = [1, 1, 1]} : vector<64x16x16xbf16> to vector<1x16x16xbf16>
    %252 = vector.shape_cast %251 : vector<1x16x16xbf16> to vector<16x16xbf16>
    %253 = vector.extract_strided_slice %17 {offsets = [41, 0, 0], sizes = [1, 16, 16], strides = [1, 1, 1]} : vector<64x16x16xbf16> to vector<1x16x16xbf16>
    %254 = vector.shape_cast %253 : vector<1x16x16xbf16> to vector<16x16xbf16>
    %255 = vector.extract_strided_slice %17 {offsets = [43, 0, 0], sizes = [1, 16, 16], strides = [1, 1, 1]} : vector<64x16x16xbf16> to vector<1x16x16xbf16>
    %256 = vector.shape_cast %255 : vector<1x16x16xbf16> to vector<16x16xbf16>
    %257 = vector.extract_strided_slice %17 {offsets = [45, 0, 0], sizes = [1, 16, 16], strides = [1, 1, 1]} : vector<64x16x16xbf16> to vector<1x16x16xbf16>
    %258 = vector.shape_cast %257 : vector<1x16x16xbf16> to vector<16x16xbf16>
    %259 = vector.extract_strided_slice %17 {offsets = [47, 0, 0], sizes = [1, 16, 16], strides = [1, 1, 1]} : vector<64x16x16xbf16> to vector<1x16x16xbf16>
    %260 = vector.shape_cast %259 : vector<1x16x16xbf16> to vector<16x16xbf16>
    %261 = vector.extract_strided_slice %17 {offsets = [57, 0, 0], sizes = [1, 16, 16], strides = [1, 1, 1]} : vector<64x16x16xbf16> to vector<1x16x16xbf16>
    %262 = vector.shape_cast %261 : vector<1x16x16xbf16> to vector<16x16xbf16>
    %263 = vector.extract_strided_slice %17 {offsets = [59, 0, 0], sizes = [1, 16, 16], strides = [1, 1, 1]} : vector<64x16x16xbf16> to vector<1x16x16xbf16>
    %264 = vector.shape_cast %263 : vector<1x16x16xbf16> to vector<16x16xbf16>
    %265 = vector.extract_strided_slice %17 {offsets = [61, 0, 0], sizes = [1, 16, 16], strides = [1, 1, 1]} : vector<64x16x16xbf16> to vector<1x16x16xbf16>
    %266 = vector.shape_cast %265 : vector<1x16x16xbf16> to vector<16x16xbf16>
    %267 = vector.extract_strided_slice %17 {offsets = [63, 0, 0], sizes = [1, 16, 16], strides = [1, 1, 1]} : vector<64x16x16xbf16> to vector<1x16x16xbf16>
    %268 = vector.shape_cast %267 : vector<1x16x16xbf16> to vector<16x16xbf16>
    %269 = tpu.concatenate %238, %240, %242, %244, %246, %248, %250, %252, %254, %256, %258, %260, %262, %264, %266, %268 in 0 : vector<16x16xbf16>, vector<16x16xbf16>, vector<16x16xbf16>, vector<16x16xbf16>, vector<16x16xbf16>, vector<16x16xbf16>, vector<16x16xbf16>, vector<16x16xbf16>, vector<16x16xbf16>, vector<16x16xbf16>, vector<16x16xbf16>, vector<16x16xbf16>, vector<16x16xbf16>, vector<16x16xbf16>, vector<16x16xbf16>, vector<16x16xbf16> -> vector<256x16xbf16>
    %270 = tpu.concatenate %37, %62, %87, %112, %145, %178, %203, %236, %269 in 1 : vector<256x16xbf16>, vector<256x16xbf16>, vector<256x16xbf16>, vector<256x16xbf16>, vector<256x16xbf16>, vector<256x16xbf16>, vector<256x16xbf16>, vector<256x16xbf16>, vector<256x16xbf16> -> vector<256x144xbf16>
    %c0_8 = arith.constant 0 : index
    %c0_9 = arith.constant 0 : index
    %271 = vector.load %arg4[%c0_8, %c0_9] : memref<144x32xbf16, #tpu.memory_space<vmem>>, vector<144x32xbf16>
    %cst_10 = arith.constant dense<0.000000e+00> : vector<256x32xf32>
    %272 = tpu.matmul %270, %271, %cst_10 {dimension_numbers = #tpu.dot_dimension_numbers<[1], [0], [0], [1], [0, 0, 1, 1], [], []>} : vector<256x144xbf16>, vector<144x32xbf16>, vector<256x32xf32> -> vector<256x32xf32>
    %273 = vector.shape_cast %272 : vector<256x32xf32> to vector<16x16x32xf32>
    %274 = vector.extract_strided_slice %273 {offsets = [0, 0, 0], sizes = [1, 16, 32], strides = [1, 1, 1]} : vector<16x16x32xf32> to vector<1x16x32xf32>
    %275 = vector.shape_cast %274 : vector<1x16x32xf32> to vector<16x32xf32>
    %276 = vector.extract_strided_slice %273 {offsets = [1, 0, 0], sizes = [1, 16, 32], strides = [1, 1, 1]} : vector<16x16x32xf32> to vector<1x16x32xf32>
    %277 = vector.shape_cast %276 : vector<1x16x32xf32> to vector<16x32xf32>
    %278 = arith.maximumf %275, %277 : vector<16x32xf32>
    %279 = vector.extract_strided_slice %273 {offsets = [4, 0, 0], sizes = [1, 16, 32], strides = [1, 1, 1]} : vector<16x16x32xf32> to vector<1x16x32xf32>
    %280 = vector.shape_cast %279 : vector<1x16x32xf32> to vector<16x32xf32>
    %281 = vector.extract_strided_slice %273 {offsets = [5, 0, 0], sizes = [1, 16, 32], strides = [1, 1, 1]} : vector<16x16x32xf32> to vector<1x16x32xf32>
    %282 = vector.shape_cast %281 : vector<1x16x32xf32> to vector<16x32xf32>
    %283 = arith.maximumf %280, %282 : vector<16x32xf32>
    %284 = arith.maximumf %278, %283 : vector<16x32xf32>
    %285 = vector.extract_strided_slice %273 {offsets = [2, 0, 0], sizes = [1, 16, 32], strides = [1, 1, 1]} : vector<16x16x32xf32> to vector<1x16x32xf32>
    %286 = vector.shape_cast %285 : vector<1x16x32xf32> to vector<16x32xf32>
    %287 = vector.extract_strided_slice %273 {offsets = [3, 0, 0], sizes = [1, 16, 32], strides = [1, 1, 1]} : vector<16x16x32xf32> to vector<1x16x32xf32>
    %288 = vector.shape_cast %287 : vector<1x16x32xf32> to vector<16x32xf32>
    %289 = arith.maximumf %286, %288 : vector<16x32xf32>
    %290 = vector.extract_strided_slice %273 {offsets = [6, 0, 0], sizes = [1, 16, 32], strides = [1, 1, 1]} : vector<16x16x32xf32> to vector<1x16x32xf32>
    %291 = vector.shape_cast %290 : vector<1x16x32xf32> to vector<16x32xf32>
    %292 = vector.extract_strided_slice %273 {offsets = [7, 0, 0], sizes = [1, 16, 32], strides = [1, 1, 1]} : vector<16x16x32xf32> to vector<1x16x32xf32>
    %293 = vector.shape_cast %292 : vector<1x16x32xf32> to vector<16x32xf32>
    %294 = arith.maximumf %291, %293 : vector<16x32xf32>
    %295 = arith.maximumf %289, %294 : vector<16x32xf32>
    %296 = vector.extract_strided_slice %273 {offsets = [8, 0, 0], sizes = [1, 16, 32], strides = [1, 1, 1]} : vector<16x16x32xf32> to vector<1x16x32xf32>
    %297 = vector.shape_cast %296 : vector<1x16x32xf32> to vector<16x32xf32>
    %298 = vector.extract_strided_slice %273 {offsets = [9, 0, 0], sizes = [1, 16, 32], strides = [1, 1, 1]} : vector<16x16x32xf32> to vector<1x16x32xf32>
    %299 = vector.shape_cast %298 : vector<1x16x32xf32> to vector<16x32xf32>
    %300 = arith.maximumf %297, %299 : vector<16x32xf32>
    %301 = vector.extract_strided_slice %273 {offsets = [12, 0, 0], sizes = [1, 16, 32], strides = [1, 1, 1]} : vector<16x16x32xf32> to vector<1x16x32xf32>
    %302 = vector.shape_cast %301 : vector<1x16x32xf32> to vector<16x32xf32>
    %303 = vector.extract_strided_slice %273 {offsets = [13, 0, 0], sizes = [1, 16, 32], strides = [1, 1, 1]} : vector<16x16x32xf32> to vector<1x16x32xf32>
    %304 = vector.shape_cast %303 : vector<1x16x32xf32> to vector<16x32xf32>
    %305 = arith.maximumf %302, %304 : vector<16x32xf32>
    %306 = arith.maximumf %300, %305 : vector<16x32xf32>
    %307 = vector.extract_strided_slice %273 {offsets = [10, 0, 0], sizes = [1, 16, 32], strides = [1, 1, 1]} : vector<16x16x32xf32> to vector<1x16x32xf32>
    %308 = vector.shape_cast %307 : vector<1x16x32xf32> to vector<16x32xf32>
    %309 = vector.extract_strided_slice %273 {offsets = [11, 0, 0], sizes = [1, 16, 32], strides = [1, 1, 1]} : vector<16x16x32xf32> to vector<1x16x32xf32>
    %310 = vector.shape_cast %309 : vector<1x16x32xf32> to vector<16x32xf32>
    %311 = arith.maximumf %308, %310 : vector<16x32xf32>
    %312 = vector.extract_strided_slice %273 {offsets = [14, 0, 0], sizes = [1, 16, 32], strides = [1, 1, 1]} : vector<16x16x32xf32> to vector<1x16x32xf32>
    %313 = vector.shape_cast %312 : vector<1x16x32xf32> to vector<16x32xf32>
    %314 = vector.extract_strided_slice %273 {offsets = [15, 0, 0], sizes = [1, 16, 32], strides = [1, 1, 1]} : vector<16x16x32xf32> to vector<1x16x32xf32>
    %315 = vector.shape_cast %314 : vector<1x16x32xf32> to vector<16x32xf32>
    %316 = arith.maximumf %313, %315 : vector<16x32xf32>
    %317 = arith.maximumf %311, %316 : vector<16x32xf32>
    %318 = tpu.concatenate %284, %295, %306, %317 in 1 : vector<16x32xf32>, vector<16x32xf32>, vector<16x32xf32>, vector<16x32xf32> -> vector<16x128xf32>
    %c0_11 = arith.constant 0 : index
    %c0_12 = arith.constant 0 : index
    %319 = vector.load %arg5[%c0_11, %c0_12] : memref<1x128xf32, #tpu.memory_space<vmem>>, vector<1x128xf32>
    %320 = vector.broadcast %319 : vector<1x128xf32> to vector<16x128xf32>
    %321 = arith.addf %318, %320 : vector<16x128xf32>
    %cst_13 = arith.constant 0.000000e+00 : f32
    %322 = vector.broadcast %cst_13 : f32 to vector<16x128xf32>
    %323 = arith.maximumf %321, %322 : vector<16x128xf32>
    %324 = arith.truncf %323 : vector<16x128xf32> to vector<16x128xbf16>
    %c0_14 = arith.constant 0 : index
    %c0_15 = arith.constant 0 : index
    %325 = vector.load %arg6[%c0_14, %c0_15] : memref<128x64xbf16, #tpu.memory_space<vmem>>, vector<128x64xbf16>
    %cst_16 = arith.constant dense<0.000000e+00> : vector<16x64xf32>
    %326 = tpu.matmul %324, %325, %cst_16 {dimension_numbers = #tpu.dot_dimension_numbers<[1], [0], [0], [1], [0, 0, 1, 1], [], []>} : vector<16x128xbf16>, vector<128x64xbf16>, vector<16x64xf32> -> vector<16x64xf32>
    %c0_17 = arith.constant 0 : index
    %c0_18 = arith.constant 0 : index
    %327 = vector.load %arg7[%c0_17, %c0_18] : memref<1x64xf32, #tpu.memory_space<vmem>>, vector<1x64xf32>
    %328 = vector.broadcast %327 : vector<1x64xf32> to vector<16x64xf32>
    %329 = arith.addf %326, %328 : vector<16x64xf32>
    %cst_19 = arith.constant 0.000000e+00 : f32
    %330 = vector.broadcast %cst_19 : f32 to vector<16x64xf32>
    %331 = arith.maximumf %329, %330 : vector<16x64xf32>
    %332 = arith.truncf %331 : vector<16x64xf32> to vector<16x64xbf16>
    %c0_20 = arith.constant 0 : index
    %c0_21 = arith.constant 0 : index
    %333 = vector.load %arg8[%c0_20, %c0_21] : memref<64x128xbf16, #tpu.memory_space<vmem>>, vector<64x128xbf16>
    %cst_22 = arith.constant dense<0.000000e+00> : vector<16x128xf32>
    %334 = tpu.matmul %332, %333, %cst_22 {dimension_numbers = #tpu.dot_dimension_numbers<[1], [0], [0], [1], [0, 0, 1, 1], [], []>} : vector<16x64xbf16>, vector<64x128xbf16>, vector<16x128xf32> -> vector<16x128xf32>
    %c0_23 = arith.constant 0 : index
    %c0_24 = arith.constant 0 : index
    %335 = vector.load %arg9[%c0_23, %c0_24] : memref<1x128xf32, #tpu.memory_space<vmem>>, vector<1x128xf32>
    %336 = vector.broadcast %335 : vector<1x128xf32> to vector<16x128xf32>
    %337 = arith.addf %334, %336 : vector<16x128xf32>
    %c0_25 = arith.constant 0 : index
    %c0_26 = arith.constant 0 : index
    %338 = vector.load %arg10[%c0_25, %c0_26] : memref<16x128xf32, #tpu.memory_space<vmem>>, vector<16x128xf32>
    tpu.vector_store %arg10[%c0_25, %c0_26], %337 {strides = array<i32>} : memref<16x128xf32, #tpu.memory_space<vmem>>, vector<16x128xf32>,
    return
  }
  func.func @transform_0(%arg0: i32) -> (i32, i32, i32) {
    %c0_i32 = arith.constant 0 : i32
    %c0_i32_0 = arith.constant 0 : i32
    %c0_i32_1 = arith.constant 0 : i32
    return %c0_i32, %arg0, %c0_i32_0 : i32, i32, i32
  }
  func.func @transform_1(%arg0: i32) -> (i32, i32) {
    %c0_i32 = arith.constant 0 : i32
    %c0_i32_0 = arith.constant 0 : i32
    %c0_i32_1 = arith.constant 0 : i32
    return %c0_i32, %c0_i32_0 : i32, i32
  }
  func.func @transform_2(%arg0: i32) -> (i32, i32) {
    %c0_i32 = arith.constant 0 : i32
    %c0_i32_0 = arith.constant 0 : i32
    %c0_i32_1 = arith.constant 0 : i32
    return %c0_i32, %c0_i32_0 : i32, i32
  }
  func.func @transform_3(%arg0: i32) -> (i32, i32) {
    %c0_i32 = arith.constant 0 : i32
    %c0_i32_0 = arith.constant 0 : i32
    %c0_i32_1 = arith.constant 0 : i32
    return %c0_i32, %c0_i32_0 : i32, i32
  }
  func.func @transform_4(%arg0: i32) -> (i32, i32) {
    %c0_i32 = arith.constant 0 : i32
    %c0_i32_0 = arith.constant 0 : i32
    %c0_i32_1 = arith.constant 0 : i32
    return %c0_i32, %c0_i32_0 : i32, i32
  }
  func.func @transform_5(%arg0: i32) -> (i32, i32) {
    %c0_i32 = arith.constant 0 : i32
    %c0_i32_0 = arith.constant 0 : i32
    %c0_i32_1 = arith.constant 0 : i32
    return %c0_i32, %c0_i32_0 : i32, i32
  }
  func.func @transform_6(%arg0: i32) -> (i32, i32) {
    %c0_i32 = arith.constant 0 : i32
    %c0_i32_0 = arith.constant 0 : i32
    %c0_i32_1 = arith.constant 0 : i32
    return %c0_i32, %c0_i32_0 : i32, i32
  }
  func.func @transform_7(%arg0: i32) -> (i32, i32) {
    %c0_i32 = arith.constant 0 : i32
    %c0_i32_0 = arith.constant 0 : i32
    %c0_i32_1 = arith.constant 0 : i32
    return %c0_i32, %c0_i32_0 : i32, i32
  }
  func.func @transform_8(%arg0: i32) -> (i32, i32) {
    %c0_i32 = arith.constant 0 : i32
    %c0_i32_0 = arith.constant 0 : i32
    %c0_i32_1 = arith.constant 0 : i32
    return %c0_i32, %c0_i32_0 : i32, i32
  }
  func.func @transform_9(%arg0: i32) -> (i32, i32) {
    %c0_i32 = arith.constant 0 : i32
    %c0_i32_0 = arith.constant 0 : i32
    return %arg0, %c0_i32 : i32, i32
  }
}

</mosaic_0001>

<llo_original>
// kernel: cifar_classifier_forward.1
$region0: #{cifar_classifier_forward.1}
  #allocation0 [shape = 'u32[]', space=smem, size = 0x4, offset = 0x4, fixed_abs, tag = 'smem constant byte address 0x4 - core index']
  #allocation1 [shape = 'u32[72,128]{1,0:T(1,128)}', space=vmem, size = 0x9000, scoped, tag = 'internal scratch']
  %s0 = inlined_call_operand.vmem [shape: bf16[64,32,108], index: 0, kind: input, shape index: {}]
  %s1 = inlined_call_operand.vmem [shape: bf16[108,64], index: 1, kind: input, shape index: {}]
  %s2 = inlined_call_operand.vmem [shape: f32[1,16], index: 2, kind: input, shape index: {}]
  %s3 = inlined_call_operand.vmem [shape: bf16[144,32], index: 3, kind: input, shape index: {}]
  %s4 = inlined_call_operand.vmem [shape: f32[1,128], index: 4, kind: input, shape index: {}]
  %s5 = inlined_call_operand.vmem [shape: bf16[128,64], index: 5, kind: input, shape index: {}]
  %s6 = inlined_call_operand.vmem [shape: f32[1,64], index: 6, kind: input, shape index: {}]
  %s7 = inlined_call_operand.vmem [shape: bf16[64,128], index: 7, kind: input, shape index: {}]
  %s8 = inlined_call_operand.vmem [shape: f32[1,128], index: 8, kind: input, shape index: {}]
  %s9 = inlined_call_operand.vmem [shape: f32[32,128], index: 9, kind: output, shape index: {}]
  %s10 = sld [smem:[#allocation0]]
  $region110: #{cifar_classifier_forward.1} parent=0
    _
  %s12 = ssub.s32 1, %s10
  %s13 = scalar_select 0, %s12, %s10
  $region1: #{cifar_classifier_forward.1} parent=0
    #allocation2 [shape = 'u8[524288]{0}', space=vmem, size = 0x80000, scoped, tag = 'input window, operand 0']
    loop: start=0, step=1, limit=4
    $region2: #{cifar_classifier_forward.1} parent=1 // loop_pre_header
      _
    $region3: #{cifar_classifier_forward.1} parent=1 // loop_header
      %s15 = sphi 0, %s19
      %p16 = scmp.ge.s32.totalorder %s15, 4
      %s25 = sphi 0, %s27
      %s28 = sphi 0, %s25
      %s29 = sphi 0, %s28
      %s45 = sphi 0, %s29
      %s49 = sphi 0, %s49
      %s51 = sphi 0, %s49
      %s52 = sphi 0, %s51
      %s66 = sphi 0, %s52
      %s70 = sphi 0, %s70
      %s72 = sphi 0, %s70
      %s73 = sphi 0, %s72
      %s87 = sphi 0, %s73
      %s91 = sphi 0, %s91
      %s93 = sphi 0, %s91
      %s94 = sphi 0, %s93
      %s108 = sphi 0, %s94
      %s112 = sphi 0, %s112
      %s114 = sphi 0, %s112
      %s115 = sphi 0, %s114
      %s129 = sphi 0, %s115
      %s133 = sphi 0, %s133
      %s135 = sphi 0, %s133
      %s136 = sphi 0, %s135
      %s150 = sphi 0, %s136
      %s154 = sphi 0, %s154
      %s156 = sphi 0, %s154
      %s157 = sphi 0, %s156
      %s171 = sphi 0, %s157
      %s175 = sphi 0, %s175
      %s177 = sphi 0, %s175
      %s178 = sphi 0, %s177
      %s192 = sphi 0, %s178
      %s196 = sphi 0, %s196
      %s198 = sphi 0, %s196
      %s199 = sphi 0, %s198
      %s213 = sphi 0, %s199
      %s219 = sphi 0, %s221
      %s222 = sphi 0, %s219
      %s223 = sphi 0, %s222
      %s239 = sphi 0, %s223
    $region4: #{cifar_classifier_forward.1} parent=1 // loop_header_branch
      %18 = sbr.rel (%p16) target = $region8
    $region5: #{cifar_classifier_forward.1} parent=1 // loop_body
      %s20 = ssub.s32 %s15, 1
      %s21 = ssub.s32 %s15, 2
      %s22 = sadd.s32 %s15, 1
      %s23 = ssub.s32 %s15, %s22
      %p24 = scmp.eq.s32.totalorder %s23, 0
      %s26 = sadd.s32 %s25, 1
      %s27 = scalar_select %p24, %s25, %s26
      %p30 = pneg %p24
      %p31 = scmp.eq.s32.totalorder %s15, 1
      %p32 = por %p30, %p31
      %p33 = scmp.ne.s32.totalorder %s25, %s28
      %p34 = scmp.eq.s32.totalorder %s15, 0
      %p35 = por %p33, %p34
      %p36 = scmp.ne.s32.totalorder %s25, %s28
      %p37 = scmp.eq.s32.totalorder %s20, 1
      %p38 = por %p36, %p37
      %p39 = scmp.ne.s32.totalorder %s28, %s29
      %p40 = scmp.eq.s32.totalorder %s20, 0
      %p41 = por %p39, %p40
      %p42 = scmp.ne.s32.totalorder %s28, %s29
      %p43 = scmp.eq.s32.totalorder %s21, 1
      %p44 = por %p42, %p43
      %p46 = scmp.ne.s32.totalorder %s29, %s45
      %p47 = scmp.eq.s32.totalorder %s21, 0
      %p48 = por %p46, %p47
      %s50 = sadd.s32 %s49, 1
      %p53 = scmp.eq.s32.totalorder %s15, 1
      %p54 = scmp.ne.s32.totalorder %s49, %s51
      %p55 = scmp.eq.s32.totalorder %s15, 0
      %p56 = por %p54, %p55
      %p57 = scmp.ne.s32.totalorder %s49, %s51
      %p58 = scmp.eq.s32.totalorder %s20, 1
      %p59 = por %p57, %p58
      %p60 = scmp.ne.s32.totalorder %s51, %s52
      %p61 = scmp.eq.s32.totalorder %s20, 0
      %p62 = por %p60, %p61
      %p63 = scmp.ne.s32.totalorder %s51, %s52
      %p64 = scmp.eq.s32.totalorder %s21, 1
      %p65 = por %p63, %p64
      %p67 = scmp.ne.s32.totalorder %s52, %s66
      %p68 = scmp.eq.s32.totalorder %s21, 0
      %p69 = por %p67, %p68
      %s71 = sadd.s32 %s70, 1
      %p74 = scmp.eq.s32.totalorder %s15, 1
      %p75 = scmp.ne.s32.totalorder %s70, %s72
      %p76 = scmp.eq.s32.totalorder %s15, 0
      %p77 = por %p75, %p76
      %p78 = scmp.ne.s32.totalorder %s70, %s72
      %p79 = scmp.eq.s32.totalorder %s20, 1
      %p80 = por %p78, %p79
      %p81 = scmp.ne.s32.totalorder %s72, %s73
      %p82 = scmp.eq.s32.totalorder %s20, 0
      %p83 = por %p81, %p82
      %p84 = scmp.ne.s32.totalorder %s72, %s73
      %p85 = scmp.eq.s32.totalorder %s21, 1
      %p86 = por %p84, %p85
      %p88 = scmp.ne.s32.totalorder %s73, %s87
      %p89 = scmp.eq.s32.totalorder %s21, 0
      %p90 = por %p88, %p89
      %s92 = sadd.s32 %s91, 1
      %p95 = scmp.eq.s32.totalorder %s15, 1
      %p96 = scmp.ne.s32.totalorder %s91, %s93
      %p97 = scmp.eq.s32.totalorder %s15, 0
      %p98 = por %p96, %p97
      %p99 = scmp.ne.s32.totalorder %s91, %s93
      %p100 = scmp.eq.s32.totalorder %s20, 1
      %p101 = por %p99, %p100
      %p102 = scmp.ne.s32.totalorder %s93, %s94
      %p103 = scmp.eq.s32.totalorder %s20, 0
      %p104 = por %p102, %p103
      %p105 = scmp.ne.s32.totalorder %s93, %s94
      %p106 = scmp.eq.s32.totalorder %s21, 1
      %p107 = por %p105, %p106
      %p109 = scmp.ne.s32.totalorder %s94, %s108
      %p110 = scmp.eq.s32.totalorder %s21, 0
      %p111 = por %p109, %p110
      %s113 = sadd.s32 %s112, 1
      %p116 = scmp.eq.s32.totalorder %s15, 1
      %p117 = scmp.ne.s32.totalorder %s112, %s114
      %p118 = scmp.eq.s32.totalorder %s15, 0
      %p119 = por %p117, %p118
      %p120 = scmp.ne.s32.totalorder %s112, %s114
      %p121 = scmp.eq.s32.totalorder %s20, 1
      %p122 = por %p120, %p121
      %p123 = scmp.ne.s32.totalorder %s114, %s115
      %p124 = scmp.eq.s32.totalorder %s20, 0
      %p125 = por %p123, %p124
      %p126 = scmp.ne.s32.totalorder %s114, %s115
      %p127 = scmp.eq.s32.totalorder %s21, 1
      %p128 = por %p126, %p127
      %p130 = scmp.ne.s32.totalorder %s115, %s129
      %p131 = scmp.eq.s32.totalorder %s21, 0
      %p132 = por %p130, %p131
      %s134 = sadd.s32 %s133, 1
      %p137 = scmp.eq.s32.totalorder %s15, 1
      %p138 = scmp.ne.s32.totalorder %s133, %s135
      %p139 = scmp.eq.s32.totalorder %s15, 0
      %p140 = por %p138, %p139
      %p141 = scmp.ne.s32.totalorder %s133, %s135
      %p142 = scmp.eq.s32.totalorder %s20, 1
      %p143 = por %p141, %p142
      %p144 = scmp.ne.s32.totalorder %s135, %s136
      %p145 = scmp.eq.s32.totalorder %s20, 0
      %p146 = por %p144, %p145
      %p147 = scmp.ne.s32.totalorder %s135, %s136
      %p148 = scmp.eq.s32.totalorder %s21, 1
      %p149 = por %p147, %p148
      %p151 = scmp.ne.s32.totalorder %s136, %s150
      %p152 = scmp.eq.s32.totalorder %s21, 0
      %p153 = por %p151, %p152
      %s155 = sadd.s32 %s154, 1
      %p158 = scmp.eq.s32.totalorder %s15, 1
      %p159 = scmp.ne.s32.totalorder %s154, %s156
      %p160 = scmp.eq.s32.totalorder %s15, 0
      %p161 = por %p159, %p160
      %p162 = scmp.ne.s32.totalorder %s154, %s156
      %p163 = scmp.eq.s32.totalorder %s20, 1
      %p164 = por %p162, %p163
      %p165 = scmp.ne.s32.totalorder %s156, %s157
      %p166 = scmp.eq.s32.totalorder %s20, 0
      %p167 = por %p165, %p166
      %p168 = scmp.ne.s32.totalorder %s156, %s157
      %p169 = scmp.eq.s32.totalorder %s21, 1
      %p170 = por %p168, %p169
      %p172 = scmp.ne.s32.totalorder %s157, %s171
      %p173 = scmp.eq.s32.totalorder %s21, 0
      %p174 = por %p172, %p173
      %s176 = sadd.s32 %s175, 1
      %p179 = scmp.eq.s32.totalorder %s15, 1
      %p180 = scmp.ne.s32.totalorder %s175, %s177
      %p181 = scmp.eq.s32.totalorder %s15, 0
      %p182 = por %p180, %p181
      %p183 = scmp.ne.s32.totalorder %s175, %s177
      %p184 = scmp.eq.s32.totalorder %s20, 1
      %p185 = por %p183, %p184
      %p186 = scmp.ne.s32.totalorder %s177, %s178
      %p187 = scmp.eq.s32.totalorder %s20, 0
      %p188 = por %p186, %p187
      %p189 = scmp.ne.s32.totalorder %s177, %s178
      %p190 = scmp.eq.s32.totalorder %s21, 1
      %p191 = por %p189, %p190
      %p193 = scmp.ne.s32.totalorder %s178, %s192
      %p194 = scmp.eq.s32.totalorder %s21, 0
      %p195 = por %p193, %p194
      %s197 = sadd.s32 %s196, 1
      %p200 = scmp.eq.s32.totalorder %s15, 1
      %p201 = scmp.ne.s32.totalorder %s196, %s198
      %p202 = scmp.eq.s32.totalorder %s15, 0
      %p203 = por %p201, %p202
      %p204 = scmp.ne.s32.totalorder %s196, %s198
      %p205 = scmp.eq.s32.totalorder %s20, 1
      %p206 = por %p204, %p205
      %p207 = scmp.ne.s32.totalorder %s198, %s199
      %p208 = scmp.eq.s32.totalorder %s20, 0
      %p209 = por %p207, %p208
      %p210 = scmp.ne.s32.totalorder %s198, %s199
      %p211 = scmp.eq.s32.totalorder %s21, 1
      %p212 = por %p210, %p211
      %p214 = scmp.ne.s32.totalorder %s199, %s213
      %p215 = scmp.eq.s32.totalorder %s21, 0
      %p216 = por %p214, %p215
      %s217 = ssub.s32 %s15, %s22
      %p218 = scmp.eq.s32.totalorder %s217, 0
      %s220 = sadd.s32 %s219, 1
      %s221 = scalar_select %p218, %s219, %s220
      %p224 = pneg %p218
      %p225 = scmp.eq.s32.totalorder %s15, 1
      %p226 = por %p224, %p225
      %p227 = scmp.ne.s32.totalorder %s219, %s222
      %p228 = scmp.eq.s32.totalorder %s15, 0
      %p229 = por %p227, %p228
      %p230 = scmp.ne.s32.totalorder %s219, %s222
      %p231 = scmp.eq.s32.totalorder %s20, 1
      %p232 = por %p230, %p231
      %p233 = scmp.ne.s32.totalorder %s222, %s223
      %p234 = scmp.eq.s32.totalorder %s20, 0
      %p235 = por %p233, %p234
      %p236 = scmp.ne.s32.totalorder %s222, %s223
      %p237 = scmp.eq.s32.totalorder %s21, 1
      %p238 = por %p236, %p237
      %p240 = scmp.ne.s32.totalorder %s223, %s239
      %p241 = scmp.eq.s32.totalorder %s21, 0
      %p242 = por %p240, %p241
      %p243 = scmp.le.s32.totalorder 1, %s15
      %p244 = scmp.lt.s32.totalorder %s15, 3
      %p245 = pnand %p243, %p244
      %p246 = pneg %p245
      // Predicated region
      $region9: #{cifar_classifier_forward.1} parent=5 // pred_check
        _
      $region10: #{cifar_classifier_forward.1} parent=5 // pred_check_branch
        %248 = sbr.rel (%p245) target = $region12
      $region11: #{cifar_classifier_forward.1} parent=5 // pred_region
        %s249 = ssub.s32 %s15, 1
        // Predicated region
        $region13: #{cifar_classifier_forward.1} parent=11 // pred_check
          %p250 = pneg %p62
        $region14: #{cifar_classifier_forward.1} parent=11 // pred_check_branch
          %252 = sbr.rel (%p250) target = $region16
        $region15: #{cifar_classifier_forward.1} parent=11 // pred_region
          _
        $region16: #{cifar_classifier_forward.1} parent=11 // pred_fallthru
          _
        // Predicated region
        $region17: #{cifar_classifier_forward.1} parent=11 // pred_check
          %p253 = pneg %p83
        $region18: #{cifar_classifier_forward.1} parent=11 // pred_check_branch
          %255 = sbr.rel (%p253) target = $region20
        $region19: #{cifar_classifier_forward.1} parent=11 // pred_region
          _
        $region20: #{cifar_classifier_forward.1} parent=11 // pred_fallthru
          _
        // Predicated region
        $region21: #{cifar_classifier_forward.1} parent=11 // pred_check
          %p256 = pneg %p104
        $region22: #{cifar_classifier_forward.1} parent=11 // pred_check_branch
          %258 = sbr.rel (%p256) target = $region24
        $region23: #{cifar_classifier_forward.1} parent=11 // pred_region
          _
        $region24: #{cifar_classifier_forward.1} parent=11 // pred_fallthru
          _
        // Predicated region
        $region25: #{cifar_classifier_forward.1} parent=11 // pred_check
          %p259 = pneg %p125
        $region26: #{cifar_classifier_forward.1} parent=11 // pred_check_branch
          %261 = sbr.rel (%p259) target = $region28
        $region27: #{cifar_classifier_forward.1} parent=11 // pred_region
          _
        $region28: #{cifar_classifier_forward.1} parent=11 // pred_fallthru
          _
        // Predicated region
        $region29: #{cifar_classifier_forward.1} parent=11 // pred_check
          %p262 = pneg %p146
        $region30: #{cifar_classifier_forward.1} parent=11 // pred_check_branch
          %264 = sbr.rel (%p262) target = $region32
        $region31: #{cifar_classifier_forward.1} parent=11 // pred_region
          _
        $region32: #{cifar_classifier_forward.1} parent=11 // pred_fallthru
          _
        // Predicated region
        $region33: #{cifar_classifier_forward.1} parent=11 // pred_check
          %p265 = pneg %p167
        $region34: #{cifar_classifier_forward.1} parent=11 // pred_check_branch
          %267 = sbr.rel (%p265) target = $region36
        $region35: #{cifar_classifier_forward.1} parent=11 // pred_region
          _
        $region36: #{cifar_classifier_forward.1} parent=11 // pred_fallthru
          _
        // Predicated region
        $region37: #{cifar_classifier_forward.1} parent=11 // pred_check
          %p268 = pneg %p188
        $region38: #{cifar_classifier_forward.1} parent=11 // pred_check_branch
          %270 = sbr.rel (%p268) target = $region40
        $region39: #{cifar_classifier_forward.1} parent=11 // pred_region
          _
        $region40: #{cifar_classifier_forward.1} parent=11 // pred_fallthru
          _
        // Predicated region
        $region41: #{cifar_classifier_forward.1} parent=11 // pred_check
          %p271 = pneg %p209
        $region42: #{cifar_classifier_forward.1} parent=11 // pred_check_branch
          %273 = sbr.rel (%p271) target = $region44
        $region43: #{cifar_classifier_forward.1} parent=11 // pred_region
          _
        $region44: #{cifar_classifier_forward.1} parent=11 // pred_fallthru
          _
      $region12: #{cifar_classifier_forward.1} parent=5 // pred_fallthru
        _
      %p274 = scmp.lt.s32.totalorder %s15, 2
      // Predicated region
      $region45: #{cifar_classifier_forward.1} parent=5 // pred_check
        %p275 = pneg %p274
      $region46: #{cifar_classifier_forward.1} parent=5 // pred_check_branch
        %277 = sbr.rel (%p275) target = $region48
      $region47: #{cifar_classifier_forward.1} parent=5 // pred_region
        // Predicated region
        $region49: #{cifar_classifier_forward.1} parent=47 // pred_check
          %p278 = pneg %p35
        $region50: #{cifar_classifier_forward.1} parent=47 // pred_check_branch
          %280 = sbr.rel (%p278) target = $region52
        $region51: #{cifar_classifier_forward.1} parent=47 // pred_region
          %s281 = sand.u32 %s25, 1
          %s282 = sand.u32 %s25, 1
          %s283 = smul.addr %s282, 512
          %s284 = scalar_lea.vmem [#allocation2], %s283
          %s285 = smul.u32 2, %s15
          %s286 = smul.addr %s285, 4
          %s287 = scalar_lea.vmem %s0, %s286
          // Predicated region
          $region53: #{cifar_classifier_forward.1} parent=51 // pred_check
            _
          $region54: #{cifar_classifier_forward.1} parent=51 // pred_check_branch
            %289 = sbr.rel (0) target = $region56
          $region55: #{cifar_classifier_forward.1} parent=51 // pred_region
            // Predicated region
            $region57: #{cifar_classifier_forward.1} parent=55 // pred_check
              _
            $region58: #{cifar_classifier_forward.1} parent=55 // pred_check_branch
              %291 = sbr.rel target = $region60
            $region59: #{cifar_classifier_forward.1} parent=55 // pred_region
              // Predicated region
              $region72: #{cifar_classifier_forward.1} parent=59 // pred_check
                _
              $region73: #{cifar_classifier_forward.1} parent=59 // pred_check_branch
                %561 = sbr.rel (0) target = $region75
              $region74: #{cifar_classifier_forward.1} parent=59 // pred_region
                loop: start=0, step=1, limit=1
                $region76: #{cifar_classifier_forward.1} parent=74 // loop_pre_header
                  _
                $region77: #{cifar_classifier_forward.1} parent=74 // loop_header
                  %s563 = sphi 0, %s567
                  %p564 = scmp.ge.s32.totalorder %s563, 1
                  %s568 = sphi %s287, %s287
                  %s569 = sphi %s284, %s284
                $region78: #{cifar_classifier_forward.1} parent=74 // loop_header_branch
                  %566 = sbr.rel (%p564) target = $region82
                $region79: #{cifar_classifier_forward.1} parent=74 // loop_body
                  _
                $region80: #{cifar_classifier_forward.1} parent=74 // loop_footer
                  %s567 = sadd.s32 1, %s563
                $region81: #{cifar_classifier_forward.1} parent=74 // loop_footer_branch
                  %562 = sbr.rel target = $region77
                $region82: #{cifar_classifier_forward.1} parent=74 // loop_exit
                  _
                %s571 = ssub.s32 16, 1
                loop: start=0, step=1, limit=1
                $region83: #{cifar_classifier_forward.1} parent=74 // loop_pre_header
                  _
                $region84: #{cifar_classifier_forward.1} parent=74 // loop_header
                  %s573 = sphi 0, %s577
                  %p574 = scmp.ge.s32.totalorder %s573, 1
                  %s578 = sphi %s287, %s287
                  %s579 = sphi %s284, %s284
                $region85: #{cifar_classifier_forward.1} parent=74 // loop_header_branch
                  %576 = sbr.rel (%p574) target = $region89
                $region86: #{cifar_classifier_forward.1} parent=74 // loop_body
                  %v580 = vld [vmem:[%s578] sm:%s571]
                  %581 = vst [vmem:[%s579] sm:%s571] %v580
                  %v582 = vld [vmem:[%s578 + $0x4] sm:%s571]
                  %583 = vst [vmem:[%s579 + $0x4] sm:%s571] %v582
                  %v584 = vld [vmem:[%s578 + $0x10] sm:%s571]
                  %585 = vst [vmem:[%s579 + $0x8] sm:%s571] %v584
                  %v586 = vld [vmem:[%s578 + $0x14] sm:%s571]
                  %587 = vst [vmem:[%s579 + $0xc] sm:%s571] %v586
                  %v588 = vld [vmem:[%s578 + $0x20] sm:%s571]
                  %589 = vst [vmem:[%s579 + $0x10] sm:%s571] %v588
                  %v590 = vld [vmem:[%s578 + $0x24] sm:%s571]
                  %591 = vst [vmem:[%s579 + $0x14] sm:%s571] %v590
                  %v592 = vld [vmem:[%s578 + $0x30] sm:%s571]
                  %593 = vst [vmem:[%s579 + $0x18] sm:%s571] %v592
                  %v594 = vld [vmem:[%s578 + $0x34] sm:%s571]
                  %595 = vst [vmem:[%s579 + $0x1c] sm:%s571] %v594
                  %v596 = vld [vmem:[%s578 + $0x40] sm:%s571]
                  %597 = vst [vmem:[%s579 + $0x20] sm:%s571] %v596
                  %v598 = vld [vmem:[%s578 + $0x44] sm:%s571]
                  %599 = vst [vmem:[%s579 + $0x24] sm:%s571] %v598
                  %v600 = vld [vmem:[%s578 + $0x50] sm:%s571]
                  %601 = vst [vmem:[%s579 + $0x28] sm:%s571] %v600
                  %v602 = vld [vmem:[%s578 + $0x54] sm:%s571]
                  %603 = vst [vmem:[%s579 + $0x2c] sm:%s571] %v602
                  %v604 = vld [vmem:[%s578 + $0x60] sm:%s571]
                  %605 = vst [vmem:[%s579 + $0x30] sm:%s571] %v604
                  %v606 = vld [vmem:[%s578 + $0x64] sm:%s571]
                  %607 = vst [vmem:[%s579 + $0x34] sm:%s571] %v606
                  %v608 = vld [vmem:[%s578 + $0x70] sm:%s571]
                  %609 = vst [vmem:[%s579 + $0x38] sm:%s571] %v608
                  %v610 = vld [vmem:[%s578 + $0x74] sm:%s571]
                  %611 = vst [vmem:[%s579 + $0x3c] sm:%s571] %v610
                  %v612 = vld [vmem:[%s578 + $0x80] sm:%s571]
                  %613 = vst [vmem:[%s579 + $0x40] sm:%s571] %v612
                  %v614 = vld [vmem:[%s578 + $0x84] sm:%s571]
                  %615 = vst [vmem:[%s579 + $0x44] sm:%s571] %v614
                  %v616 = vld [vmem:[%s578 + $0x90] sm:%s571]
                  %617 = vst [vmem:[%s579 + $0x48] sm:%s571] %v616
                  %v618 = vld [vmem:[%s578 + $0x94] sm:%s571]
                  %619 = vst [vmem:[%s579 + $0x4c] sm:%s571] %v618
                  %v620 = vld [vmem:[%s578 + $0xa0] sm:%s571]
                  %621 = vst [vmem:[%s579 + $0x50] sm:%s571] %v620
                  %v622 = vld [vmem:[%s578 + $0xa4] sm:%s571]
                  %623 = vst [vmem:[%s579 + $0x54] sm:%s571] %v622
                  %v624 = vld [vmem:[%s578 + $0xb0] sm:%s571]
                  %625 = vst [vmem:[%s579 + $0x58] sm:%s571] %v624
                  %v626 = vld [vmem:[%s578 + $0xb4] sm:%s571]
                  %627 = vst [vmem:[%s579 + $0x5c] sm:%s571] %v626
                  %v628 = vld [vmem:[%s578 + $0xc0] sm:%s571]
                  %629 = vst [vmem:[%s579 + $0x60] sm:%s571] %v628
                  %v630 = vld [vmem:[%s578 + $0xc4] sm:%s571]
                  %631 = vst [vmem:[%s579 + $0x64] sm:%s571] %v630
                  %v632 = vld [vmem:[%s578 + $0xd0] sm:%s571]
                  %633 = vst [vmem:[%s579 + $0x68] sm:%s571] %v632
                  %v634 = vld [vmem:[%s578 + $0xd4] sm:%s571]
                  %635 = vst [vmem:[%s579 + $0x6c] sm:%s571] %v634
                  %v636 = vld [vmem:[%s578 + $0xe0] sm:%s571]
                  %637 = vst [vmem:[%s579 + $0x70] sm:%s571] %v636
                  %v638 = vld [vmem:[%s578 + $0xe4] sm:%s571]
                  %639 = vst [vmem:[%s579 + $0x74] sm:%s571] %v638
                  %v640 = vld [vmem:[%s578 + $0xf0] sm:%s571]
                  %641 = vst [vmem:[%s579 + $0x78] sm:%s571] %v640
                  %v642 = vld [vmem:[%s578 + $0xf4] sm:%s571]
                  %643 = vst [vmem:[%s579 + $0x7c] sm:%s571] %v642
                  %v644 = vld [vmem:[%s578 + $0x100] sm:%s571]
                  %645 = vst [vmem:[%s579 + $0x80] sm:%s571] %v644
                  %v646 = vld [vmem:[%s578 + $0x104] sm:%s571]
                  %647 = vst [vmem:[%s579 + $0x84] sm:%s571] %v646
                  %v648 = vld [vmem:[%s578 + $0x110] sm:%s571]
                  %649 = vst [vmem:[%s579 + $0x88] sm:%s571] %v648
                  %v650 = vld [vmem:[%s578 + $0x114] sm:%s571]
                  %651 = vst [vmem:[%s579 + $0x8c] sm:%s571] %v650
                  %v652 = vld [vmem:[%s578 + $0x120] sm:%s571]
                  %653 = vst [vmem:[%s579 + $0x90] sm:%s571] %v652
                  %v654 = vld [vmem:[%s578 + $0x124] sm:%s571]
                  %655 = vst [vmem:[%s579 + $0x94] sm:%s571] %v654
                  %v656 = vld [vmem:[%s578 + $0x130] sm:%s571]
                  %657 = vst [vmem:[%s579 + $0x98] sm:%s571] %v656
                  %v658 = vld [vmem:[%s578 + $0x134] sm:%s571]
                  %659 = vst [vmem:[%s579 + $0x9c] sm:%s571] %v658
                  %v660 = vld [vmem:[%s578 + $0x140] sm:%s571]
                  %661 = vst [vmem:[%s579 + $0xa0] sm:%s571] %v660
                  %v662 = vld [vmem:[%s578 + $0x144] sm:%s571]
                  %663 = vst [vmem:[%s579 + $0xa4] sm:%s571] %v662
                  %v664 = vld [vmem:[%s578 + $0x150] sm:%s571]
                  %665 = vst [vmem:[%s579 + $0xa8] sm:%s571] %v664
                  %v666 = vld [vmem:[%s578 + $0x154] sm:%s571]
                  %667 = vst [vmem:[%s579 + $0xac] sm:%s571] %v666
                  %v668 = vld [vmem:[%s578 + $0x160] sm:%s571]
                  %669 = vst [vmem:[%s579 + $0xb0] sm:%s571] %v668
                  %v670 = vld [vmem:[%s578 + $0x164] sm:%s571]
                  %671 = vst [vmem:[%s579 + $0xb4] sm:%s571] %v670
                  %v672 = vld [vmem:[%s578 + $0x170] sm:%s571]
                  %673 = vst [vmem:[%s579 + $0xb8] sm:%s571] %v672
                  %v674 = vld [vmem:[%s578 + $0x174] sm:%s571]
                  %675 = vst [vmem:[%s579 + $0xbc] sm:%s571] %v674
                  %v676 = vld [vmem:[%s578 + $0x180] sm:%s571]
                  %677 = vst [vmem:[%s579 + $0xc0] sm:%s571] %v676
                  %v678 = vld [vmem:[%s578 + $0x184] sm:%s571]
                  %679 = vst [vmem:[%s579 + $0xc4] sm:%s571] %v678
                  %v680 = vld [vmem:[%s578 + $0x190] sm:%s571]
                  %681 = vst [vmem:[%s579 + $0xc8] sm:%s571] %v680
                  %v682 = vld [vmem:[%s578 + $0x194] sm:%s571]
                  %683 = vst [vmem:[%s579 + $0xcc] sm:%s571] %v682
                  %v684 = vld [vmem:[%s578 + $0x1a0] sm:%s571]
                  %685 = vst [vmem:[%s579 + $0xd0] sm:%s571] %v684
                  %v686 = vld [vmem:[%s578 + $0x1a4] sm:%s571]
                  %687 = vst [vmem:[%s579 + $0xd4] sm:%s571] %v686
                  %v688 = vld [vmem:[%s578 + $0x1b0] sm:%s571]
                  %689 = vst [vmem:[%s579 + $0xd8] sm:%s571] %v688
                  %v690 = vld [vmem:[%s578 + $0x1b4] sm:%s571]
                  %691 = vst [vmem:[%s579 + $0xdc] sm:%s571] %v690
                  %v692 = vld [vmem:[%s578 + $0x1c0] sm:%s571]
                  %693 = vst [vmem:[%s579 + $0xe0] sm:%s571] %v692
                  %v694 = vld [vmem:[%s578 + $0x1c4] sm:%s571]
                  %695 = vst [vmem:[%s579 + $0xe4] sm:%s571] %v694
                  %v696 = vld [vmem:[%s578 + $0x1d0] sm:%s571]
                  %697 = vst [vmem:[%s579 + $0xe8] sm:%s571] %v696
                  %v698 = vld [vmem:[%s578 + $0x1d4] sm:%s571]
                  %699 = vst [vmem:[%s579 + $0xec] sm:%s571] %v698
                  %v700 = vld [vmem:[%s578 + $0x1e0] sm:%s571]
                  %701 = vst [vmem:[%s579 + $0xf0] sm:%s571] %v700
                  %v702 = vld [vmem:[%s578 + $0x1e4] sm:%s571]
                  %703 = vst [vmem:[%s579 + $0xf4] sm:%s571] %v702
                  %v704 = vld [vmem:[%s578 + $0x1f0] sm:%s571]
                  %705 = vst [vmem:[%s579 + $0xf8] sm:%s571] %v704
                  %v706 = vld [vmem:[%s578 + $0x1f4] sm:%s571]
                  %707 = vst [vmem:[%s579 + $0xfc] sm:%s571] %v706
                  %v708 = vld [vmem:[%s578 + $0x200] sm:%s571]
                  %709 = vst [vmem:[%s579 + $0x100] sm:%s571] %v708
                  %v710 = vld [vmem:[%s578 + $0x204] sm:%s571]
                  %711 = vst [vmem:[%s579 + $0x104] sm:%s571] %v710
                  %v712 = vld [vmem:[%s578 + $0x210] sm:%s571]
                  %713 = vst [vmem:[%s579 + $0x108] sm:%s571] %v712
                  %v714 = vld [vmem:[%s578 + $0x214] sm:%s571]
                  %715 = vst [vmem:[%s579 + $0x10c] sm:%s571] %v714
                  %v716 = vld [vmem:[%s578 + $0x220] sm:%s571]
                  %717 = vst [vmem:[%s579 + $0x110] sm:%s571] %v716
                  %v718 = vld [vmem:[%s578 + $0x224] sm:%s571]
                  %719 = vst [vmem:[%s579 + $0x114] sm:%s571] %v718
                  %v720 = vld [vmem:[%s578 + $0x230] sm:%s571]
                  %721 = vst [vmem:[%s579 + $0x118] sm:%s571] %v720
                  %v722 = vld [vmem:[%s578 + $0x234] sm:%s571]
                  %723 = vst [vmem:[%s579 + $0x11c] sm:%s571] %v722
                  %v724 = vld [vmem:[%s578 + $0x240] sm:%s571]
                  %725 = vst [vmem:[%s579 + $0x120] sm:%s571] %v724
                  %v726 = vld [vmem:[%s578 + $0x244] sm:%s571]
                  %727 = vst [vmem:[%s579 + $0x124] sm:%s571] %v726
                  %v728 = vld [vmem:[%s578 + $0x250] sm:%s571]
                  %729 = vst [vmem:[%s579 + $0x128] sm:%s571] %v728
                  %v730 = vld [vmem:[%s578 + $0x254] sm:%s571]
                  %731 = vst [vmem:[%s579 + $0x12c] sm:%s571] %v730
                  %v732 = vld [vmem:[%s578 + $0x260] sm:%s571]
                  %733 = vst [vmem:[%s579 + $0x130] sm:%s571] %v732
                  %v734 = vld [vmem:[%s578 + $0x264] sm:%s571]
                  %735 = vst [vmem:[%s579 + $0x134] sm:%s571] %v734
                  %v736 = vld [vmem:[%s578 + $0x270] sm:%s571]
                  %737 = vst [vmem:[%s579 + $0x138] sm:%s571] %v736
                  %v738 = vld [vmem:[%s578 + $0x274] sm:%s571]
                  %739 = vst [vmem:[%s579 + $0x13c] sm:%s571] %v738
                  %v740 = vld [vmem:[%s578 + $0x280] sm:%s571]
                  %741 = vst [vmem:[%s579 + $0x140] sm:%s571] %v740
                  %v742 = vld [vmem:[%s578 + $0x284] sm:%s571]
                  %743 = vst [vmem:[%s579 + $0x144] sm:%s571] %v742
                  %v744 = vld [vmem:[%s578 + $0x290] sm:%s571]
                  %745 = vst [vmem:[%s579 + $0x148] sm:%s571] %v744
                  %v746 = vld [vmem:[%s578 + $0x294] sm:%s571]
                  %747 = vst [vmem:[%s579 + $0x14c] sm:%s571] %v746
                  %v748 = vld [vmem:[%s578 + $0x2a0] sm:%s571]
                  %749 = vst [vmem:[%s579 + $0x150] sm:%s571] %v748
                  %v750 = vld [vmem:[%s578 + $0x2a4] sm:%s571]
                  %751 = vst [vmem:[%s579 + $0x154] sm:%s571] %v750
                  %v752 = vld [vmem:[%s578 + $0x2b0] sm:%s571]
                  %753 = vst [vmem:[%s579 + $0x158] sm:%s571] %v752
                  %v754 = vld [vmem:[%s578 + $0x2b4] sm:%s571]
                  %755 = vst [vmem:[%s579 + $0x15c] sm:%s571] %v754
                  %v756 = vld [vmem:[%s578 + $0x2c0] sm:%s571]
                  %757 = vst [vmem:[%s579 + $0x160] sm:%s571] %v756
                  %v758 = vld [vmem:[%s578 + $0x2c4] sm:%s571]
                  %759 = vst [vmem:[%s579 + $0x164] sm:%s571] %v758
                  %v760 = vld [vmem:[%s578 + $0x2d0] sm:%s571]
                  %761 = vst [vmem:[%s579 + $0x168] sm:%s571] %v760
                  %v762 = vld [vmem:[%s578 + $0x2d4] sm:%s571]
                  %763 = vst [vmem:[%s579 + $0x16c] sm:%s571] %v762
                  %v764 = vld [vmem:[%s578 + $0x2e0] sm:%s571]
                  %765 = vst [vmem:[%s579 + $0x170] sm:%s571] %v764
                  %v766 = vld [vmem:[%s578 + $0x2e4] sm:%s571]
                  %767 = vst [vmem:[%s579 + $0x174] sm:%s571] %v766
                  %v768 = vld [vmem:[%s578 + $0x2f0] sm:%s571]
                  %769 = vst [vmem:[%s579 + $0x178] sm:%s571] %v768
                  %v770 = vld [vmem:[%s578 + $0x2f4] sm:%s571]
                  %771 = vst [vmem:[%s579 + $0x17c] sm:%s571] %v770
                  %v772 = vld [vmem:[%s578 + $0x300] sm:%s571]
                  %773 = vst [vmem:[%s579 + $0x180] sm:%s571] %v772
                  %v774 = vld [vmem:[%s578 + $0x304] sm:%s571]
                  %775 = vst [vmem:[%s579 + $0x184] sm:%s571] %v774
                  %v776 = vld [vmem:[%s578 + $0x310] sm:%s571]
                  %777 = vst [vmem:[%s579 + $0x188] sm:%s571] %v776
                  %v778 = vld [vmem:[%s578 + $0x314] sm:%s571]
                  %779 = vst [vmem:[%s579 + $0x18c] sm:%s571] %v778
                  %v780 = vld [vmem:[%s578 + $0x320] sm:%s571]
                  %781 = vst [vmem:[%s579 + $0x190] sm:%s571] %v780
                  %v782 = vld [vmem:[%s578 + $0x324] sm:%s571]
                  %783 = vst [vmem:[%s579 + $0x194] sm:%s571] %v782
                  %v784 = vld [vmem:[%s578 + $0x330] sm:%s571]
                  %785 = vst [vmem:[%s579 + $0x198] sm:%s571] %v784
                  %v786 = vld [vmem:[%s578 + $0x334] sm:%s571]
                  %787 = vst [vmem:[%s579 + $0x19c] sm:%s571] %v786
                  %v788 = vld [vmem:[%s578 + $0x340] sm:%s571]
                  %789 = vst [vmem:[%s579 + $0x1a0] sm:%s571] %v788
                  %v790 = vld [vmem:[%s578 + $0x344] sm:%s571]
                  %791 = vst [vmem:[%s579 + $0x1a4] sm:%s571] %v790
                  %v792 = vld [vmem:[%s578 + $0x350] sm:%s571]
                  %793 = vst [vmem:[%s579 + $0x1a8] sm:%s571] %v792
                  %v794 = vld [vmem:[%s578 + $0x354] sm:%s571]
                  %795 = vst [vmem:[%s579 + $0x1ac] sm:%s571] %v794
                  %v796 = vld [vmem:[%s578 + $0x360] sm:%s571]
                  %797 = vst [vmem:[%s579 + $0x1b0] sm:%s571] %v796
                  %v798 = vld [vmem:[%s578 + $0x364] sm:%s571]
                  %799 = vst [vmem:[%s579 + $0x1b4] sm:%s571] %v798
                  %v800 = vld [vmem:[%s578 + $0x370] sm:%s571]
                  %801 = vst [vmem:[%s579 + $0x1b8] sm:%s571] %v800
                  %v802 = vld [vmem:[%s578 + $0x374] sm:%s571]
                  %803 = vst [vmem:[%s579 + $0x1bc] sm:%s571] %v802
                  %v804 = vld [vmem:[%s578 + $0x380] sm:%s571]
                  %805 = vst [vmem:[%s579 + $0x1c0] sm:%s571] %v804
                  %v806 = vld [vmem:[%s578 + $0x384] sm:%s571]
                  %807 = vst [vmem:[%s579 + $0x1c4] sm:%s571] %v806
                  %v808 = vld [vmem:[%s578 + $0x390] sm:%s571]
                  %809 = vst [vmem:[%s579 + $0x1c8] sm:%s571] %v808
                  %v810 = vld [vmem:[%s578 + $0x394] sm:%s571]
                  %811 = vst [vmem:[%s579 + $0x1cc] sm:%s571] %v810
                  %v812 = vld [vmem:[%s578 + $0x3a0] sm:%s571]
                  %813 = vst [vmem:[%s579 + $0x1d0] sm:%s571] %v812
                  %v814 = vld [vmem:[%s578 + $0x3a4] sm:%s571]
                  %815 = vst [vmem:[%s579 + $0x1d4] sm:%s571] %v814
                  %v816 = vld [vmem:[%s578 + $0x3b0] sm:%s571]
                  %817 = vst [vmem:[%s579 + $0x1d8] sm:%s571] %v816
                  %v818 = vld [vmem:[%s578 + $0x3b4] sm:%s571]
                  %819 = vst [vmem:[%s579 + $0x1dc] sm:%s571] %v818
                  %v820 = vld [vmem:[%s578 + $0x3c0] sm:%s571]
                  %821 = vst [vmem:[%s579 + $0x1e0] sm:%s571] %v820
                  %v822 = vld [vmem:[%s578 + $0x3c4] sm:%s571]
                  %823 = vst [vmem:[%s579 + $0x1e4] sm:%s571] %v822
                  %v824 = vld [vmem:[%s578 + $0x3d0] sm:%s571]
                  %825 = vst [vmem:[%s579 + $0x1e8] sm:%s571] %v824
                  %v826 = vld [vmem:[%s578 + $0x3d4] sm:%s571]
                  %827 = vst [vmem:[%s579 + $0x1ec] sm:%s571] %v826
                  %v828 = vld [vmem:[%s578 + $0x3e0] sm:%s571]
                  %829 = vst [vmem:[%s579 + $0x1f0] sm:%s571] %v828
                  %v830 = vld [vmem:[%s578 + $0x3e4] sm:%s571]
                  %831 = vst [vmem:[%s579 + $0x1f4] sm:%s571] %v830
                  %v832 = vld [vmem:[%s578 + $0x3f0] sm:%s571]
                  %833 = vst [vmem:[%s579 + $0x1f8] sm:%s571] %v832
                  %v834 = vld [vmem:[%s578 + $0x3f4] sm:%s571]
                  %835 = vst [vmem:[%s579 + $0x1fc] sm:%s571] %v834
                $region87: #{cifar_classifier_forward.1} parent=74 // loop_footer
                  %s577 = sadd.s32 1, %s573
                $region88: #{cifar_classifier_forward.1} parent=74 // loop_footer_branch
                  %572 = sbr.rel target = $region84
                $region89: #{cifar_classifier_forward.1} parent=74 // loop_exit
                  _
              $region75: #{cifar_classifier_forward.1} parent=59 // pred_fallthru
                _
            $region60: #{cifar_classifier_forward.1} parent=55 // pred_fallthru
              _
            // Predicated region
            $region61: #{cifar_classifier_forward.1} parent=55 // pred_check
              _
            $region62: #{cifar_classifier_forward.1} parent=55 // pred_check_branch
              %293 = sbr.rel (0) target = $region64
            $region63: #{cifar_classifier_forward.1} parent=55 // pred_region
              %s295 = ssub.s32 16, 1
              loop: start=0, step=1, limit=1
              $region65: #{cifar_classifier_forward.1} parent=63 // loop_pre_header
                _
              $region66: #{cifar_classifier_forward.1} parent=63 // loop_header
                %s297 = sphi 0, %s301
                %p298 = scmp.ge.s32.totalorder %s297, 1
                %s302 = sphi %s287, %s287
                %s303 = sphi %s284, %s284
              $region67: #{cifar_classifier_forward.1} parent=63 // loop_header_branch
                %300 = sbr.rel (%p298) target = $region71
              $region68: #{cifar_classifier_forward.1} parent=63 // loop_body
                %v304 = vld [vmem:[%s302] sm:%s295]
                %305 = vst [vmem:[%s303] sm:%s295] %v304
                %v306 = vld [vmem:[%s302 + $0x4] sm:%s295]
                %307 = vst [vmem:[%s303 + $0x4] sm:%s295] %v306
                %v308 = vld [vmem:[%s302 + $0x10] sm:%s295]
                %309 = vst [vmem:[%s303 + $0x8] sm:%s295] %v308
                %v310 = vld [vmem:[%s302 + $0x14] sm:%s295]
                %311 = vst [vmem:[%s303 + $0xc] sm:%s295] %v310
                %v312 = vld [vmem:[%s302 + $0x20] sm:%s295]
                %313 = vst [vmem:[%s303 + $0x10] sm:%s295] %v312
                %v314 = vld [vmem:[%s302 + $0x24] sm:%s295]
                %315 = vst [vmem:[%s303 + $0x14] sm:%s295] %v314
                %v316 = vld [vmem:[%s302 + $0x30] sm:%s295]
                %317 = vst [vmem:[%s303 + $0x18] sm:%s295] %v316
                %v318 = vld [vmem:[%s302 + $0x34] sm:%s295]
                %319 = vst [vmem:[%s303 + $0x1c] sm:%s295] %v318
                %v320 = vld [vmem:[%s302 + $0x40] sm:%s295]
                %321 = vst [vmem:[%s303 + $0x20] sm:%s295] %v320
                %v322 = vld [vmem:[%s302 + $0x44] sm:%s295]
                %323 = vst [vmem:[%s303 + $0x24] sm:%s295] %v322
                %v324 = vld [vmem:[%s302 + $0x50] sm:%s295]
                %325 = vst [vmem:[%s303 + $0x28] sm:%s295] %v324
                %v326 = vld [vmem:[%s302 + $0x54] sm:%s295]
                %327 = vst [vmem:[%s303 + $0x2c] sm:%s295] %v326
                %v328 = vld [vmem:[%s302 + $0x60] sm:%s295]
                %329 = vst [vmem:[%s303 + $0x30] sm:%s295] %v328
                %v330 = vld [vmem:[%s302 + $0x64] sm:%s295]
                %331 = vst [vmem:[%s303 + $0x34] sm:%s295] %v330
                %v332 = vld [vmem:[%s302 + $0x70] sm:%s295]
                %333 = vst [vmem:[%s303 + $0x38] sm:%s295] %v332
                %v334 = vld [vmem:[%s302 + $0x74] sm:%s295]
                %335 = vst [vmem:[%s303 + $0x3c] sm:%s295] %v334
                %v336 = vld [vmem:[%s302 + $0x80] sm:%s295]
                %337 = vst [vmem:[%s303 + $0x40] sm:%s295] %v336
                %v338 = vld [vmem:[%s302 + $0x84] sm:%s295]
                %339 = vst [vmem:[%s303 + $0x44] sm:%s295] %v338
                %v340 = vld [vmem:[%s302 + $0x90] sm:%s295]
                %341 = vst [vmem:[%s303 + $0x48] sm:%s295] %v340
                %v342 = vld [vmem:[%s302 + $0x94] sm:%s295]
                %343 = vst [vmem:[%s303 + $0x4c] sm:%s295] %v342
                %v344 = vld [vmem:[%s302 + $0xa0] sm:%s295]
                %345 = vst [vmem:[%s303 + $0x50] sm:%s295] %v344
                %v346 = vld [vmem:[%s302 + $0xa4] sm:%s295]
                %347 = vst [vmem:[%s303 + $0x54] sm:%s295] %v346
                %v348 = vld [vmem:[%s302 + $0xb0] sm:%s295]
                %349 = vst [vmem:[%s303 + $0x58] sm:%s295] %v348
                %v350 = vld [vmem:[%s302 + $0xb4] sm:%s295]
                %351 = vst [vmem:[%s303 + $0x5c] sm:%s295] %v350
                %v352 = vld [vmem:[%s302 + $0xc0] sm:%s295]
                %353 = vst [vmem:[%s303 + $0x60] sm:%s295] %v352
                %v354 = vld [vmem:[%s302 + $0xc4] sm:%s295]
                %355 = vst [vmem:[%s303 + $0x64] sm:%s295] %v354
                %v356 = vld [vmem:[%s302 + $0xd0] sm:%s295]
                %357 = vst [vmem:[%s303 + $0x68] sm:%s295] %v356
                %v358 = vld [vmem:[%s302 + $0xd4] sm:%s295]
                %359 = vst [vmem:[%s303 + $0x6c] sm:%s295] %v358
                %v360 = vld [vmem:[%s302 + $0xe0] sm:%s295]
                %361 = vst [vmem:[%s303 + $0x70] sm:%s295] %v360
                %v362 = vld [vmem:[%s302 + $0xe4] sm:%s295]
                %363 = vst [vmem:[%s303 + $0x74] sm:%s295] %v362
                %v364 = vld [vmem:[%s302 + $0xf0] sm:%s295]
                %365 = vst [vmem:[%s303 + $0x78] sm:%s295] %v364
                %v366 = vld [vmem:[%s302 + $0xf4] sm:%s295]
                %367 = vst [vmem:[%s303 + $0x7c] sm:%s295] %v366
                %v368 = vld [vmem:[%s302 + $0x100] sm:%s295]
                %369 = vst [vmem:[%s303 + $0x80] sm:%s295] %v368
                %v370 = vld [vmem:[%s302 + $0x104] sm:%s295]
                %371 = vst [vmem:[%s303 + $0x84] sm:%s295] %v370
                %v372 = vld [vmem:[%s302 + $0x110] sm:%s295]
                %373 = vst [vmem:[%s303 + $0x88] sm:%s295] %v372
                %v374 = vld [vmem:[%s302 + $0x114] sm:%s295]
                %375 = vst [vmem:[%s303 + $0x8c] sm:%s295] %v374
                %v376 = vld [vmem:[%s302 + $0x120] sm:%s295]
                %377 = vst [vmem:[%s303 + $0x90] sm:%s295] %v376
                %v378 = vld [vmem:[%s302 + $0x124] sm:%s295]
                %379 = vst [vmem:[%s303 + $0x94] sm:%s295] %v378
                %v380 = vld [vmem:[%s302 + $0x130] sm:%s295]
                %381 = vst [vmem:[%s303 + $0x98] sm:%s295] %v380
                %v382 = vld [vmem:[%s302 + $0x134] sm:%s295]
                %383 = vst [vmem:[%s303 + $0x9c] sm:%s295] %v382
                %v384 = vld [vmem:[%s302 + $0x140] sm:%s295]
                %385 = vst [vmem:[%s303 + $0xa0] sm:%s295] %v384
                %v386 = vld [vmem:[%s302 + $0x144] sm:%s295]
                %387 = vst [vmem:[%s303 + $0xa4] sm:%s295] %v386
                %v388 = vld [vmem:[%s302 + $0x150] sm:%s295]
                %389 = vst [vmem:[%s303 + $0xa8] sm:%s295] %v388
                %v390 = vld [vmem:[%s302 + $0x154] sm:%s295]
                %391 = vst [vmem:[%s303 + $0xac] sm:%s295] %v390
                %v392 = vld [vmem:[%s302 + $0x160] sm:%s295]
                %393 = vst [vmem:[%s303 + $0xb0] sm:%s295] %v392
                %v394 = vld [vmem:[%s302 + $0x164] sm:%s295]
                %395 = vst [vmem:[%s303 + $0xb4] sm:%s295] %v394
                %v396 = vld [vmem:[%s302 + $0x170] sm:%s295]
                %397 = vst [vmem:[%s303 + $0xb8] sm:%s295] %v396
                %v398 = vld [vmem:[%s302 + $0x174] sm:%s295]
                %399 = vst [vmem:[%s303 + $0xbc] sm:%s295] %v398
                %v400 = vld [vmem:[%s302 + $0x180] sm:%s295]
                %401 = vst [vmem:[%s303 + $0xc0] sm:%s295] %v400
                %v402 = vld [vmem:[%s302 + $0x184] sm:%s295]
                %403 = vst [vmem:[%s303 + $0xc4] sm:%s295] %v402
                %v404 = vld [vmem:[%s302 + $0x190] sm:%s295]
                %405 = vst [vmem:[%s303 + $0xc8] sm:%s295] %v404
                %v406 = vld [vmem:[%s302 + $0x194] sm:%s295]
                %407 = vst [vmem:[%s303 + $0xcc] sm:%s295] %v406
                %v408 = vld [vmem:[%s302 + $0x1a0] sm:%s295]
                %409 = vst [vmem:[%s303 + $0xd0] sm:%s295] %v408
                %v410 = vld [vmem:[%s302 + $0x1a4] sm:%s295]
                %411 = vst [vmem:[%s303 + $0xd4] sm:%s295] %v410
                %v412 = vld [vmem:[%s302 + $0x1b0] sm:%s295]
                %413 = vst [vmem:[%s303 + $0xd8] sm:%s295] %v412
                %v414 = vld [vmem:[%s302 + $0x1b4] sm:%s295]
                %415 = vst [vmem:[%s303 + $0xdc] sm:%s295] %v414
                %v416 = vld [vmem:[%s302 + $0x1c0] sm:%s295]
                %417 = vst [vmem:[%s303 + $0xe0] sm:%s295] %v416
                %v418 = vld [vmem:[%s302 + $0x1c4] sm:%s295]
                %419 = vst [vmem:[%s303 + $0xe4] sm:%s295] %v418
                %v420 = vld [vmem:[%s302 + $0x1d0] sm:%s295]
                %421 = vst [vmem:[%s303 + $0xe8] sm:%s295] %v420
                %v422 = vld [vmem:[%s302 + $0x1d4] sm:%s295]
                %423 = vst [vmem:[%s303 + $0xec] sm:%s295] %v422
                %v424 = vld [vmem:[%s302 + $0x1e0] sm:%s295]
                %425 = vst [vmem:[%s303 + $0xf0] sm:%s295] %v424
                %v426 = vld [vmem:[%s302 + $0x1e4] sm:%s295]
                %427 = vst [vmem:[%s303 + $0xf4] sm:%s295] %v426
                %v428 = vld [vmem:[%s302 + $0x1f0] sm:%s295]
                %429 = vst [vmem:[%s303 + $0xf8] sm:%s295] %v428
                %v430 = vld [vmem:[%s302 + $0x1f4] sm:%s295]
                %431 = vst [vmem:[%s303 + $0xfc] sm:%s295] %v430
                %v432 = vld [vmem:[%s302 + $0x200] sm:%s295]
                %433 = vst [vmem:[%s303 + $0x100] sm:%s295] %v432
                %v434 = vld [vmem:[%s302 + $0x204] sm:%s295]
                %435 = vst [vmem:[%s303 + $0x104] sm:%s295] %v434
                %v436 = vld [vmem:[%s302 + $0x210] sm:%s295]
                %437 = vst [vmem:[%s303 + $0x108] sm:%s295] %v436
                %v438 = vld [vmem:[%s302 + $0x214] sm:%s295]
                %439 = vst [vmem:[%s303 + $0x10c] sm:%s295] %v438
                %v440 = vld [vmem:[%s302 + $0x220] sm:%s295]
                %441 = vst [vmem:[%s303 + $0x110] sm:%s295] %v440
                %v442 = vld [vmem:[%s302 + $0x224] sm:%s295]
                %443 = vst [vmem:[%s303 + $0x114] sm:%s295] %v442
                %v444 = vld [vmem:[%s302 + $0x230] sm:%s295]
                %445 = vst [vmem:[%s303 + $0x118] sm:%s295] %v444
                %v446 = vld [vmem:[%s302 + $0x234] sm:%s295]
                %447 = vst [vmem:[%s303 + $0x11c] sm:%s295] %v446
                %v448 = vld [vmem:[%s302 + $0x240] sm:%s295]
                %449 = vst [vmem:[%s303 + $0x120] sm:%s295] %v448
                %v450 = vld [vmem:[%s302 + $0x244] sm:%s295]
                %451 = vst [vmem:[%s303 + $0x124] sm:%s295] %v450
                %v452 = vld [vmem:[%s302 + $0x250] sm:%s295]
                %453 = vst [vmem:[%s303 + $0x128] sm:%s295] %v452
                %v454 = vld [vmem:[%s302 + $0x254] sm:%s295]
                %455 = vst [vmem:[%s303 + $0x12c] sm:%s295] %v454
                %v456 = vld [vmem:[%s302 + $0x260] sm:%s295]
                %457 = vst [vmem:[%s303 + $0x130] sm:%s295] %v456
                %v458 = vld [vmem:[%s302 + $0x264] sm:%s295]
                %459 = vst [vmem:[%s303 + $0x134] sm:%s295] %v458
                %v460 = vld [vmem:[%s302 + $0x270] sm:%s295]
                %461 = vst [vmem:[%s303 + $0x138] sm:%s295] %v460
                %v462 = vld [vmem:[%s302 + $0x274] sm:%s295]
                %463 = vst [vmem:[%s303 + $0x13c] sm:%s295] %v462
                %v464 = vld [vmem:[%s302 + $0x280] sm:%s295]
                %465 = vst [vmem:[%s303 + $0x140] sm:%s295] %v464
                %v466 = vld [vmem:[%s302 + $0x284] sm:%s295]
                %467 = vst [vmem:[%s303 + $0x144] sm:%s295] %v466
                %v468 = vld [vmem:[%s302 + $0x290] sm:%s295]
                %469 = vst [vmem:[%s303 + $0x148] sm:%s295] %v468
                %v470 = vld [vmem:[%s302 + $0x294] sm:%s295]
                %471 = vst [vmem:[%s303 + $0x14c] sm:%s295] %v470
                %v472 = vld [vmem:[%s302 + $0x2a0] sm:%s295]
                %473 = vst [vmem:[%s303 + $0x150] sm:%s295] %v472
                %v474 = vld [vmem:[%s302 + $0x2a4] sm:%s295]
                %475 = vst [vmem:[%s303 + $0x154] sm:%s295] %v474
                %v476 = vld [vmem:[%s302 + $0x2b0] sm:%s295]
                %477 = vst [vmem:[%s303 + $0x158] sm:%s295] %v476
                %v478 = vld [vmem:[%s302 + $0x2b4] sm:%s295]
                %479 = vst [vmem:[%s303 + $0x15c] sm:%s295] %v478
                %v480 = vld [vmem:[%s302 + $0x2c0] sm:%s295]
                %481 = vst [vmem:[%s303 + $0x160] sm:%s295] %v480
                %v482 = vld [vmem:[%s302 + $0x2c4] sm:%s295]
                %483 = vst [vmem:[%s303 + $0x164] sm:%s295] %v482
                %v484 = vld [vmem:[%s302 + $0x2d0] sm:%s295]
                %485 = vst [vmem:[%s303 + $0x168] sm:%s295] %v484
                %v486 = vld [vmem:[%s302 + $0x2d4] sm:%s295]
                %487 = vst [vmem:[%s303 + $0x16c] sm:%s295] %v486
                %v488 = vld [vmem:[%s302 + $0x2e0] sm:%s295]
                %489 = vst [vmem:[%s303 + $0x170] sm:%s295] %v488
                %v490 = vld [vmem:[%s302 + $0x2e4] sm:%s295]
                %491 = vst [vmem:[%s303 + $0x174] sm:%s295] %v490
                %v492 = vld [vmem:[%s302 + $0x2f0] sm:%s295]
                %493 = vst [vmem:[%s303 + $0x178] sm:%s295] %v492
                %v494 = vld [vmem:[%s302 + $0x2f4] sm:%s295]
                %495 = vst [vmem:[%s303 + $0x17c] sm:%s295] %v494
                %v496 = vld [vmem:[%s302 + $0x300] sm:%s295]
                %497 = vst [vmem:[%s303 + $0x180] sm:%s295] %v496
                %v498 = vld [vmem:[%s302 + $0x304] sm:%s295]
                %499 = vst [vmem:[%s303 + $0x184] sm:%s295] %v498
                %v500 = vld [vmem:[%s302 + $0x310] sm:%s295]
                %501 = vst [vmem:[%s303 + $0x188] sm:%s295] %v500
                %v502 = vld [vmem:[%s302 + $0x314] sm:%s295]
                %503 = vst [vmem:[%s303 + $0x18c] sm:%s295] %v502
                %v504 = vld [vmem:[%s302 + $0x320] sm:%s295]
                %505 = vst [vmem:[%s303 + $0x190] sm:%s295] %v504
                %v506 = vld [vmem:[%s302 + $0x324] sm:%s295]
                %507 = vst [vmem:[%s303 + $0x194] sm:%s295] %v506
                %v508 = vld [vmem:[%s302 + $0x330] sm:%s295]
                %509 = vst [vmem:[%s303 + $0x198] sm:%s295] %v508
                %v510 = vld [vmem:[%s302 + $0x334] sm:%s295]
                %511 = vst [vmem:[%s303 + $0x19c] sm:%s295] %v510
                %v512 = vld [vmem:[%s302 + $0x340] sm:%s295]
                %513 = vst [vmem:[%s303 + $0x1a0] sm:%s295] %v512
                %v514 = vld [vmem:[%s302 + $0x344] sm:%s295]
                %515 = vst [vmem:[%s303 + $0x1a4] sm:%s295] %v514
                %v516 = vld [vmem:[%s302 + $0x350] sm:%s295]
                %517 = vst [vmem:[%s303 + $0x1a8] sm:%s295] %v516
                %v518 = vld [vmem:[%s302 + $0x354] sm:%s295]
                %519 = vst [vmem:[%s303 + $0x1ac] sm:%s295] %v518
                %v520 = vld [vmem:[%s302 + $0x360] sm:%s295]
                %521 = vst [vmem:[%s303 + $0x1b0] sm:%s295] %v520
                %v522 = vld [vmem:[%s302 + $0x364] sm:%s295]
                %523 = vst [vmem:[%s303 + $0x1b4] sm:%s295] %v522
                %v524 = vld [vmem:[%s302 + $0x370] sm:%s295]
                %525 = vst [vmem:[%s303 + $0x1b8] sm:%s295] %v524
                %v526 = vld [vmem:[%s302 + $0x374] sm:%s295]
                %527 = vst [vmem:[%s303 + $0x1bc] sm:%s295] %v526
                %v528 = vld [vmem:[%s302 + $0x380] sm:%s295]
                %529 = vst [vmem:[%s303 + $0x1c0] sm:%s295] %v528
                %v530 = vld [vmem:[%s302 + $0x384] sm:%s295]
                %531 = vst [vmem:[%s303 + $0x1c4] sm:%s295] %v530
                %v532 = vld [vmem:[%s302 + $0x390] sm:%s295]
                %533 = vst [vmem:[%s303 + $0x1c8] sm:%s295] %v532
                %v534 = vld [vmem:[%s302 + $0x394] sm:%s295]
                %535 = vst [vmem:[%s303 + $0x1cc] sm:%s295] %v534
                %v536 = vld [vmem:[%s302 + $0x3a0] sm:%s295]
                %537 = vst [vmem:[%s303 + $0x1d0] sm:%s295] %v536
                %v538 = vld [vmem:[%s302 + $0x3a4] sm:%s295]
                %539 = vst [vmem:[%s303 + $0x1d4] sm:%s295] %v538
                %v540 = vld [vmem:[%s302 + $0x3b0] sm:%s295]
                %541 = vst [vmem:[%s303 + $0x1d8] sm:%s295] %v540
                %v542 = vld [vmem:[%s302 + $0x3b4] sm:%s295]
                %543 = vst [vmem:[%s303 + $0x1dc] sm:%s295] %v542
                %v544 = vld [vmem:[%s302 + $0x3c0] sm:%s295]
                %545 = vst [vmem:[%s303 + $0x1e0] sm:%s295] %v544
                %v546 = vld [vmem:[%s302 + $0x3c4] sm:%s295]
                %547 = vst [vmem:[%s303 + $0x1e4] sm:%s295] %v546
                %v548 = vld [vmem:[%s302 + $0x3d0] sm:%s295]
                %549 = vst [vmem:[%s303 + $0x1e8] sm:%s295] %v548
                %v550 = vld [vmem:[%s302 + $0x3d4] sm:%s295]
                %551 = vst [vmem:[%s303 + $0x1ec] sm:%s295] %v550
                %v552 = vld [vmem:[%s302 + $0x3e0] sm:%s295]
                %553 = vst [vmem:[%s303 + $0x1f0] sm:%s295] %v552
                %v554 = vld [vmem:[%s302 + $0x3e4] sm:%s295]
                %555 = vst [vmem:[%s303 + $0x1f4] sm:%s295] %v554
                %v556 = vld [vmem:[%s302 + $0x3f0] sm:%s295]
                %557 = vst [vmem:[%s303 + $0x1f8] sm:%s295] %v556
                %v558 = vld [vmem:[%s302 + $0x3f4] sm:%s295]
                %559 = vst [vmem:[%s303 + $0x1fc] sm:%s295] %v558
              $region69: #{cifar_classifier_forward.1} parent=63 // loop_footer
                %s301 = sadd.s32 1, %s297
              $region70: #{cifar_classifier_forward.1} parent=63 // loop_footer_branch
                %296 = sbr.rel target = $region66
              $region71: #{cifar_classifier_forward.1} parent=63 // loop_exit
                _
            $region64: #{cifar_classifier_forward.1} parent=55 // pred_fallthru
              _
          $region56: #{cifar_classifier_forward.1} parent=51 // pred_fallthru
            _
          %836 = vnop
        $region52: #{cifar_classifier_forward.1} parent=47 // pred_fallthru
          _
      $region48: #{cifar_classifier_forward.1} parent=5 // pred_fallthru
        _
      %p837 = scmp.le.s32.totalorder 1, %s15
      %p838 = scmp.lt.s32.totalorder %s15, 3
      %p839 = pnand %p837, %p838
      %p840 = pneg %p839
      // Predicated region
      $region90: #{cifar_classifier_forward.1} parent=5 // pred_check
        _
      $region91: #{cifar_classifier_forward.1} parent=5 // pred_check_branch
        %842 = sbr.rel (%p839) target = $region93
      $region92: #{cifar_classifier_forward.1} parent=5 // pred_region
        %s843 = ssub.s32 %s15, 1
        %s844 = sand.u32 %s28, 1
        %s845 = sand.u32 %s28, 1
        %s846 = smul.addr %s845, 512
        %s847 = scalar_lea.vmem [#allocation2], %s846
        // Predicated region
        $region94: #{cifar_classifier_forward.1} parent=92 // pred_check
          %p848 = pneg %p41
        $region95: #{cifar_classifier_forward.1} parent=92 // pred_check_branch
          %850 = sbr.rel (%p848) target = $region97
        $region96: #{cifar_classifier_forward.1} parent=92 // pred_region
          _
        $region97: #{cifar_classifier_forward.1} parent=92 // pred_fallthru
          _
        %s851 = sand.u32 %s28, 1
        %s852 = sand.u32 %s28, 1
        %s853 = smul.addr %s852, 512
        %s854 = scalar_lea.vmem [#allocation2], %s853
        %p855 = pneg %p41
        %p856 = pneg %p38
        %p857 = pneg %p62
        %p858 = pneg %p59
        %p859 = pneg %p83
        %p860 = pneg %p80
        %p861 = pneg %p104
        %p862 = pneg %p101
        %p863 = pneg %p125
        %p864 = pneg %p122
        %p865 = pneg %p146
        %p866 = pneg %p143
        %p867 = pneg %p167
        %p868 = pneg %p164
        %p869 = pneg %p188
        %p870 = pneg %p185
        %p871 = pneg %p209
        %p872 = pneg %p206
        %p873 = pneg %p235
        %p874 = pneg %p232
        %s875 = smul.u32 2, %s20
        %p876 = scmp.lt.s32.totalorder %s875, 3
        %s877 = scalar_select %p876, %s875, 3
        %s878 = smul.addr %s877, 8
        %s879 = scalar_lea.vmem %s9, %s878
        %s880 = smul.u32 2, %s20
        %s881 = smul.u32 2, %s20
        %p882 = scmp.lt.s32.totalorder %s881, 3
        %s883 = scalar_select %p882, %s881, 3
        %s884 = smul.addr %s883, 8
        %s885 = scalar_lea.vmem %s9, %s884
        %s886 = smul.u32 2, %s20
        %v888 = vld [vmem:[%s847] sm:$0xf]
        %v889 = vld [vmem:[%s847 + $0x4] sm:$0xf]
        %v890 = vld [vmem:[%s847 + $0x8] sm:$0xf]
        %v891 = vld [vmem:[%s847 + $0xc] sm:$0xf]
        %v892 = vld [vmem:[%s847 + $0x10] sm:$0xf]
        %v893 = vld [vmem:[%s847 + $0x14] sm:$0xf]
        %v894 = vld [vmem:[%s847 + $0x18] sm:$0xf]
        %v895 = vld [vmem:[%s847 + $0x1c] sm:$0xf]
        %v896 = vld [vmem:[%s847 + $0x20] sm:$0xf]
        %v897 = vld [vmem:[%s847 + $0x24] sm:$0xf]
        %v898 = vld [vmem:[%s847 + $0x28] sm:$0xf]
        %v899 = vld [vmem:[%s847 + $0x2c] sm:$0xf]
        %v900 = vld [vmem:[%s847 + $0x30] sm:$0xf]
        %v901 = vld [vmem:[%s847 + $0x34] sm:$0xf]
        %v902 = vld [vmem:[%s847 + $0x38] sm:$0xf]
        %v903 = vld [vmem:[%s847 + $0x3c] sm:$0xf]
        %v904 = vld [vmem:[%s847 + $0x40] sm:$0xf]
        %v905 = vld [vmem:[%s847 + $0x44] sm:$0xf]
        %v906 = vld [vmem:[%s847 + $0x48] sm:$0xf]
        %v907 = vld [vmem:[%s847 + $0x4c] sm:$0xf]
        %v908 = vld [vmem:[%s847 + $0x50] sm:$0xf]
        %v909 = vld [vmem:[%s847 + $0x54] sm:$0xf]
        %v910 = vld [vmem:[%s847 + $0x58] sm:$0xf]
        %v911 = vld [vmem:[%s847 + $0x5c] sm:$0xf]
        %v912 = vld [vmem:[%s847 + $0x60] sm:$0xf]
        %v913 = vld [vmem:[%s847 + $0x64] sm:$0xf]
        %v914 = vld [vmem:[%s847 + $0x68] sm:$0xf]
        %v915 = vld [vmem:[%s847 + $0x6c] sm:$0xf]
        %v916 = vld [vmem:[%s847 + $0x70] sm:$0xf]
        %v917 = vld [vmem:[%s847 + $0x74] sm:$0xf]
        %v918 = vld [vmem:[%s847 + $0x78] sm:$0xf]
        %v919 = vld [vmem:[%s847 + $0x7c] sm:$0xf]
        %v920 = vld [vmem:[%s847 + $0x80] sm:$0xf]
        %v921 = vld [vmem:[%s847 + $0x84] sm:$0xf]
        %v922 = vld [vmem:[%s847 + $0x88] sm:$0xf]
        %v923 = vld [vmem:[%s847 + $0x8c] sm:$0xf]
        %v924 = vld [vmem:[%s847 + $0x90] sm:$0xf]
        %v925 = vld [vmem:[%s847 + $0x94] sm:$0xf]
        %v926 = vld [vmem:[%s847 + $0x98] sm:$0xf]
        %v927 = vld [vmem:[%s847 + $0x9c] sm:$0xf]
        %v928 = vld [vmem:[%s847 + $0xa0] sm:$0xf]
        %v929 = vld [vmem:[%s847 + $0xa4] sm:$0xf]
        %v930 = vld [vmem:[%s847 + $0xa8] sm:$0xf]
        %v931 = vld [vmem:[%s847 + $0xac] sm:$0xf]
        %v932 = vld [vmem:[%s847 + $0xb0] sm:$0xf]
        %v933 = vld [vmem:[%s847 + $0xb4] sm:$0xf]
        %v934 = vld [vmem:[%s847 + $0xb8] sm:$0xf]
        %v935 = vld [vmem:[%s847 + $0xbc] sm:$0xf]
        %v936 = vld [vmem:[%s847 + $0xc0] sm:$0xf]
        %v937 = vld [vmem:[%s847 + $0xc4] sm:$0xf]
        %v938 = vld [vmem:[%s847 + $0xc8] sm:$0xf]
        %v939 = vld [vmem:[%s847 + $0xcc] sm:$0xf]
        %v940 = vld [vmem:[%s847 + $0xd0] sm:$0xf]
        %v941 = vld [vmem:[%s847 + $0xd4] sm:$0xf]
        %v942 = vld [vmem:[%s847 + $0xd8] sm:$0xf]
        %v943 = vld [vmem:[%s847 + $0xdc] sm:$0xf]
        %v944 = vld [vmem:[%s847 + $0xe0] sm:$0xf]
        %v945 = vld [vmem:[%s847 + $0xe4] sm:$0xf]
        %v946 = vld [vmem:[%s847 + $0xe8] sm:$0xf]
        %v947 = vld [vmem:[%s847 + $0xec] sm:$0xf]
        %v948 = vld [vmem:[%s847 + $0xf0] sm:$0xf]
        %v949 = vld [vmem:[%s847 + $0xf4] sm:$0xf]
        %v950 = vld [vmem:[%s847 + $0xf8] sm:$0xf]
        %v951 = vld [vmem:[%s847 + $0xfc] sm:$0xf]
        %v952 = vld [vmem:[%s847 + $0x100] sm:$0xf]
        %v953 = vld [vmem:[%s847 + $0x104] sm:$0xf]
        %v954 = vld [vmem:[%s847 + $0x108] sm:$0xf]
        %v955 = vld [vmem:[%s847 + $0x10c] sm:$0xf]
        %v956 = vld [vmem:[%s847 + $0x110] sm:$0xf]
        %v957 = vld [vmem:[%s847 + $0x114] sm:$0xf]
        %v958 = vld [vmem:[%s847 + $0x118] sm:$0xf]
        %v959 = vld [vmem:[%s847 + $0x11c] sm:$0xf]
        %v960 = vld [vmem:[%s847 + $0x120] sm:$0xf]
        %v961 = vld [vmem:[%s847 + $0x124] sm:$0xf]
        %v962 = vld [vmem:[%s847 + $0x128] sm:$0xf]
        %v963 = vld [vmem:[%s847 + $0x12c] sm:$0xf]
        %v964 = vld [vmem:[%s847 + $0x130] sm:$0xf]
        %v965 = vld [vmem:[%s847 + $0x134] sm:$0xf]
        %v966 = vld [vmem:[%s847 + $0x138] sm:$0xf]
        %v967 = vld [vmem:[%s847 + $0x13c] sm:$0xf]
        %v968 = vld [vmem:[%s847 + $0x140] sm:$0xf]
        %v969 = vld [vmem:[%s847 + $0x144] sm:$0xf]
        %v970 = vld [vmem:[%s847 + $0x148] sm:$0xf]
        %v971 = vld [vmem:[%s847 + $0x14c] sm:$0xf]
        %v972 = vld [vmem:[%s847 + $0x150] sm:$0xf]
        %v973 = vld [vmem:[%s847 + $0x154] sm:$0xf]
        %v974 = vld [vmem:[%s847 + $0x158] sm:$0xf]
        %v975 = vld [vmem:[%s847 + $0x15c] sm:$0xf]
        %v976 = vld [vmem:[%s847 + $0x160] sm:$0xf]
        %v977 = vld [vmem:[%s847 + $0x164] sm:$0xf]
        %v978 = vld [vmem:[%s847 + $0x168] sm:$0xf]
        %v979 = vld [vmem:[%s847 + $0x16c] sm:$0xf]
        %v980 = vld [vmem:[%s847 + $0x170] sm:$0xf]
        %v981 = vld [vmem:[%s847 + $0x174] sm:$0xf]
        %v982 = vld [vmem:[%s847 + $0x178] sm:$0xf]
        %v983 = vld [vmem:[%s847 + $0x17c] sm:$0xf]
        %v984 = vld [vmem:[%s847 + $0x180] sm:$0xf]
        %v985 = vld [vmem:[%s847 + $0x184] sm:$0xf]
        %v986 = vld [vmem:[%s847 + $0x188] sm:$0xf]
        %v987 = vld [vmem:[%s847 + $0x18c] sm:$0xf]
        %v988 = vld [vmem:[%s847 + $0x190] sm:$0xf]
        %v989 = vld [vmem:[%s847 + $0x194] sm:$0xf]
        %v990 = vld [vmem:[%s847 + $0x198] sm:$0xf]
        %v991 = vld [vmem:[%s847 + $0x19c] sm:$0xf]
        %v992 = vld [vmem:[%s847 + $0x1a0] sm:$0xf]
        %v993 = vld [vmem:[%s847 + $0x1a4] sm:$0xf]
        %v994 = vld [vmem:[%s847 + $0x1a8] sm:$0xf]
        %v995 = vld [vmem:[%s847 + $0x1ac] sm:$0xf]
        %v996 = vld [vmem:[%s847 + $0x1b0] sm:$0xf]
        %v997 = vld [vmem:[%s847 + $0x1b4] sm:$0xf]
        %v998 = vld [vmem:[%s847 + $0x1b8] sm:$0xf]
        %v999 = vld [vmem:[%s847 + $0x1bc] sm:$0xf]
        %v1000 = vld [vmem:[%s847 + $0x1c0] sm:$0xf]
        %v1001 = vld [vmem:[%s847 + $0x1c4] sm:$0xf]
        %v1002 = vld [vmem:[%s847 + $0x1c8] sm:$0xf]
        %v1003 = vld [vmem:[%s847 + $0x1cc] sm:$0xf]
        %v1004 = vld [vmem:[%s847 + $0x1d0] sm:$0xf]
        %v1005 = vld [vmem:[%s847 + $0x1d4] sm:$0xf]
        %v1006 = vld [vmem:[%s847 + $0x1d8] sm:$0xf]
        %v1007 = vld [vmem:[%s847 + $0x1dc] sm:$0xf]
        %v1008 = vld [vmem:[%s847 + $0x1e0] sm:$0xf]
        %v1009 = vld [vmem:[%s847 + $0x1e4] sm:$0xf]
        %v1010 = vld [vmem:[%s847 + $0x1e8] sm:$0xf]
        %v1011 = vld [vmem:[%s847 + $0x1ec] sm:$0xf]
        %v1012 = vld [vmem:[%s847 + $0x1f0] sm:$0xf]
        %v1013 = vld [vmem:[%s847 + $0x1f4] sm:$0xf]
        %v1014 = vld [vmem:[%s847 + $0x1f8] sm:$0xf]
        %v1015 = vld [vmem:[%s847 + $0x1fc] sm:$0xf]
        %v1016 = vld [vmem:[%s1] sm:$0xf]
        %v1017 = vld [vmem:[%s1 + $0x4] sm:$0xf]
        %v1018 = vld [vmem:[%s1 + $0x8] sm:$0xf]
        %v1019 = vld [vmem:[%s1 + $0xc] sm:$0xf]
        %v1020 = vld [vmem:[%s1 + $0x10] sm:$0xf]
        %v1021 = vld [vmem:[%s1 + $0x14] sm:$0xf]
        %v1022 = vld [vmem:[%s1 + $0x18] sm:$0xf]
        %v1023 = vld [vmem:[%s1 + $0x1c] sm:$0xf]
        %v1024 = vld [vmem:[%s1 + $0x20] sm:$0xf]
        %v1025 = vld [vmem:[%s1 + $0x24] sm:$0xf]
        %v1026 = vld [vmem:[%s1 + $0x28] sm:$0xf]
        %v1027 = vld [vmem:[%s1 + $0x2c] sm:$0xf]
        %v1028 = vld [vmem:[%s1 + $0x30] sm:$0xf]
        %v1029 = vld [vmem:[%s1 + $0x34] sm:$0x3]
        %v1158 = vunpack.c.l.b16 %v888
        %v1159 = vunpack.c.l.b16 %v889
        %v1160 = vunpack.c.l.b16 %v890
        %v1161 = vunpack.c.l.b16 %v891
        %v1162 = vunpack.c.l.b16 %v892
        %v1163 = vunpack.c.l.b16 %v893
        %v1164 = vunpack.c.l.b16 %v894
        %v1165 = vunpack.c.l.b16 %v895
        %v1166 = vunpack.c.l.b16 %v896
        %v1167 = vunpack.c.l.b16 %v897
        %v1168 = vunpack.c.l.b16 %v898
        %v1169 = vunpack.c.l.b16 %v899
        %v1170 = vunpack.c.l.b16 %v900
        %v1171 = vunpack.c.l.b16 %v901
        %v1172 = vunpack.c.l.b16 %v902
        %v1173 = vunpack.c.l.b16 %v903
        %v1174 = vunpack.c.l.b16 %v904
        %v1175 = vunpack.c.l.b16 %v905
        %v1176 = vunpack.c.l.b16 %v906
        %v1177 = vunpack.c.l.b16 %v907
        %v1178 = vunpack.c.l.b16 %v908
        %v1179 = vunpack.c.l.b16 %v909
        %v1180 = vunpack.c.l.b16 %v910
        %v1181 = vunpack.c.l.b16 %v911
        %v1182 = vunpack.c.l.b16 %v912
        %v1183 = vunpack.c.l.b16 %v913
        %v1184 = vunpack.c.l.b16 %v914
        %v1185 = vunpack.c.l.b16 %v915
        %v1186 = vunpack.c.l.b16 %v916
        %v1187 = vunpack.c.l.b16 %v917
        %v1188 = vunpack.c.l.b16 %v918
        %v1189 = vunpack.c.l.b16 %v919
        %v1190 = vunpack.c.l.b16 %v920
        %v1191 = vunpack.c.l.b16 %v921
        %v1192 = vunpack.c.l.b16 %v922
        %v1193 = vunpack.c.l.b16 %v923
        %v1194 = vunpack.c.l.b16 %v924
        %v1195 = vunpack.c.l.b16 %v925
        %v1196 = vunpack.c.l.b16 %v926
        %v1197 = vunpack.c.l.b16 %v927
        %v1198 = vunpack.c.l.b16 %v928
        %v1199 = vunpack.c.l.b16 %v929
        %v1200 = vunpack.c.l.b16 %v930
        %v1201 = vunpack.c.l.b16 %v931
        %v1202 = vunpack.c.l.b16 %v932
        %v1203 = vunpack.c.l.b16 %v933
        %v1204 = vunpack.c.l.b16 %v934
        %v1205 = vunpack.c.l.b16 %v935
        %v1206 = vunpack.c.l.b16 %v936
        %v1207 = vunpack.c.l.b16 %v937
        %v1208 = vunpack.c.l.b16 %v938
        %v1209 = vunpack.c.l.b16 %v939
        %v1210 = vunpack.c.l.b16 %v940
        %v1211 = vunpack.c.l.b16 %v941
        %v1212 = vunpack.c.l.b16 %v942
        %v1213 = vunpack.c.l.b16 %v943
        %v1214 = vunpack.c.l.b16 %v944
        %v1215 = vunpack.c.l.b16 %v945
        %v1216 = vunpack.c.l.b16 %v946
        %v1217 = vunpack.c.l.b16 %v947
        %v1218 = vunpack.c.l.b16 %v948
        %v1219 = vunpack.c.l.b16 %v949
        %v1220 = vunpack.c.l.b16 %v950
        %v1221 = vunpack.c.l.b16 %v951
        %v1222 = vunpack.c.l.b16 %v952
        %v1223 = vunpack.c.l.b16 %v953
        %v1224 = vunpack.c.l.b16 %v954
        %v1225 = vunpack.c.l.b16 %v955
        %v1226 = vunpack.c.l.b16 %v956
        %v1227 = vunpack.c.l.b16 %v957
        %v1228 = vunpack.c.l.b16 %v958
        %v1229 = vunpack.c.l.b16 %v959
        %v1230 = vunpack.c.l.b16 %v960
        %v1231 = vunpack.c.l.b16 %v961
        %v1232 = vunpack.c.l.b16 %v962
        %v1233 = vunpack.c.l.b16 %v963
        %v1234 = vunpack.c.l.b16 %v964
        %v1235 = vunpack.c.l.b16 %v965
        %v1236 = vunpack.c.l.b16 %v966
        %v1237 = vunpack.c.l.b16 %v967
        %v1238 = vunpack.c.l.b16 %v968
        %v1239 = vunpack.c.l.b16 %v969
        %v1240 = vunpack.c.l.b16 %v970
        %v1241 = vunpack.c.l.b16 %v971
        %v1242 = vunpack.c.l.b16 %v972
        %v1243 = vunpack.c.l.b16 %v973
        %v1244 = vunpack.c.l.b16 %v974
        %v1245 = vunpack.c.l.b16 %v975
        %v1246 = vunpack.c.l.b16 %v976
        %v1247 = vunpack.c.l.b16 %v977
        %v1248 = vunpack.c.l.b16 %v978
        %v1249 = vunpack.c.l.b16 %v979
        %v1250 = vunpack.c.l.b16 %v980
        %v1251 = vunpack.c.l.b16 %v981
        %v1252 = vunpack.c.l.b16 %v982
        %v1253 = vunpack.c.l.b16 %v983
        %v1254 = vunpack.c.l.b16 %v984
        %v1255 = vunpack.c.l.b16 %v985
        %v1256 = vunpack.c.l.b16 %v986
        %v1257 = vunpack.c.l.b16 %v987
        %v1258 = vunpack.c.l.b16 %v988
        %v1259 = vunpack.c.l.b16 %v989
        %v1260 = vunpack.c.l.b16 %v990
        %v1261 = vunpack.c.l.b16 %v991
        %v1262 = vunpack.c.l.b16 %v992
        %v1263 = vunpack.c.l.b16 %v993
        %v1264 = vunpack.c.l.b16 %v994
        %v1265 = vunpack.c.l.b16 %v995
        %v1266 = vunpack.c.l.b16 %v996
        %v1267 = vunpack.c.l.b16 %v997
        %v1268 = vunpack.c.l.b16 %v998
        %v1269 = vunpack.c.l.b16 %v999
        %v1270 = vunpack.c.l.b16 %v1000
        %v1271 = vunpack.c.l.b16 %v1001
        %v1272 = vunpack.c.l.b16 %v1002
        %v1273 = vunpack.c.l.b16 %v1003
        %v1274 = vunpack.c.l.b16 %v1004
        %v1275 = vunpack.c.l.b16 %v1005
        %v1276 = vunpack.c.l.b16 %v1006
        %v1277 = vunpack.c.l.b16 %v1007
        %v1278 = vunpack.c.l.b16 %v1008
        %v1279 = vunpack.c.l.b16 %v1009
        %v1280 = vunpack.c.l.b16 %v1010
        %v1281 = vunpack.c.l.b16 %v1011
        %v1282 = vunpack.c.l.b16 %v1012
        %v1283 = vunpack.c.l.b16 %v1013
        %v1284 = vunpack.c.l.b16 %v1014
        %v1285 = vunpack.c.l.b16 %v1015
        %v1286 = vpack.c.b16 %v1159, %v1158
        %v1287 = vpack.c.b16 %v1161, %v1160
        %v1288 = vpack.c.b16 %v1163, %v1162
        %v1289 = vpack.c.b16 %v1165, %v1164
        %v1290 = vpack.c.b16 %v1167, %v1166
        %v1291 = vpack.c.b16 %v1169, %v1168
        %v1292 = vpack.c.b16 %v1171, %v1170
        %v1293 = vpack.c.b16 %v1173, %v1172
        %v1294 = vpack.c.b16 %v1175, %v1174
        %v1295 = vpack.c.b16 %v1177, %v1176
        %v1296 = vpack.c.b16 %v1179, %v1178
        %v1297 = vpack.c.b16 %v1181, %v1180
        %v1298 = vpack.c.b16 %v1183, %v1182
        %v1299 = vpack.c.b16 %v1185, %v1184
        %v1300 = vpack.c.b16 %v1187, %v1186
        %v1301 = vpack.c.b16 %v1189, %v1188
        %v1302 = vpack.c.b16 %v1191, %v1190
        %v1303 = vpack.c.b16 %v1193, %v1192
        %v1304 = vpack.c.b16 %v1195, %v1194
        %v1305 = vpack.c.b16 %v1197, %v1196
        %v1306 = vpack.c.b16 %v1199, %v1198
        %v1307 = vpack.c.b16 %v1201, %v1200
        %v1308 = vpack.c.b16 %v1203, %v1202
        %v1309 = vpack.c.b16 %v1205, %v1204
        %v1310 = vpack.c.b16 %v1207, %v1206
        %v1311 = vpack.c.b16 %v1209, %v1208
        %v1312 = vpack.c.b16 %v1211, %v1210
        %v1313 = vpack.c.b16 %v1213, %v1212
        %v1314 = vpack.c.b16 %v1215, %v1214
        %v1315 = vpack.c.b16 %v1217, %v1216
        %v1316 = vpack.c.b16 %v1219, %v1218
        %v1317 = vpack.c.b16 %v1221, %v1220
        %v1318 = vpack.c.b16 %v1223, %v1222
        %v1319 = vpack.c.b16 %v1225, %v1224
        %v1320 = vpack.c.b16 %v1227, %v1226
        %v1321 = vpack.c.b16 %v1229, %v1228
        %v1322 = vpack.c.b16 %v1231, %v1230
        %v1323 = vpack.c.b16 %v1233, %v1232
        %v1324 = vpack.c.b16 %v1235, %v1234
        %v1325 = vpack.c.b16 %v1237, %v1236
        %v1326 = vpack.c.b16 %v1239, %v1238
        %v1327 = vpack.c.b16 %v1241, %v1240
        %v1328 = vpack.c.b16 %v1243, %v1242
        %v1329 = vpack.c.b16 %v1245, %v1244
        %v1330 = vpack.c.b16 %v1247, %v1246
        %v1331 = vpack.c.b16 %v1249, %v1248
        %v1332 = vpack.c.b16 %v1251, %v1250
        %v1333 = vpack.c.b16 %v1253, %v1252
        %v1334 = vpack.c.b16 %v1255, %v1254
        %v1335 = vpack.c.b16 %v1257, %v1256
        %v1336 = vpack.c.b16 %v1259, %v1258
        %v1337 = vpack.c.b16 %v1261, %v1260
        %v1338 = vpack.c.b16 %v1263, %v1262
        %v1339 = vpack.c.b16 %v1265, %v1264
        %v1340 = vpack.c.b16 %v1267, %v1266
        %v1341 = vpack.c.b16 %v1269, %v1268
        %v1342 = vpack.c.b16 %v1271, %v1270
        %v1343 = vpack.c.b16 %v1273, %v1272
        %v1344 = vpack.c.b16 %v1275, %v1274
        %v1345 = vpack.c.b16 %v1277, %v1276
        %v1346 = vpack.c.b16 %v1279, %v1278
        %v1347 = vpack.c.b16 %v1281, %v1280
        %v1348 = vpack.c.b16 %v1283, %v1282
        %v1349 = vpack.c.b16 %v1285, %v1284
        %v1364 = vunpack.c.l.b16 %v1016
        %v1365 = vunpack.c.l.b16 %v1017
        %v1366 = vunpack.c.l.b16 %v1018
        %v1367 = vunpack.c.l.b16 %v1019
        %v1368 = vunpack.c.l.b16 %v1020
        %v1369 = vunpack.c.l.b16 %v1021
        %v1370 = vunpack.c.l.b16 %v1022
        %v1371 = vunpack.c.l.b16 %v1023
        %v1372 = vunpack.c.l.b16 %v1024
        %v1373 = vunpack.c.l.b16 %v1025
        %v1374 = vunpack.c.l.b16 %v1026
        %v1375 = vunpack.c.l.b16 %v1027
        %v1376 = vunpack.c.l.b16 %v1028
        %v1377 = vunpack.c.l.b16 %v1029
        %v1378 = vpack.c.b16 %v1365, %v1364
        %v1379 = vpack.c.b16 %v1367, %v1366
        %v1380 = vpack.c.b16 %v1369, %v1368
        %v1381 = vpack.c.b16 %v1371, %v1370
        %v1382 = vpack.c.b16 %v1373, %v1372
        %v1383 = vpack.c.b16 %v1375, %v1374
        %v1384 = vpack.c.b16 %v1377, %v1376
        %vm1391 = vcmask 883712
        %v1393 = vsel %vm1391, %v1286, 0
        %v1396 = vsel %vm1391, %v1287, 0
        %v1399 = vsel %vm1391, %v1288, 0
        %v1402 = vsel %vm1391, %v1289, 0
        %v1405 = vsel %vm1391, %v1290, 0
        %v1408 = vsel %vm1391, %v1291, 0
        %v1411 = vsel %vm1391, %v1292, 0
        %v1414 = vsel %vm1391, %v1293, 0
        %v1417 = vsel %vm1391, %v1294, 0
        %v1420 = vsel %vm1391, %v1295, 0
        %v1423 = vsel %vm1391, %v1296, 0
        %v1426 = vsel %vm1391, %v1297, 0
        %v1429 = vsel %vm1391, %v1298, 0
        %v1432 = vsel %vm1391, %v1299, 0
        %v1435 = vsel %vm1391, %v1300, 0
        %v1438 = vsel %vm1391, %v1301, 0
        %v1441 = vsel %vm1391, %v1302, 0
        %v1444 = vsel %vm1391, %v1303, 0
        %v1447 = vsel %vm1391, %v1304, 0
        %v1450 = vsel %vm1391, %v1305, 0
        %v1453 = vsel %vm1391, %v1306, 0
        %v1456 = vsel %vm1391, %v1307, 0
        %v1459 = vsel %vm1391, %v1308, 0
        %v1462 = vsel %vm1391, %v1309, 0
        %v1465 = vsel %vm1391, %v1310, 0
        %v1468 = vsel %vm1391, %v1311, 0
        %v1471 = vsel %vm1391, %v1312, 0
        %v1474 = vsel %vm1391, %v1313, 0
        %v1477 = vsel %vm1391, %v1314, 0
        %v1480 = vsel %vm1391, %v1315, 0
        %v1483 = vsel %vm1391, %v1316, 0
        %v1486 = vsel %vm1391, %v1317, 0
        %v1489 = vsel %vm1391, %v1318, 0
        %v1492 = vsel %vm1391, %v1319, 0
        %v1495 = vsel %vm1391, %v1320, 0
        %v1498 = vsel %vm1391, %v1321, 0
        %v1501 = vsel %vm1391, %v1322, 0
        %v1504 = vsel %vm1391, %v1323, 0
        %v1507 = vsel %vm1391, %v1324, 0
        %v1510 = vsel %vm1391, %v1325, 0
        %v1513 = vsel %vm1391, %v1326, 0
        %v1516 = vsel %vm1391, %v1327, 0
        %v1519 = vsel %vm1391, %v1328, 0
        %v1522 = vsel %vm1391, %v1329, 0
        %v1525 = vsel %vm1391, %v1330, 0
        %v1528 = vsel %vm1391, %v1331, 0
        %v1531 = vsel %vm1391, %v1332, 0
        %v1534 = vsel %vm1391, %v1333, 0
        %v1537 = vsel %vm1391, %v1334, 0
        %v1540 = vsel %vm1391, %v1335, 0
        %v1543 = vsel %vm1391, %v1336, 0
        %v1546 = vsel %vm1391, %v1337, 0
        %v1549 = vsel %vm1391, %v1338, 0
        %v1552 = vsel %vm1391, %v1339, 0
        %v1555 = vsel %vm1391, %v1340, 0
        %v1558 = vsel %vm1391, %v1341, 0
        %v1561 = vsel %vm1391, %v1342, 0
        %v1564 = vsel %vm1391, %v1343, 0
        %v1567 = vsel %vm1391, %v1344, 0
        %v1570 = vsel %vm1391, %v1345, 0
        %v1573 = vsel %vm1391, %v1346, 0
        %v1576 = vsel %vm1391, %v1347, 0
        %v1579 = vsel %vm1391, %v1348, 0
        %v1582 = vsel %vm1391, %v1349, 0
        %vm1584 = vcmask 1045504
        %v1586 = vsel %vm1584, %v1384, 0
        %1588 = vmatpush.bf16.msra.mxu0 0
        %1589 = vmatpush.bf16.msra.mxu0 %v1586
        %1590 = vmatpush.bf16.msra.mxu0 %v1383
        %1591 = vmatpush.bf16.msra.mxu0 %v1382
        %1592 = vmatpush.bf16.msra.mxu0 %v1381
        %1593 = vmatpush.bf16.msra.mxu0 %v1380
        %1594 = vmatpush.bf16.msra.mxu0 %v1379
        %1595 = vmatpush.bf16.msra.mxu0 %v1378
        %1596 = vmatmul.bf16.gmra.mxu0 %v1393
        %v1597 = vpop.f32.mrf.mxu0
        %v1598 = vadd.f32 0.0, %v1597
        %v1599 = vpop.f32.mrf.mxu0
        %v1600 = vadd.f32 0.0, %v1599
        %1601 = vmatmul.bf16.gmra.mxu0 %v1396
        %v1602 = vpop.f32.mrf.mxu0
        %v1603 = vadd.f32 0.0, %v1602
        %v1604 = vpop.f32.mrf.mxu0
        %v1605 = vadd.f32 0.0, %v1604
        %1606 = vmatmul.bf16.gmra.mxu0 %v1399
        %v1607 = vpop.f32.mrf.mxu0
        %v1608 = vadd.f32 0.0, %v1607
        %v1609 = vpop.f32.mrf.mxu0
        %v1610 = vadd.f32 0.0, %v1609
        %1611 = vmatmul.bf16.gmra.mxu0 %v1402
        %v1612 = vpop.f32.mrf.mxu0
        %v1613 = vadd.f32 0.0, %v1612
        %v1614 = vpop.f32.mrf.mxu0
        %v1615 = vadd.f32 0.0, %v1614
        %1616 = vmatmul.bf16.gmra.mxu0 %v1405
        %v1617 = vpop.f32.mrf.mxu0
        %v1618 = vadd.f32 0.0, %v1617
        %v1619 = vpop.f32.mrf.mxu0
        %v1620 = vadd.f32 0.0, %v1619
        %1621 = vmatmul.bf16.gmra.mxu0 %v1408
        %v1622 = vpop.f32.mrf.mxu0
        %v1623 = vadd.f32 0.0, %v1622
        %v1624 = vpop.f32.mrf.mxu0
        %v1625 = vadd.f32 0.0, %v1624
        %1626 = vmatmul.bf16.gmra.mxu0 %v1411
        %v1627 = vpop.f32.mrf.mxu0
        %v1628 = vadd.f32 0.0, %v1627
        %v1629 = vpop.f32.mrf.mxu0
        %v1630 = vadd.f32 0.0, %v1629
        %1631 = vmatmul.bf16.gmra.mxu0 %v1414
        %v1632 = vpop.f32.mrf.mxu0
        %v1633 = vadd.f32 0.0, %v1632
        %v1634 = vpop.f32.mrf.mxu0
        %v1635 = vadd.f32 0.0, %v1634
        %1636 = vmatmul.bf16.gmra.mxu0 %v1417
        %v1637 = vpop.f32.mrf.mxu0
        %v1638 = vadd.f32 0.0, %v1637
        %v1639 = vpop.f32.mrf.mxu0
        %v1640 = vadd.f32 0.0, %v1639
        %1641 = vmatmul.bf16.gmra.mxu0 %v1420
        %v1642 = vpop.f32.mrf.mxu0
        %v1643 = vadd.f32 0.0, %v1642
        %v1644 = vpop.f32.mrf.mxu0
        %v1645 = vadd.f32 0.0, %v1644
        %1646 = vmatmul.bf16.gmra.mxu0 %v1423
        %v1647 = vpop.f32.mrf.mxu0
        %v1648 = vadd.f32 0.0, %v1647
        %v1649 = vpop.f32.mrf.mxu0
        %v1650 = vadd.f32 0.0, %v1649
        %1651 = vmatmul.bf16.gmra.mxu0 %v1426
        %v1652 = vpop.f32.mrf.mxu0
        %v1653 = vadd.f32 0.0, %v1652
        %v1654 = vpop.f32.mrf.mxu0
        %v1655 = vadd.f32 0.0, %v1654
        %1656 = vmatmul.bf16.gmra.mxu0 %v1429
        %v1657 = vpop.f32.mrf.mxu0
        %v1658 = vadd.f32 0.0, %v1657
        %v1659 = vpop.f32.mrf.mxu0
        %v1660 = vadd.f32 0.0, %v1659
        %1661 = vmatmul.bf16.gmra.mxu0 %v1432
        %v1662 = vpop.f32.mrf.mxu0
        %v1663 = vadd.f32 0.0, %v1662
        %v1664 = vpop.f32.mrf.mxu0
        %v1665 = vadd.f32 0.0, %v1664
        %1666 = vmatmul.bf16.gmra.mxu0 %v1435
        %v1667 = vpop.f32.mrf.mxu0
        %v1668 = vadd.f32 0.0, %v1667
        %v1669 = vpop.f32.mrf.mxu0
        %v1670 = vadd.f32 0.0, %v1669
        %1671 = vmatmul.bf16.gmra.mxu0 %v1438
        %v1672 = vpop.f32.mrf.mxu0
        %v1673 = vadd.f32 0.0, %v1672
        %v1674 = vpop.f32.mrf.mxu0
        %v1675 = vadd.f32 0.0, %v1674
        %1676 = vmatmul.bf16.gmra.mxu0 %v1441
        %v1677 = vpop.f32.mrf.mxu0
        %v1678 = vadd.f32 0.0, %v1677
        %v1679 = vpop.f32.mrf.mxu0
        %v1680 = vadd.f32 0.0, %v1679
        %1681 = vmatmul.bf16.gmra.mxu0 %v1444
        %v1682 = vpop.f32.mrf.mxu0
        %v1683 = vadd.f32 0.0, %v1682
        %v1684 = vpop.f32.mrf.mxu0
        %v1685 = vadd.f32 0.0, %v1684
        %1686 = vmatmul.bf16.gmra.mxu0 %v1447
        %v1687 = vpop.f32.mrf.mxu0
        %v1688 = vadd.f32 0.0, %v1687
        %v1689 = vpop.f32.mrf.mxu0
        %v1690 = vadd.f32 0.0, %v1689
        %1691 = vmatmul.bf16.gmra.mxu0 %v1450
        %v1692 = vpop.f32.mrf.mxu0
        %v1693 = vadd.f32 0.0, %v1692
        %v1694 = vpop.f32.mrf.mxu0
        %v1695 = vadd.f32 0.0, %v1694
        %1696 = vmatmul.bf16.gmra.mxu0 %v1453
        %v1697 = vpop.f32.mrf.mxu0
        %v1698 = vadd.f32 0.0, %v1697
        %v1699 = vpop.f32.mrf.mxu0
        %v1700 = vadd.f32 0.0, %v1699
        %1701 = vmatmul.bf16.gmra.mxu0 %v1456
        %v1702 = vpop.f32.mrf.mxu0
        %v1703 = vadd.f32 0.0, %v1702
        %v1704 = vpop.f32.mrf.mxu0
        %v1705 = vadd.f32 0.0, %v1704
        %1706 = vmatmul.bf16.gmra.mxu0 %v1459
        %v1707 = vpop.f32.mrf.mxu0
        %v1708 = vadd.f32 0.0, %v1707
        %v1709 = vpop.f32.mrf.mxu0
        %v1710 = vadd.f32 0.0, %v1709
        %1711 = vmatmul.bf16.gmra.mxu0 %v1462
        %v1712 = vpop.f32.mrf.mxu0
        %v1713 = vadd.f32 0.0, %v1712
        %v1714 = vpop.f32.mrf.mxu0
        %v1715 = vadd.f32 0.0, %v1714
        %1716 = vmatmul.bf16.gmra.mxu0 %v1465
        %v1717 = vpop.f32.mrf.mxu0
        %v1718 = vadd.f32 0.0, %v1717
        %v1719 = vpop.f32.mrf.mxu0
        %v1720 = vadd.f32 0.0, %v1719
        %1721 = vmatmul.bf16.gmra.mxu0 %v1468
        %v1722 = vpop.f32.mrf.mxu0
        %v1723 = vadd.f32 0.0, %v1722
        %v1724 = vpop.f32.mrf.mxu0
        %v1725 = vadd.f32 0.0, %v1724
        %1726 = vmatmul.bf16.gmra.mxu0 %v1471
        %v1727 = vpop.f32.mrf.mxu0
        %v1728 = vadd.f32 0.0, %v1727
        %v1729 = vpop.f32.mrf.mxu0
        %v1730 = vadd.f32 0.0, %v1729
        %1731 = vmatmul.bf16.gmra.mxu0 %v1474
        %v1732 = vpop.f32.mrf.mxu0
        %v1733 = vadd.f32 0.0, %v1732
        %v1734 = vpop.f32.mrf.mxu0
        %v1735 = vadd.f32 0.0, %v1734
        %1736 = vmatmul.bf16.gmra.mxu0 %v1477
        %v1737 = vpop.f32.mrf.mxu0
        %v1738 = vadd.f32 0.0, %v1737
        %v1739 = vpop.f32.mrf.mxu0
        %v1740 = vadd.f32 0.0, %v1739
        %1741 = vmatmul.bf16.gmra.mxu0 %v1480
        %v1742 = vpop.f32.mrf.mxu0
        %v1743 = vadd.f32 0.0, %v1742
        %v1744 = vpop.f32.mrf.mxu0
        %v1745 = vadd.f32 0.0, %v1744
        %1746 = vmatmul.bf16.gmra.mxu0 %v1483
        %v1747 = vpop.f32.mrf.mxu0
        %v1748 = vadd.f32 0.0, %v1747
        %v1749 = vpop.f32.mrf.mxu0
        %v1750 = vadd.f32 0.0, %v1749
        %1751 = vmatmul.bf16.gmra.mxu0 %v1486
        %v1752 = vpop.f32.mrf.mxu0
        %v1753 = vadd.f32 0.0, %v1752
        %v1754 = vpop.f32.mrf.mxu0
        %v1755 = vadd.f32 0.0, %v1754
        %1756 = vmatmul.bf16.gmra.mxu0 %v1489
        %v1757 = vpop.f32.mrf.mxu0
        %v1758 = vadd.f32 0.0, %v1757
        %v1759 = vpop.f32.mrf.mxu0
        %v1760 = vadd.f32 0.0, %v1759
        %1761 = vmatmul.bf16.gmra.mxu0 %v1492
        %v1762 = vpop.f32.mrf.mxu0
        %v1763 = vadd.f32 0.0, %v1762
        %v1764 = vpop.f32.mrf.mxu0
        %v1765 = vadd.f32 0.0, %v1764
        %1766 = vmatmul.bf16.gmra.mxu0 %v1495
        %v1767 = vpop.f32.mrf.mxu0
        %v1768 = vadd.f32 0.0, %v1767
        %v1769 = vpop.f32.mrf.mxu0
        %v1770 = vadd.f32 0.0, %v1769
        %1771 = vmatmul.bf16.gmra.mxu0 %v1498
        %v1772 = vpop.f32.mrf.mxu0
        %v1773 = vadd.f32 0.0, %v1772
        %v1774 = vpop.f32.mrf.mxu0
        %v1775 = vadd.f32 0.0, %v1774
        %1776 = vmatmul.bf16.gmra.mxu0 %v1501
        %v1777 = vpop.f32.mrf.mxu0
        %v1778 = vadd.f32 0.0, %v1777
        %v1779 = vpop.f32.mrf.mxu0
        %v1780 = vadd.f32 0.0, %v1779
        %1781 = vmatmul.bf16.gmra.mxu0 %v1504
        %v1782 = vpop.f32.mrf.mxu0
        %v1783 = vadd.f32 0.0, %v1782
        %v1784 = vpop.f32.mrf.mxu0
        %v1785 = vadd.f32 0.0, %v1784
        %1786 = vmatmul.bf16.gmra.mxu0 %v1507
        %v1787 = vpop.f32.mrf.mxu0
        %v1788 = vadd.f32 0.0, %v1787
        %v1789 = vpop.f32.mrf.mxu0
        %v1790 = vadd.f32 0.0, %v1789
        %1791 = vmatmul.bf16.gmra.mxu0 %v1510
        %v1792 = vpop.f32.mrf.mxu0
        %v1793 = vadd.f32 0.0, %v1792
        %v1794 = vpop.f32.mrf.mxu0
        %v1795 = vadd.f32 0.0, %v1794
        %1796 = vmatmul.bf16.gmra.mxu0 %v1513
        %v1797 = vpop.f32.mrf.mxu0
        %v1798 = vadd.f32 0.0, %v1797
        %v1799 = vpop.f32.mrf.mxu0
        %v1800 = vadd.f32 0.0, %v1799
        %1801 = vmatmul.bf16.gmra.mxu0 %v1516
        %v1802 = vpop.f32.mrf.mxu0
        %v1803 = vadd.f32 0.0, %v1802
        %v1804 = vpop.f32.mrf.mxu0
        %v1805 = vadd.f32 0.0, %v1804
        %1806 = vmatmul.bf16.gmra.mxu0 %v1519
        %v1807 = vpop.f32.mrf.mxu0
        %v1808 = vadd.f32 0.0, %v1807
        %v1809 = vpop.f32.mrf.mxu0
        %v1810 = vadd.f32 0.0, %v1809
        %1811 = vmatmul.bf16.gmra.mxu0 %v1522
        %v1812 = vpop.f32.mrf.mxu0
        %v1813 = vadd.f32 0.0, %v1812
        %v1814 = vpop.f32.mrf.mxu0
        %v1815 = vadd.f32 0.0, %v1814
        %1816 = vmatmul.bf16.gmra.mxu0 %v1525
        %v1817 = vpop.f32.mrf.mxu0
        %v1818 = vadd.f32 0.0, %v1817
        %v1819 = vpop.f32.mrf.mxu0
        %v1820 = vadd.f32 0.0, %v1819
        %1821 = vmatmul.bf16.gmra.mxu0 %v1528
        %v1822 = vpop.f32.mrf.mxu0
        %v1823 = vadd.f32 0.0, %v1822
        %v1824 = vpop.f32.mrf.mxu0
        %v1825 = vadd.f32 0.0, %v1824
        %1826 = vmatmul.bf16.gmra.mxu0 %v1531
        %v1827 = vpop.f32.mrf.mxu0
        %v1828 = vadd.f32 0.0, %v1827
        %v1829 = vpop.f32.mrf.mxu0
        %v1830 = vadd.f32 0.0, %v1829
        %1831 = vmatmul.bf16.gmra.mxu0 %v1534
        %v1832 = vpop.f32.mrf.mxu0
        %v1833 = vadd.f32 0.0, %v1832
        %v1834 = vpop.f32.mrf.mxu0
        %v1835 = vadd.f32 0.0, %v1834
        %1836 = vmatmul.bf16.gmra.mxu0 %v1537
        %v1837 = vpop.f32.mrf.mxu0
        %v1838 = vadd.f32 0.0, %v1837
        %v1839 = vpop.f32.mrf.mxu0
        %v1840 = vadd.f32 0.0, %v1839
        %1841 = vmatmul.bf16.gmra.mxu0 %v1540
        %v1842 = vpop.f32.mrf.mxu0
        %v1843 = vadd.f32 0.0, %v1842
        %v1844 = vpop.f32.mrf.mxu0
        %v1845 = vadd.f32 0.0, %v1844
        %1846 = vmatmul.bf16.gmra.mxu0 %v1543
        %v1847 = vpop.f32.mrf.mxu0
        %v1848 = vadd.f32 0.0, %v1847
        %v1849 = vpop.f32.mrf.mxu0
        %v1850 = vadd.f32 0.0, %v1849
        %1851 = vmatmul.bf16.gmra.mxu0 %v1546
        %v1852 = vpop.f32.mrf.mxu0
        %v1853 = vadd.f32 0.0, %v1852
        %v1854 = vpop.f32.mrf.mxu0
        %v1855 = vadd.f32 0.0, %v1854
        %1856 = vmatmul.bf16.gmra.mxu0 %v1549
        %v1857 = vpop.f32.mrf.mxu0
        %v1858 = vadd.f32 0.0, %v1857
        %v1859 = vpop.f32.mrf.mxu0
        %v1860 = vadd.f32 0.0, %v1859
        %1861 = vmatmul.bf16.gmra.mxu0 %v1552
        %v1862 = vpop.f32.mrf.mxu0
        %v1863 = vadd.f32 0.0, %v1862
        %v1864 = vpop.f32.mrf.mxu0
        %v1865 = vadd.f32 0.0, %v1864
        %1866 = vmatmul.bf16.gmra.mxu0 %v1555
        %v1867 = vpop.f32.mrf.mxu0
        %v1868 = vadd.f32 0.0, %v1867
        %v1869 = vpop.f32.mrf.mxu0
        %v1870 = vadd.f32 0.0, %v1869
        %1871 = vmatmul.bf16.gmra.mxu0 %v1558
        %v1872 = vpop.f32.mrf.mxu0
        %v1873 = vadd.f32 0.0, %v1872
        %v1874 = vpop.f32.mrf.mxu0
        %v1875 = vadd.f32 0.0, %v1874
        %1876 = vmatmul.bf16.gmra.mxu0 %v1561
        %v1877 = vpop.f32.mrf.mxu0
        %v1878 = vadd.f32 0.0, %v1877
        %v1879 = vpop.f32.mrf.mxu0
        %v1880 = vadd.f32 0.0, %v1879
        %1881 = vmatmul.bf16.gmra.mxu0 %v1564
        %v1882 = vpop.f32.mrf.mxu0
        %v1883 = vadd.f32 0.0, %v1882
        %v1884 = vpop.f32.mrf.mxu0
        %v1885 = vadd.f32 0.0, %v1884
        %1886 = vmatmul.bf16.gmra.mxu0 %v1567
        %v1887 = vpop.f32.mrf.mxu0
        %v1888 = vadd.f32 0.0, %v1887
        %v1889 = vpop.f32.mrf.mxu0
        %v1890 = vadd.f32 0.0, %v1889
        %1891 = vmatmul.bf16.gmra.mxu0 %v1570
        %v1892 = vpop.f32.mrf.mxu0
        %v1893 = vadd.f32 0.0, %v1892
        %v1894 = vpop.f32.mrf.mxu0
        %v1895 = vadd.f32 0.0, %v1894
        %1896 = vmatmul.bf16.gmra.mxu0 %v1573
        %v1897 = vpop.f32.mrf.mxu0
        %v1898 = vadd.f32 0.0, %v1897
        %v1899 = vpop.f32.mrf.mxu0
        %v1900 = vadd.f32 0.0, %v1899
        %1901 = vmatmul.bf16.gmra.mxu0 %v1576
        %v1902 = vpop.f32.mrf.mxu0
        %v1903 = vadd.f32 0.0, %v1902
        %v1904 = vpop.f32.mrf.mxu0
        %v1905 = vadd.f32 0.0, %v1904
        %1906 = vmatmul.bf16.gmra.mxu0 %v1579
        %v1907 = vpop.f32.mrf.mxu0
        %v1908 = vadd.f32 0.0, %v1907
        %v1909 = vpop.f32.mrf.mxu0
        %v1910 = vadd.f32 0.0, %v1909
        %1911 = vmatmul.bf16.gmra.mxu0 %v1582
        %v1912 = vpop.f32.mrf.mxu0
        %v1913 = vadd.f32 0.0, %v1912
        %v1914 = vpop.f32.mrf.mxu0
        %v1915 = vadd.f32 0.0, %v1914
        %1916 = vdwg.mxu0
        %2045 = vrot.lane.b32.xlu0 %v1598, 112
        %v2046 = vpop.permute.xlu0 %2045
        %2047 = vrot.lane.b32.xlu0 %v1600, 112
        %v2048 = vpop.permute.xlu0 %2047
        %2049 = vrot.lane.b32.xlu0 %v1603, 112
        %v2050 = vpop.permute.xlu0 %2049
        %2051 = vrot.lane.b32.xlu0 %v1605, 112
        %v2052 = vpop.permute.xlu0 %2051
        %2053 = vrot.lane.b32.xlu0 %v1608, 112
        %v2054 = vpop.permute.xlu0 %2053
        %2055 = vrot.lane.b32.xlu0 %v1610, 112
        %v2056 = vpop.permute.xlu0 %2055
        %2057 = vrot.lane.b32.xlu0 %v1613, 112
        %v2058 = vpop.permute.xlu0 %2057
        %2059 = vrot.lane.b32.xlu0 %v1615, 112
        %v2060 = vpop.permute.xlu0 %2059
        %2061 = vrot.lane.b32.xlu0 %v1618, 112
        %v2062 = vpop.permute.xlu0 %2061
        %2063 = vrot.lane.b32.xlu0 %v1620, 112
        %v2064 = vpop.permute.xlu0 %2063
        %2065 = vrot.lane.b32.xlu0 %v1623, 112
        %v2066 = vpop.permute.xlu0 %2065
        %2067 = vrot.lane.b32.xlu0 %v1625, 112
        %v2068 = vpop.permute.xlu0 %2067
        %2069 = vrot.lane.b32.xlu0 %v1628, 112
        %v2070 = vpop.permute.xlu0 %2069
        %2071 = vrot.lane.b32.xlu0 %v1630, 112
        %v2072 = vpop.permute.xlu0 %2071
        %2073 = vrot.lane.b32.xlu0 %v1633, 112
        %v2074 = vpop.permute.xlu0 %2073
        %2075 = vrot.lane.b32.xlu0 %v1635, 112
        %v2076 = vpop.permute.xlu0 %2075
        %2077 = vrot.lane.b32.xlu0 %v1638, 112
        %v2078 = vpop.permute.xlu0 %2077
        %2079 = vrot.lane.b32.xlu0 %v1640, 112
        %v2080 = vpop.permute.xlu0 %2079
        %2081 = vrot.lane.b32.xlu0 %v1643, 112
        %v2082 = vpop.permute.xlu0 %2081
        %2083 = vrot.lane.b32.xlu0 %v1645, 112
        %v2084 = vpop.permute.xlu0 %2083
        %2085 = vrot.lane.b32.xlu0 %v1648, 112
        %v2086 = vpop.permute.xlu0 %2085
        %2087 = vrot.lane.b32.xlu0 %v1650, 112
        %v2088 = vpop.permute.xlu0 %2087
        %2089 = vrot.lane.b32.xlu0 %v1653, 112
        %v2090 = vpop.permute.xlu0 %2089
        %2091 = vrot.lane.b32.xlu0 %v1655, 112
        %v2092 = vpop.permute.xlu0 %2091
        %2093 = vrot.lane.b32.xlu0 %v1658, 112
        %v2094 = vpop.permute.xlu0 %2093
        %2095 = vrot.lane.b32.xlu0 %v1660, 112
        %v2096 = vpop.permute.xlu0 %2095
        %2097 = vrot.lane.b32.xlu0 %v1663, 112
        %v2098 = vpop.permute.xlu0 %2097
        %2099 = vrot.lane.b32.xlu0 %v1665, 112
        %v2100 = vpop.permute.xlu0 %2099
        %2101 = vrot.lane.b32.xlu0 %v1668, 112
        %v2102 = vpop.permute.xlu0 %2101
        %2103 = vrot.lane.b32.xlu0 %v1670, 112
        %v2104 = vpop.permute.xlu0 %2103
        %2105 = vrot.lane.b32.xlu0 %v1673, 112
        %v2106 = vpop.permute.xlu0 %2105
        %2107 = vrot.lane.b32.xlu0 %v1675, 112
        %v2108 = vpop.permute.xlu0 %2107
        %2109 = vrot.lane.b32.xlu0 %v1678, 112
        %v2110 = vpop.permute.xlu0 %2109
        %2111 = vrot.lane.b32.xlu0 %v1680, 112
        %v2112 = vpop.permute.xlu0 %2111
        %2113 = vrot.lane.b32.xlu0 %v1683, 112
        %v2114 = vpop.permute.xlu0 %2113
        %2115 = vrot.lane.b32.xlu0 %v1685, 112
        %v2116 = vpop.permute.xlu0 %2115
        %2117 = vrot.lane.b32.xlu0 %v1688, 112
        %v2118 = vpop.permute.xlu0 %2117
        %2119 = vrot.lane.b32.xlu0 %v1690, 112
        %v2120 = vpop.permute.xlu0 %2119
        %2121 = vrot.lane.b32.xlu0 %v1693, 112
        %v2122 = vpop.permute.xlu0 %2121
        %2123 = vrot.lane.b32.xlu0 %v1695, 112
        %v2124 = vpop.permute.xlu0 %2123
        %2125 = vrot.lane.b32.xlu0 %v1698, 112
        %v2126 = vpop.permute.xlu0 %2125
        %2127 = vrot.lane.b32.xlu0 %v1700, 112
        %v2128 = vpop.permute.xlu0 %2127
        %2129 = vrot.lane.b32.xlu0 %v1703, 112
        %v2130 = vpop.permute.xlu0 %2129
        %2131 = vrot.lane.b32.xlu0 %v1705, 112
        %v2132 = vpop.permute.xlu0 %2131
        %2133 = vrot.lane.b32.xlu0 %v1708, 112
        %v2134 = vpop.permute.xlu0 %2133
        %2135 = vrot.lane.b32.xlu0 %v1710, 112
        %v2136 = vpop.permute.xlu0 %2135
        %2137 = vrot.lane.b32.xlu0 %v1713, 112
        %v2138 = vpop.permute.xlu0 %2137
        %2139 = vrot.lane.b32.xlu0 %v1715, 112
        %v2140 = vpop.permute.xlu0 %2139
        %2141 = vrot.lane.b32.xlu0 %v1718, 112
        %v2142 = vpop.permute.xlu0 %2141
        %2143 = vrot.lane.b32.xlu0 %v1720, 112
        %v2144 = vpop.permute.xlu0 %2143
        %2145 = vrot.lane.b32.xlu0 %v1723, 112
        %v2146 = vpop.permute.xlu0 %2145
        %2147 = vrot.lane.b32.xlu0 %v1725, 112
        %v2148 = vpop.permute.xlu0 %2147
        %2149 = vrot.lane.b32.xlu0 %v1728, 112
        %v2150 = vpop.permute.xlu0 %2149
        %2151 = vrot.lane.b32.xlu0 %v1730, 112
        %v2152 = vpop.permute.xlu0 %2151
        %2153 = vrot.lane.b32.xlu0 %v1733, 112
        %v2154 = vpop.permute.xlu0 %2153
        %2155 = vrot.lane.b32.xlu0 %v1735, 112
        %v2156 = vpop.permute.xlu0 %2155
        %2157 = vrot.lane.b32.xlu0 %v1738, 112
        %v2158 = vpop.permute.xlu0 %2157
        %2159 = vrot.lane.b32.xlu0 %v1740, 112
        %v2160 = vpop.permute.xlu0 %2159
        %2161 = vrot.lane.b32.xlu0 %v1743, 112
        %v2162 = vpop.permute.xlu0 %2161
        %2163 = vrot.lane.b32.xlu0 %v1745, 112
        %v2164 = vpop.permute.xlu0 %2163
        %2165 = vrot.lane.b32.xlu0 %v1748, 112
        %v2166 = vpop.permute.xlu0 %2165
        %2167 = vrot.lane.b32.xlu0 %v1750, 112
        %v2168 = vpop.permute.xlu0 %2167
        %2169 = vrot.lane.b32.xlu0 %v1753, 112
        %v2170 = vpop.permute.xlu0 %2169
        %2171 = vrot.lane.b32.xlu0 %v1755, 112
        %v2172 = vpop.permute.xlu0 %2171
        %2173 = vrot.lane.b32.xlu0 %v1758, 112
        %v2174 = vpop.permute.xlu0 %2173
        %2175 = vrot.lane.b32.xlu0 %v1760, 112
        %v2176 = vpop.permute.xlu0 %2175
        %2177 = vrot.lane.b32.xlu0 %v1763, 112
        %v2178 = vpop.permute.xlu0 %2177
        %2179 = vrot.lane.b32.xlu0 %v1765, 112
        %v2180 = vpop.permute.xlu0 %2179
        %2181 = vrot.lane.b32.xlu0 %v1768, 112
        %v2182 = vpop.permute.xlu0 %2181
        %2183 = vrot.lane.b32.xlu0 %v1770, 112
        %v2184 = vpop.permute.xlu0 %2183
        %2185 = vrot.lane.b32.xlu0 %v1773, 112
        %v2186 = vpop.permute.xlu0 %2185
        %2187 = vrot.lane.b32.xlu0 %v1775, 112
        %v2188 = vpop.permute.xlu0 %2187
        %2189 = vrot.lane.b32.xlu0 %v1778, 112
        %v2190 = vpop.permute.xlu0 %2189
        %2191 = vrot.lane.b32.xlu0 %v1780, 112
        %v2192 = vpop.permute.xlu0 %2191
        %2193 = vrot.lane.b32.xlu0 %v1783, 112
        %v2194 = vpop.permute.xlu0 %2193
        %2195 = vrot.lane.b32.xlu0 %v1785, 112
        %v2196 = vpop.permute.xlu0 %2195
        %2197 = vrot.lane.b32.xlu0 %v1788, 112
        %v2198 = vpop.permute.xlu0 %2197
        %2199 = vrot.lane.b32.xlu0 %v1790, 112
        %v2200 = vpop.permute.xlu0 %2199
        %2201 = vrot.lane.b32.xlu0 %v1793, 112
        %v2202 = vpop.permute.xlu0 %2201
        %2203 = vrot.lane.b32.xlu0 %v1795, 112
        %v2204 = vpop.permute.xlu0 %2203
        %2205 = vrot.lane.b32.xlu0 %v1798, 112
        %v2206 = vpop.permute.xlu0 %2205
        %2207 = vrot.lane.b32.xlu0 %v1800, 112
        %v2208 = vpop.permute.xlu0 %2207
        %2209 = vrot.lane.b32.xlu0 %v1803, 112
        %v2210 = vpop.permute.xlu0 %2209
        %2211 = vrot.lane.b32.xlu0 %v1805, 112
        %v2212 = vpop.permute.xlu0 %2211
        %2213 = vrot.lane.b32.xlu0 %v1808, 112
        %v2214 = vpop.permute.xlu0 %2213
        %2215 = vrot.lane.b32.xlu0 %v1810, 112
        %v2216 = vpop.permute.xlu0 %2215
        %2217 = vrot.lane.b32.xlu0 %v1813, 112
        %v2218 = vpop.permute.xlu0 %2217
        %2219 = vrot.lane.b32.xlu0 %v1815, 112
        %v2220 = vpop.permute.xlu0 %2219
        %2221 = vrot.lane.b32.xlu0 %v1818, 112
        %v2222 = vpop.permute.xlu0 %2221
        %2223 = vrot.lane.b32.xlu0 %v1820, 112
        %v2224 = vpop.permute.xlu0 %2223
        %2225 = vrot.lane.b32.xlu0 %v1823, 112
        %v2226 = vpop.permute.xlu0 %2225
        %2227 = vrot.lane.b32.xlu0 %v1825, 112
        %v2228 = vpop.permute.xlu0 %2227
        %2229 = vrot.lane.b32.xlu0 %v1828, 112
        %v2230 = vpop.permute.xlu0 %2229
        %2231 = vrot.lane.b32.xlu0 %v1830, 112
        %v2232 = vpop.permute.xlu0 %2231
        %2233 = vrot.lane.b32.xlu0 %v1833, 112
        %v2234 = vpop.permute.xlu0 %2233
        %2235 = vrot.lane.b32.xlu0 %v1835, 112
        %v2236 = vpop.permute.xlu0 %2235
        %2237 = vrot.lane.b32.xlu0 %v1838, 112
        %v2238 = vpop.permute.xlu0 %2237
        %2239 = vrot.lane.b32.xlu0 %v1840, 112
        %v2240 = vpop.permute.xlu0 %2239
        %2241 = vrot.lane.b32.xlu0 %v1843, 112
        %v2242 = vpop.permute.xlu0 %2241
        %2243 = vrot.lane.b32.xlu0 %v1845, 112
        %v2244 = vpop.permute.xlu0 %2243
        %2245 = vrot.lane.b32.xlu0 %v1848, 112
        %v2246 = vpop.permute.xlu0 %2245
        %2247 = vrot.lane.b32.xlu0 %v1850, 112
        %v2248 = vpop.permute.xlu0 %2247
        %2249 = vrot.lane.b32.xlu0 %v1853, 112
        %v2250 = vpop.permute.xlu0 %2249
        %2251 = vrot.lane.b32.xlu0 %v1855, 112
        %v2252 = vpop.permute.xlu0 %2251
        %2253 = vrot.lane.b32.xlu0 %v1858, 112
        %v2254 = vpop.permute.xlu0 %2253
        %2255 = vrot.lane.b32.xlu0 %v1860, 112
        %v2256 = vpop.permute.xlu0 %2255
        %2257 = vrot.lane.b32.xlu0 %v1863, 112
        %v2258 = vpop.permute.xlu0 %2257
        %2259 = vrot.lane.b32.xlu0 %v1865, 112
        %v2260 = vpop.permute.xlu0 %2259
        %2261 = vrot.lane.b32.xlu0 %v1868, 112
        %v2262 = vpop.permute.xlu0 %2261
        %2263 = vrot.lane.b32.xlu0 %v1870, 112
        %v2264 = vpop.permute.xlu0 %2263
        %2265 = vrot.lane.b32.xlu0 %v1873, 112
        %v2266 = vpop.permute.xlu0 %2265
        %2267 = vrot.lane.b32.xlu0 %v1875, 112
        %v2268 = vpop.permute.xlu0 %2267
        %2269 = vrot.lane.b32.xlu0 %v1878, 112
        %v2270 = vpop.permute.xlu0 %2269
        %2271 = vrot.lane.b32.xlu0 %v1880, 112
        %v2272 = vpop.permute.xlu0 %2271
        %2273 = vrot.lane.b32.xlu0 %v1883, 112
        %v2274 = vpop.permute.xlu0 %2273
        %2275 = vrot.lane.b32.xlu0 %v1885, 112
        %v2276 = vpop.permute.xlu0 %2275
        %2277 = vrot.lane.b32.xlu0 %v1888, 112
        %v2278 = vpop.permute.xlu0 %2277
        %2279 = vrot.lane.b32.xlu0 %v1890, 112
        %v2280 = vpop.permute.xlu0 %2279
        %2281 = vrot.lane.b32.xlu0 %v1893, 112
        %v2282 = vpop.permute.xlu0 %2281
        %2283 = vrot.lane.b32.xlu0 %v1895, 112
        %v2284 = vpop.permute.xlu0 %2283
        %2285 = vrot.lane.b32.xlu0 %v1898, 112
        %v2286 = vpop.permute.xlu0 %2285
        %2287 = vrot.lane.b32.xlu0 %v1900, 112
        %v2288 = vpop.permute.xlu0 %2287
        %2289 = vrot.lane.b32.xlu0 %v1903, 112
        %v2290 = vpop.permute.xlu0 %2289
        %2291 = vrot.lane.b32.xlu0 %v1905, 112
        %v2292 = vpop.permute.xlu0 %2291
        %2293 = vrot.lane.b32.xlu0 %v1908, 112
        %v2294 = vpop.permute.xlu0 %2293
        %2295 = vrot.lane.b32.xlu0 %v1910, 112
        %v2296 = vpop.permute.xlu0 %2295
        %2297 = vrot.lane.b32.xlu0 %v1913, 112
        %v2298 = vpop.permute.xlu0 %2297
        %2299 = vrot.lane.b32.xlu0 %v1915, 112
        %v2300 = vpop.permute.xlu0 %2299
        %v2429 = vmax.f32 %v1598, %v2046
        %v2430 = vmax.f32 %v1600, %v2048
        %v2431 = vmax.f32 %v1603, %v2050
        %v2432 = vmax.f32 %v1605, %v2052
        %v2433 = vmax.f32 %v1608, %v2054
        %v2434 = vmax.f32 %v1610, %v2056
        %v2435 = vmax.f32 %v1613, %v2058
        %v2436 = vmax.f32 %v1615, %v2060
        %v2437 = vmax.f32 %v1618, %v2062
        %v2438 = vmax.f32 %v1620, %v2064
        %v2439 = vmax.f32 %v1623, %v2066
        %v2440 = vmax.f32 %v1625, %v2068
        %v2441 = vmax.f32 %v1628, %v2070
        %v2442 = vmax.f32 %v1630, %v2072
        %v2443 = vmax.f32 %v1633, %v2074
        %v2444 = vmax.f32 %v1635, %v2076
        %v2445 = vmax.f32 %v1638, %v2078
        %v2446 = vmax.f32 %v1640, %v2080
        %v2447 = vmax.f32 %v1643, %v2082
        %v2448 = vmax.f32 %v1645, %v2084
        %v2449 = vmax.f32 %v1648, %v2086
        %v2450 = vmax.f32 %v1650, %v2088
        %v2451 = vmax.f32 %v1653, %v2090
        %v2452 = vmax.f32 %v1655, %v2092
        %v2453 = vmax.f32 %v1658, %v2094
        %v2454 = vmax.f32 %v1660, %v2096
        %v2455 = vmax.f32 %v1663, %v2098
        %v2456 = vmax.f32 %v1665, %v2100
        %v2457 = vmax.f32 %v1668, %v2102
        %v2458 = vmax.f32 %v1670, %v2104
        %v2459 = vmax.f32 %v1673, %v2106
        %v2460 = vmax.f32 %v1675, %v2108
        %v2461 = vmax.f32 %v1678, %v2110
        %v2462 = vmax.f32 %v1680, %v2112
        %v2463 = vmax.f32 %v1683, %v2114
        %v2464 = vmax.f32 %v1685, %v2116
        %v2465 = vmax.f32 %v1688, %v2118
        %v2466 = vmax.f32 %v1690, %v2120
        %v2467 = vmax.f32 %v1693, %v2122
        %v2468 = vmax.f32 %v1695, %v2124
        %v2469 = vmax.f32 %v1698, %v2126
        %v2470 = vmax.f32 %v1700, %v2128
        %v2471 = vmax.f32 %v1703, %v2130
        %v2472 = vmax.f32 %v1705, %v2132
        %v2473 = vmax.f32 %v1708, %v2134
        %v2474 = vmax.f32 %v1710, %v2136
        %v2475 = vmax.f32 %v1713, %v2138
        %v2476 = vmax.f32 %v1715, %v2140
        %v2477 = vmax.f32 %v1718, %v2142
        %v2478 = vmax.f32 %v1720, %v2144
        %v2479 = vmax.f32 %v1723, %v2146
        %v2480 = vmax.f32 %v1725, %v2148
        %v2481 = vmax.f32 %v1728, %v2150
        %v2482 = vmax.f32 %v1730, %v2152
        %v2483 = vmax.f32 %v1733, %v2154
        %v2484 = vmax.f32 %v1735, %v2156
        %v2485 = vmax.f32 %v1738, %v2158
        %v2486 = vmax.f32 %v1740, %v2160
        %v2487 = vmax.f32 %v1743, %v2162
        %v2488 = vmax.f32 %v1745, %v2164
        %v2489 = vmax.f32 %v1748, %v2166
        %v2490 = vmax.f32 %v1750, %v2168
        %v2491 = vmax.f32 %v1753, %v2170
        %v2492 = vmax.f32 %v1755, %v2172
        %v2493 = vmax.f32 %v1758, %v2174
        %v2494 = vmax.f32 %v1760, %v2176
        %v2495 = vmax.f32 %v1763, %v2178
        %v2496 = vmax.f32 %v1765, %v2180
        %v2497 = vmax.f32 %v1768, %v2182
        %v2498 = vmax.f32 %v1770, %v2184
        %v2499 = vmax.f32 %v1773, %v2186
        %v2500 = vmax.f32 %v1775, %v2188
        %v2501 = vmax.f32 %v1778, %v2190
        %v2502 = vmax.f32 %v1780, %v2192
        %v2503 = vmax.f32 %v1783, %v2194
        %v2504 = vmax.f32 %v1785, %v2196
        %v2505 = vmax.f32 %v1788, %v2198
        %v2506 = vmax.f32 %v1790, %v2200
        %v2507 = vmax.f32 %v1793, %v2202
        %v2508 = vmax.f32 %v1795, %v2204
        %v2509 = vmax.f32 %v1798, %v2206
        %v2510 = vmax.f32 %v1800, %v2208
        %v2511 = vmax.f32 %v1803, %v2210
        %v2512 = vmax.f32 %v1805, %v2212
        %v2513 = vmax.f32 %v1808, %v2214
        %v2514 = vmax.f32 %v1810, %v2216
        %v2515 = vmax.f32 %v1813, %v2218
        %v2516 = vmax.f32 %v1815, %v2220
        %v2517 = vmax.f32 %v1818, %v2222
        %v2518 = vmax.f32 %v1820, %v2224
        %v2519 = vmax.f32 %v1823, %v2226
        %v2520 = vmax.f32 %v1825, %v2228
        %v2521 = vmax.f32 %v1828, %v2230
        %v2522 = vmax.f32 %v1830, %v2232
        %v2523 = vmax.f32 %v1833, %v2234
        %v2524 = vmax.f32 %v1835, %v2236
        %v2525 = vmax.f32 %v1838, %v2238
        %v2526 = vmax.f32 %v1840, %v2240
        %v2527 = vmax.f32 %v1843, %v2242
        %v2528 = vmax.f32 %v1845, %v2244
        %v2529 = vmax.f32 %v1848, %v2246
        %v2530 = vmax.f32 %v1850, %v2248
        %v2531 = vmax.f32 %v1853, %v2250
        %v2532 = vmax.f32 %v1855, %v2252
        %v2533 = vmax.f32 %v1858, %v2254
        %v2534 = vmax.f32 %v1860, %v2256
        %v2535 = vmax.f32 %v1863, %v2258
        %v2536 = vmax.f32 %v1865, %v2260
        %v2537 = vmax.f32 %v1868, %v2262
        %v2538 = vmax.f32 %v1870, %v2264
        %v2539 = vmax.f32 %v1873, %v2266
        %v2540 = vmax.f32 %v1875, %v2268
        %v2541 = vmax.f32 %v1878, %v2270
        %v2542 = vmax.f32 %v1880, %v2272
        %v2543 = vmax.f32 %v1883, %v2274
        %v2544 = vmax.f32 %v1885, %v2276
        %v2545 = vmax.f32 %v1888, %v2278
        %v2546 = vmax.f32 %v1890, %v2280
        %v2547 = vmax.f32 %v1893, %v2282
        %v2548 = vmax.f32 %v1895, %v2284
        %v2549 = vmax.f32 %v1898, %v2286
        %v2550 = vmax.f32 %v1900, %v2288
        %v2551 = vmax.f32 %v1903, %v2290
        %v2552 = vmax.f32 %v1905, %v2292
        %v2553 = vmax.f32 %v1908, %v2294
        %v2554 = vmax.f32 %v1910, %v2296
        %v2555 = vmax.f32 %v1913, %v2298
        %v2556 = vmax.f32 %v1915, %v2300
        %2685 = vrot.lane.b32.xlu0 %v2429, 96
        %v2686 = vpop.permute.xlu0 %2685
        %2687 = vrot.lane.b32.xlu0 %v2430, 96
        %v2688 = vpop.permute.xlu0 %2687
        %2689 = vrot.lane.b32.xlu0 %v2431, 96
        %v2690 = vpop.permute.xlu0 %2689
        %2691 = vrot.lane.b32.xlu0 %v2432, 96
        %v2692 = vpop.permute.xlu0 %2691
        %2693 = vrot.lane.b32.xlu0 %v2433, 96
        %v2694 = vpop.permute.xlu0 %2693
        %2695 = vrot.lane.b32.xlu0 %v2434, 96
        %v2696 = vpop.permute.xlu0 %2695
        %2697 = vrot.lane.b32.xlu0 %v2435, 96
        %v2698 = vpop.permute.xlu0 %2697
        %2699 = vrot.lane.b32.xlu0 %v2436, 96
        %v2700 = vpop.permute.xlu0 %2699
        %2701 = vrot.lane.b32.xlu0 %v2437, 96
        %v2702 = vpop.permute.xlu0 %2701
        %2703 = vrot.lane.b32.xlu0 %v2438, 96
        %v2704 = vpop.permute.xlu0 %2703
        %2705 = vrot.lane.b32.xlu0 %v2439, 96
        %v2706 = vpop.permute.xlu0 %2705
        %2707 = vrot.lane.b32.xlu0 %v2440, 96
        %v2708 = vpop.permute.xlu0 %2707
        %2709 = vrot.lane.b32.xlu0 %v2441, 96
        %v2710 = vpop.permute.xlu0 %2709
        %2711 = vrot.lane.b32.xlu0 %v2442, 96
        %v2712 = vpop.permute.xlu0 %2711
        %2713 = vrot.lane.b32.xlu0 %v2443, 96
        %v2714 = vpop.permute.xlu0 %2713
        %2715 = vrot.lane.b32.xlu0 %v2444, 96
        %v2716 = vpop.permute.xlu0 %2715
        %2717 = vrot.lane.b32.xlu0 %v2445, 96
        %v2718 = vpop.permute.xlu0 %2717
        %2719 = vrot.lane.b32.xlu0 %v2446, 96
        %v2720 = vpop.permute.xlu0 %2719
        %2721 = vrot.lane.b32.xlu0 %v2447, 96
        %v2722 = vpop.permute.xlu0 %2721
        %2723 = vrot.lane.b32.xlu0 %v2448, 96
        %v2724 = vpop.permute.xlu0 %2723
        %2725 = vrot.lane.b32.xlu0 %v2449, 96
        %v2726 = vpop.permute.xlu0 %2725
        %2727 = vrot.lane.b32.xlu0 %v2450, 96
        %v2728 = vpop.permute.xlu0 %2727
        %2729 = vrot.lane.b32.xlu0 %v2451, 96
        %v2730 = vpop.permute.xlu0 %2729
        %2731 = vrot.lane.b32.xlu0 %v2452, 96
        %v2732 = vpop.permute.xlu0 %2731
        %2733 = vrot.lane.b32.xlu0 %v2453, 96
        %v2734 = vpop.permute.xlu0 %2733
        %2735 = vrot.lane.b32.xlu0 %v2454, 96
        %v2736 = vpop.permute.xlu0 %2735
        %2737 = vrot.lane.b32.xlu0 %v2455, 96
        %v2738 = vpop.permute.xlu0 %2737
        %2739 = vrot.lane.b32.xlu0 %v2456, 96
        %v2740 = vpop.permute.xlu0 %2739
        %2741 = vrot.lane.b32.xlu0 %v2457, 96
        %v2742 = vpop.permute.xlu0 %2741
        %2743 = vrot.lane.b32.xlu0 %v2458, 96
        %v2744 = vpop.permute.xlu0 %2743
        %2745 = vrot.lane.b32.xlu0 %v2459, 96
        %v2746 = vpop.permute.xlu0 %2745
        %2747 = vrot.lane.b32.xlu0 %v2460, 96
        %v2748 = vpop.permute.xlu0 %2747
        %2749 = vrot.lane.b32.xlu0 %v2461, 96
        %v2750 = vpop.permute.xlu0 %2749
        %2751 = vrot.lane.b32.xlu0 %v2462, 96
        %v2752 = vpop.permute.xlu0 %2751
        %2753 = vrot.lane.b32.xlu0 %v2463, 96
        %v2754 = vpop.permute.xlu0 %2753
        %2755 = vrot.lane.b32.xlu0 %v2464, 96
        %v2756 = vpop.permute.xlu0 %2755
        %2757 = vrot.lane.b32.xlu0 %v2465, 96
        %v2758 = vpop.permute.xlu0 %2757
        %2759 = vrot.lane.b32.xlu0 %v2466, 96
        %v2760 = vpop.permute.xlu0 %2759
        %2761 = vrot.lane.b32.xlu0 %v2467, 96
        %v2762 = vpop.permute.xlu0 %2761
        %2763 = vrot.lane.b32.xlu0 %v2468, 96
        %v2764 = vpop.permute.xlu0 %2763
        %2765 = vrot.lane.b32.xlu0 %v2469, 96
        %v2766 = vpop.permute.xlu0 %2765
        %2767 = vrot.lane.b32.xlu0 %v2470, 96
        %v2768 = vpop.permute.xlu0 %2767
        %2769 = vrot.lane.b32.xlu0 %v2471, 96
        %v2770 = vpop.permute.xlu0 %2769
        %2771 = vrot.lane.b32.xlu0 %v2472, 96
        %v2772 = vpop.permute.xlu0 %2771
        %2773 = vrot.lane.b32.xlu0 %v2473, 96
        %v2774 = vpop.permute.xlu0 %2773
        %2775 = vrot.lane.b32.xlu0 %v2474, 96
        %v2776 = vpop.permute.xlu0 %2775
        %2777 = vrot.lane.b32.xlu0 %v2475, 96
        %v2778 = vpop.permute.xlu0 %2777
        %2779 = vrot.lane.b32.xlu0 %v2476, 96
        %v2780 = vpop.permute.xlu0 %2779
        %2781 = vrot.lane.b32.xlu0 %v2477, 96
        %v2782 = vpop.permute.xlu0 %2781
        %2783 = vrot.lane.b32.xlu0 %v2478, 96
        %v2784 = vpop.permute.xlu0 %2783
        %2785 = vrot.lane.b32.xlu0 %v2479, 96
        %v2786 = vpop.permute.xlu0 %2785
        %2787 = vrot.lane.b32.xlu0 %v2480, 96
        %v2788 = vpop.permute.xlu0 %2787
        %2789 = vrot.lane.b32.xlu0 %v2481, 96
        %v2790 = vpop.permute.xlu0 %2789
        %2791 = vrot.lane.b32.xlu0 %v2482, 96
        %v2792 = vpop.permute.xlu0 %2791
        %2793 = vrot.lane.b32.xlu0 %v2483, 96
        %v2794 = vpop.permute.xlu0 %2793
        %2795 = vrot.lane.b32.xlu0 %v2484, 96
        %v2796 = vpop.permute.xlu0 %2795
        %2797 = vrot.lane.b32.xlu0 %v2485, 96
        %v2798 = vpop.permute.xlu0 %2797
        %2799 = vrot.lane.b32.xlu0 %v2486, 96
        %v2800 = vpop.permute.xlu0 %2799
        %2801 = vrot.lane.b32.xlu0 %v2487, 96
        %v2802 = vpop.permute.xlu0 %2801
        %2803 = vrot.lane.b32.xlu0 %v2488, 96
        %v2804 = vpop.permute.xlu0 %2803
        %2805 = vrot.lane.b32.xlu0 %v2489, 96
        %v2806 = vpop.permute.xlu0 %2805
        %2807 = vrot.lane.b32.xlu0 %v2490, 96
        %v2808 = vpop.permute.xlu0 %2807
        %2809 = vrot.lane.b32.xlu0 %v2491, 96
        %v2810 = vpop.permute.xlu0 %2809
        %2811 = vrot.lane.b32.xlu0 %v2492, 96
        %v2812 = vpop.permute.xlu0 %2811
        %2813 = vrot.lane.b32.xlu0 %v2493, 96
        %v2814 = vpop.permute.xlu0 %2813
        %2815 = vrot.lane.b32.xlu0 %v2494, 96
        %v2816 = vpop.permute.xlu0 %2815
        %2817 = vrot.lane.b32.xlu0 %v2495, 96
        %v2818 = vpop.permute.xlu0 %2817
        %2819 = vrot.lane.b32.xlu0 %v2496, 96
        %v2820 = vpop.permute.xlu0 %2819
        %2821 = vrot.lane.b32.xlu0 %v2497, 96
        %v2822 = vpop.permute.xlu0 %2821
        %2823 = vrot.lane.b32.xlu0 %v2498, 96
        %v2824 = vpop.permute.xlu0 %2823
        %2825 = vrot.lane.b32.xlu0 %v2499, 96
        %v2826 = vpop.permute.xlu0 %2825
        %2827 = vrot.lane.b32.xlu0 %v2500, 96
        %v2828 = vpop.permute.xlu0 %2827
        %2829 = vrot.lane.b32.xlu0 %v2501, 96
        %v2830 = vpop.permute.xlu0 %2829
        %2831 = vrot.lane.b32.xlu0 %v2502, 96
        %v2832 = vpop.permute.xlu0 %2831
        %2833 = vrot.lane.b32.xlu0 %v2503, 96
        %v2834 = vpop.permute.xlu0 %2833
        %2835 = vrot.lane.b32.xlu0 %v2504, 96
        %v2836 = vpop.permute.xlu0 %2835
        %2837 = vrot.lane.b32.xlu0 %v2505, 96
        %v2838 = vpop.permute.xlu0 %2837
        %2839 = vrot.lane.b32.xlu0 %v2506, 96
        %v2840 = vpop.permute.xlu0 %2839
        %2841 = vrot.lane.b32.xlu0 %v2507, 96
        %v2842 = vpop.permute.xlu0 %2841
        %2843 = vrot.lane.b32.xlu0 %v2508, 96
        %v2844 = vpop.permute.xlu0 %2843
        %2845 = vrot.lane.b32.xlu0 %v2509, 96
        %v2846 = vpop.permute.xlu0 %2845
        %2847 = vrot.lane.b32.xlu0 %v2510, 96
        %v2848 = vpop.permute.xlu0 %2847
        %2849 = vrot.lane.b32.xlu0 %v2511, 96
        %v2850 = vpop.permute.xlu0 %2849
        %2851 = vrot.lane.b32.xlu0 %v2512, 96
        %v2852 = vpop.permute.xlu0 %2851
        %2853 = vrot.lane.b32.xlu0 %v2513, 96
        %v2854 = vpop.permute.xlu0 %2853
        %2855 = vrot.lane.b32.xlu0 %v2514, 96
        %v2856 = vpop.permute.xlu0 %2855
        %2857 = vrot.lane.b32.xlu0 %v2515, 96
        %v2858 = vpop.permute.xlu0 %2857
        %2859 = vrot.lane.b32.xlu0 %v2516, 96
        %v2860 = vpop.permute.xlu0 %2859
        %2861 = vrot.lane.b32.xlu0 %v2517, 96
        %v2862 = vpop.permute.xlu0 %2861
        %2863 = vrot.lane.b32.xlu0 %v2518, 96
        %v2864 = vpop.permute.xlu0 %2863
        %2865 = vrot.lane.b32.xlu0 %v2519, 96
        %v2866 = vpop.permute.xlu0 %2865
        %2867 = vrot.lane.b32.xlu0 %v2520, 96
        %v2868 = vpop.permute.xlu0 %2867
        %2869 = vrot.lane.b32.xlu0 %v2521, 96
        %v2870 = vpop.permute.xlu0 %2869
        %2871 = vrot.lane.b32.xlu0 %v2522, 96
        %v2872 = vpop.permute.xlu0 %2871
        %2873 = vrot.lane.b32.xlu0 %v2523, 96
        %v2874 = vpop.permute.xlu0 %2873
        %2875 = vrot.lane.b32.xlu0 %v2524, 96
        %v2876 = vpop.permute.xlu0 %2875
        %2877 = vrot.lane.b32.xlu0 %v2525, 96
        %v2878 = vpop.permute.xlu0 %2877
        %2879 = vrot.lane.b32.xlu0 %v2526, 96
        %v2880 = vpop.permute.xlu0 %2879
        %2881 = vrot.lane.b32.xlu0 %v2527, 96
        %v2882 = vpop.permute.xlu0 %2881
        %2883 = vrot.lane.b32.xlu0 %v2528, 96
        %v2884 = vpop.permute.xlu0 %2883
        %2885 = vrot.lane.b32.xlu0 %v2529, 96
        %v2886 = vpop.permute.xlu0 %2885
        %2887 = vrot.lane.b32.xlu0 %v2530, 96
        %v2888 = vpop.permute.xlu0 %2887
        %2889 = vrot.lane.b32.xlu0 %v2531, 96
        %v2890 = vpop.permute.xlu0 %2889
        %2891 = vrot.lane.b32.xlu0 %v2532, 96
        %v2892 = vpop.permute.xlu0 %2891
        %2893 = vrot.lane.b32.xlu0 %v2533, 96
        %v2894 = vpop.permute.xlu0 %2893
        %2895 = vrot.lane.b32.xlu0 %v2534, 96
        %v2896 = vpop.permute.xlu0 %2895
        %2897 = vrot.lane.b32.xlu0 %v2535, 96
        %v2898 = vpop.permute.xlu0 %2897
        %2899 = vrot.lane.b32.xlu0 %v2536, 96
        %v2900 = vpop.permute.xlu0 %2899
        %2901 = vrot.lane.b32.xlu0 %v2537, 96
        %v2902 = vpop.permute.xlu0 %2901
        %2903 = vrot.lane.b32.xlu0 %v2538, 96
        %v2904 = vpop.permute.xlu0 %2903
        %2905 = vrot.lane.b32.xlu0 %v2539, 96
        %v2906 = vpop.permute.xlu0 %2905
        %2907 = vrot.lane.b32.xlu0 %v2540, 96
        %v2908 = vpop.permute.xlu0 %2907
        %2909 = vrot.lane.b32.xlu0 %v2541, 96
        %v2910 = vpop.permute.xlu0 %2909
        %2911 = vrot.lane.b32.xlu0 %v2542, 96
        %v2912 = vpop.permute.xlu0 %2911
        %2913 = vrot.lane.b32.xlu0 %v2543, 96
        %v2914 = vpop.permute.xlu0 %2913
        %2915 = vrot.lane.b32.xlu0 %v2544, 96
        %v2916 = vpop.permute.xlu0 %2915
        %2917 = vrot.lane.b32.xlu0 %v2545, 96
        %v2918 = vpop.permute.xlu0 %2917
        %2919 = vrot.lane.b32.xlu0 %v2546, 96
        %v2920 = vpop.permute.xlu0 %2919
        %2921 = vrot.lane.b32.xlu0 %v2547, 96
        %v2922 = vpop.permute.xlu0 %2921
        %2923 = vrot.lane.b32.xlu0 %v2548, 96
        %v2924 = vpop.permute.xlu0 %2923
        %2925 = vrot.lane.b32.xlu0 %v2549, 96
        %v2926 = vpop.permute.xlu0 %2925
        %2927 = vrot.lane.b32.xlu0 %v2550, 96
        %v2928 = vpop.permute.xlu0 %2927
        %2929 = vrot.lane.b32.xlu0 %v2551, 96
        %v2930 = vpop.permute.xlu0 %2929
        %2931 = vrot.lane.b32.xlu0 %v2552, 96
        %v2932 = vpop.permute.xlu0 %2931
        %2933 = vrot.lane.b32.xlu0 %v2553, 96
        %v2934 = vpop.permute.xlu0 %2933
        %2935 = vrot.lane.b32.xlu0 %v2554, 96
        %v2936 = vpop.permute.xlu0 %2935
        %2937 = vrot.lane.b32.xlu0 %v2555, 96
        %v2938 = vpop.permute.xlu0 %2937
        %2939 = vrot.lane.b32.xlu0 %v2556, 96
        %v2940 = vpop.permute.xlu0 %2939
        %v3069 = vmax.f32 %v2429, %v2686
        %v3070 = vmax.f32 %v2430, %v2688
        %v3071 = vmax.f32 %v2431, %v2690
        %v3072 = vmax.f32 %v2432, %v2692
        %v3073 = vmax.f32 %v2433, %v2694
        %v3074 = vmax.f32 %v2434, %v2696
        %v3075 = vmax.f32 %v2435, %v2698
        %v3076 = vmax.f32 %v2436, %v2700
        %v3077 = vmax.f32 %v2437, %v2702
        %v3078 = vmax.f32 %v2438, %v2704
        %v3079 = vmax.f32 %v2439, %v2706
        %v3080 = vmax.f32 %v2440, %v2708
        %v3081 = vmax.f32 %v2441, %v2710
        %v3082 = vmax.f32 %v2442, %v2712
        %v3083 = vmax.f32 %v2443, %v2714
        %v3084 = vmax.f32 %v2444, %v2716
        %v3085 = vmax.f32 %v2445, %v2718
        %v3086 = vmax.f32 %v2446, %v2720
        %v3087 = vmax.f32 %v2447, %v2722
        %v3088 = vmax.f32 %v2448, %v2724
        %v3089 = vmax.f32 %v2449, %v2726
        %v3090 = vmax.f32 %v2450, %v2728
        %v3091 = vmax.f32 %v2451, %v2730
        %v3092 = vmax.f32 %v2452, %v2732
        %v3093 = vmax.f32 %v2453, %v2734
        %v3094 = vmax.f32 %v2454, %v2736
        %v3095 = vmax.f32 %v2455, %v2738
        %v3096 = vmax.f32 %v2456, %v2740
        %v3097 = vmax.f32 %v2457, %v2742
        %v3098 = vmax.f32 %v2458, %v2744
        %v3099 = vmax.f32 %v2459, %v2746
        %v3100 = vmax.f32 %v2460, %v2748
        %v3101 = vmax.f32 %v2461, %v2750
        %v3102 = vmax.f32 %v2462, %v2752
        %v3103 = vmax.f32 %v2463, %v2754
        %v3104 = vmax.f32 %v2464, %v2756
        %v3105 = vmax.f32 %v2465, %v2758
        %v3106 = vmax.f32 %v2466, %v2760
        %v3107 = vmax.f32 %v2467, %v2762
        %v3108 = vmax.f32 %v2468, %v2764
        %v3109 = vmax.f32 %v2469, %v2766
        %v3110 = vmax.f32 %v2470, %v2768
        %v3111 = vmax.f32 %v2471, %v2770
        %v3112 = vmax.f32 %v2472, %v2772
        %v3113 = vmax.f32 %v2473, %v2774
        %v3114 = vmax.f32 %v2474, %v2776
        %v3115 = vmax.f32 %v2475, %v2778
        %v3116 = vmax.f32 %v2476, %v2780
        %v3117 = vmax.f32 %v2477, %v2782
        %v3118 = vmax.f32 %v2478, %v2784
        %v3119 = vmax.f32 %v2479, %v2786
        %v3120 = vmax.f32 %v2480, %v2788
        %v3121 = vmax.f32 %v2481, %v2790
        %v3122 = vmax.f32 %v2482, %v2792
        %v3123 = vmax.f32 %v2483, %v2794
        %v3124 = vmax.f32 %v2484, %v2796
        %v3125 = vmax.f32 %v2485, %v2798
        %v3126 = vmax.f32 %v2486, %v2800
        %v3127 = vmax.f32 %v2487, %v2802
        %v3128 = vmax.f32 %v2488, %v2804
        %v3129 = vmax.f32 %v2489, %v2806
        %v3130 = vmax.f32 %v2490, %v2808
        %v3131 = vmax.f32 %v2491, %v2810
        %v3132 = vmax.f32 %v2492, %v2812
        %v3133 = vmax.f32 %v2493, %v2814
        %v3134 = vmax.f32 %v2494, %v2816
        %v3135 = vmax.f32 %v2495, %v2818
        %v3136 = vmax.f32 %v2496, %v2820
        %v3137 = vmax.f32 %v2497, %v2822
        %v3138 = vmax.f32 %v2498, %v2824
        %v3139 = vmax.f32 %v2499, %v2826
        %v3140 = vmax.f32 %v2500, %v2828
        %v3141 = vmax.f32 %v2501, %v2830
        %v3142 = vmax.f32 %v2502, %v2832
        %v3143 = vmax.f32 %v2503, %v2834
        %v3144 = vmax.f32 %v2504, %v2836
        %v3145 = vmax.f32 %v2505, %v2838
        %v3146 = vmax.f32 %v2506, %v2840
        %v3147 = vmax.f32 %v2507, %v2842
        %v3148 = vmax.f32 %v2508, %v2844
        %v3149 = vmax.f32 %v2509, %v2846
        %v3150 = vmax.f32 %v2510, %v2848
        %v3151 = vmax.f32 %v2511, %v2850
        %v3152 = vmax.f32 %v2512, %v2852
        %v3153 = vmax.f32 %v2513, %v2854
        %v3154 = vmax.f32 %v2514, %v2856
        %v3155 = vmax.f32 %v2515, %v2858
        %v3156 = vmax.f32 %v2516, %v2860
        %v3157 = vmax.f32 %v2517, %v2862
        %v3158 = vmax.f32 %v2518, %v2864
        %v3159 = vmax.f32 %v2519, %v2866
        %v3160 = vmax.f32 %v2520, %v2868
        %v3161 = vmax.f32 %v2521, %v2870
        %v3162 = vmax.f32 %v2522, %v2872
        %v3163 = vmax.f32 %v2523, %v2874
        %v3164 = vmax.f32 %v2524, %v2876
        %v3165 = vmax.f32 %v2525, %v2878
        %v3166 = vmax.f32 %v2526, %v2880
        %v3167 = vmax.f32 %v2527, %v2882
        %v3168 = vmax.f32 %v2528, %v2884
        %v3169 = vmax.f32 %v2529, %v2886
        %v3170 = vmax.f32 %v2530, %v2888
        %v3171 = vmax.f32 %v2531, %v2890
        %v3172 = vmax.f32 %v2532, %v2892
        %v3173 = vmax.f32 %v2533, %v2894
        %v3174 = vmax.f32 %v2534, %v2896
        %v3175 = vmax.f32 %v2535, %v2898
        %v3176 = vmax.f32 %v2536, %v2900
        %v3177 = vmax.f32 %v2537, %v2902
        %v3178 = vmax.f32 %v2538, %v2904
        %v3179 = vmax.f32 %v2539, %v2906
        %v3180 = vmax.f32 %v2540, %v2908
        %v3181 = vmax.f32 %v2541, %v2910
        %v3182 = vmax.f32 %v2542, %v2912
        %v3183 = vmax.f32 %v2543, %v2914
        %v3184 = vmax.f32 %v2544, %v2916
        %v3185 = vmax.f32 %v2545, %v2918
        %v3186 = vmax.f32 %v2546, %v2920
        %v3187 = vmax.f32 %v2547, %v2922
        %v3188 = vmax.f32 %v2548, %v2924
        %v3189 = vmax.f32 %v2549, %v2926
        %v3190 = vmax.f32 %v2550, %v2928
        %v3191 = vmax.f32 %v2551, %v2930
        %v3192 = vmax.f32 %v2552, %v2932
        %v3193 = vmax.f32 %v2553, %v2934
        %v3194 = vmax.f32 %v2554, %v2936
        %v3195 = vmax.f32 %v2555, %v2938
        %v3196 = vmax.f32 %v2556, %v2940
        %v3197 = vld [vmem:[%s2] sm:$0x1]
        %v3199 = vperm.slane %v3197, 0
        %v3201 = vadd.f32 %v3069, %v3199
        %v3202 = vadd.f32 %v3070, %v3199
        %v3203 = vadd.f32 %v3071, %v3199
        %v3204 = vadd.f32 %v3072, %v3199
        %v3205 = vadd.f32 %v3073, %v3199
        %v3206 = vadd.f32 %v3074, %v3199
        %v3207 = vadd.f32 %v3075, %v3199
        %v3208 = vadd.f32 %v3076, %v3199
        %v3209 = vadd.f32 %v3077, %v3199
        %v3210 = vadd.f32 %v3078, %v3199
        %v3211 = vadd.f32 %v3079, %v3199
        %v3212 = vadd.f32 %v3080, %v3199
        %v3213 = vadd.f32 %v3081, %v3199
        %v3214 = vadd.f32 %v3082, %v3199
        %v3215 = vadd.f32 %v3083, %v3199
        %v3216 = vadd.f32 %v3084, %v3199
        %v3217 = vadd.f32 %v3085, %v3199
        %v3218 = vadd.f32 %v3086, %v3199
        %v3219 = vadd.f32 %v3087, %v3199
        %v3220 = vadd.f32 %v3088, %v3199
        %v3221 = vadd.f32 %v3089, %v3199
        %v3222 = vadd.f32 %v3090, %v3199
        %v3223 = vadd.f32 %v3091, %v3199
        %v3224 = vadd.f32 %v3092, %v3199
        %v3225 = vadd.f32 %v3093, %v3199
        %v3226 = vadd.f32 %v3094, %v3199
        %v3227 = vadd.f32 %v3095, %v3199
        %v3228 = vadd.f32 %v3096, %v3199
        %v3229 = vadd.f32 %v3097, %v3199
        %v3230 = vadd.f32 %v3098, %v3199
        %v3231 = vadd.f32 %v3099, %v3199
        %v3232 = vadd.f32 %v3100, %v3199
        %v3233 = vadd.f32 %v3101, %v3199
        %v3234 = vadd.f32 %v3102, %v3199
        %v3235 = vadd.f32 %v3103, %v3199
        %v3236 = vadd.f32 %v3104, %v3199
        %v3237 = vadd.f32 %v3105, %v3199
        %v3238 = vadd.f32 %v3106, %v3199
        %v3239 = vadd.f32 %v3107, %v3199
        %v3240 = vadd.f32 %v3108, %v3199
        %v3241 = vadd.f32 %v3109, %v3199
        %v3242 = vadd.f32 %v3110, %v3199
        %v3243 = vadd.f32 %v3111, %v3199
        %v3244 = vadd.f32 %v3112, %v3199
        %v3245 = vadd.f32 %v3113, %v3199
        %v3246 = vadd.f32 %v3114, %v3199
        %v3247 = vadd.f32 %v3115, %v3199
        %v3248 = vadd.f32 %v3116, %v3199
        %v3249 = vadd.f32 %v3117, %v3199
        %v3250 = vadd.f32 %v3118, %v3199
        %v3251 = vadd.f32 %v3119, %v3199
        %v3252 = vadd.f32 %v3120, %v3199
        %v3253 = vadd.f32 %v3121, %v3199
        %v3254 = vadd.f32 %v3122, %v3199
        %v3255 = vadd.f32 %v3123, %v3199
        %v3256 = vadd.f32 %v3124, %v3199
        %v3257 = vadd.f32 %v3125, %v3199
        %v3258 = vadd.f32 %v3126, %v3199
        %v3259 = vadd.f32 %v3127, %v3199
        %v3260 = vadd.f32 %v3128, %v3199
        %v3261 = vadd.f32 %v3129, %v3199
        %v3262 = vadd.f32 %v3130, %v3199
        %v3263 = vadd.f32 %v3131, %v3199
        %v3264 = vadd.f32 %v3132, %v3199
        %v3265 = vadd.f32 %v3133, %v3199
        %v3266 = vadd.f32 %v3134, %v3199
        %v3267 = vadd.f32 %v3135, %v3199
        %v3268 = vadd.f32 %v3136, %v3199
        %v3269 = vadd.f32 %v3137, %v3199
        %v3270 = vadd.f32 %v3138, %v3199
        %v3271 = vadd.f32 %v3139, %v3199
        %v3272 = vadd.f32 %v3140, %v3199
        %v3273 = vadd.f32 %v3141, %v3199
        %v3274 = vadd.f32 %v3142, %v3199
        %v3275 = vadd.f32 %v3143, %v3199
        %v3276 = vadd.f32 %v3144, %v3199
        %v3277 = vadd.f32 %v3145, %v3199
        %v3278 = vadd.f32 %v3146, %v3199
        %v3279 = vadd.f32 %v3147, %v3199
        %v3280 = vadd.f32 %v3148, %v3199
        %v3281 = vadd.f32 %v3149, %v3199
        %v3282 = vadd.f32 %v3150, %v3199
        %v3283 = vadd.f32 %v3151, %v3199
        %v3284 = vadd.f32 %v3152, %v3199
        %v3285 = vadd.f32 %v3153, %v3199
        %v3286 = vadd.f32 %v3154, %v3199
        %v3287 = vadd.f32 %v3155, %v3199
        %v3288 = vadd.f32 %v3156, %v3199
        %v3289 = vadd.f32 %v3157, %v3199
        %v3290 = vadd.f32 %v3158, %v3199
        %v3291 = vadd.f32 %v3159, %v3199
        %v3292 = vadd.f32 %v3160, %v3199
        %v3293 = vadd.f32 %v3161, %v3199
        %v3294 = vadd.f32 %v3162, %v3199
        %v3295 = vadd.f32 %v3163, %v3199
        %v3296 = vadd.f32 %v3164, %v3199
        %v3297 = vadd.f32 %v3165, %v3199
        %v3298 = vadd.f32 %v3166, %v3199
        %v3299 = vadd.f32 %v3167, %v3199
        %v3300 = vadd.f32 %v3168, %v3199
        %v3301 = vadd.f32 %v3169, %v3199
        %v3302 = vadd.f32 %v3170, %v3199
        %v3303 = vadd.f32 %v3171, %v3199
        %v3304 = vadd.f32 %v3172, %v3199
        %v3305 = vadd.f32 %v3173, %v3199
        %v3306 = vadd.f32 %v3174, %v3199
        %v3307 = vadd.f32 %v3175, %v3199
        %v3308 = vadd.f32 %v3176, %v3199
        %v3309 = vadd.f32 %v3177, %v3199
        %v3310 = vadd.f32 %v3178, %v3199
        %v3311 = vadd.f32 %v3179, %v3199
        %v3312 = vadd.f32 %v3180, %v3199
        %v3313 = vadd.f32 %v3181, %v3199
        %v3314 = vadd.f32 %v3182, %v3199
        %v3315 = vadd.f32 %v3183, %v3199
        %v3316 = vadd.f32 %v3184, %v3199
        %v3317 = vadd.f32 %v3185, %v3199
        %v3318 = vadd.f32 %v3186, %v3199
        %v3319 = vadd.f32 %v3187, %v3199
        %v3320 = vadd.f32 %v3188, %v3199
        %v3321 = vadd.f32 %v3189, %v3199
        %v3322 = vadd.f32 %v3190, %v3199
        %v3323 = vadd.f32 %v3191, %v3199
        %v3324 = vadd.f32 %v3192, %v3199
        %v3325 = vadd.f32 %v3193, %v3199
        %v3326 = vadd.f32 %v3194, %v3199
        %v3327 = vadd.f32 %v3195, %v3199
        %v3328 = vadd.f32 %v3196, %v3199
        %v3329 = vmax.f32 %v3201, 0.0
        %v3330 = vmax.f32 %v3202, 0.0
        %v3331 = vmax.f32 %v3203, 0.0
        %v3332 = vmax.f32 %v3204, 0.0
        %v3333 = vmax.f32 %v3205, 0.0
        %v3334 = vmax.f32 %v3206, 0.0
        %v3335 = vmax.f32 %v3207, 0.0
        %v3336 = vmax.f32 %v3208, 0.0
        %v3337 = vmax.f32 %v3209, 0.0
        %v3338 = vmax.f32 %v3210, 0.0
        %v3339 = vmax.f32 %v3211, 0.0
        %v3340 = vmax.f32 %v3212, 0.0
        %v3341 = vmax.f32 %v3213, 0.0
        %v3342 = vmax.f32 %v3214, 0.0
        %v3343 = vmax.f32 %v3215, 0.0
        %v3344 = vmax.f32 %v3216, 0.0
        %v3345 = vmax.f32 %v3217, 0.0
        %v3346 = vmax.f32 %v3218, 0.0
        %v3347 = vmax.f32 %v3219, 0.0
        %v3348 = vmax.f32 %v3220, 0.0
        %v3349 = vmax.f32 %v3221, 0.0
        %v3350 = vmax.f32 %v3222, 0.0
        %v3351 = vmax.f32 %v3223, 0.0
        %v3352 = vmax.f32 %v3224, 0.0
        %v3353 = vmax.f32 %v3225, 0.0
        %v3354 = vmax.f32 %v3226, 0.0
        %v3355 = vmax.f32 %v3227, 0.0
        %v3356 = vmax.f32 %v3228, 0.0
        %v3357 = vmax.f32 %v3229, 0.0
        %v3358 = vmax.f32 %v3230, 0.0
        %v3359 = vmax.f32 %v3231, 0.0
        %v3360 = vmax.f32 %v3232, 0.0
        %v3361 = vmax.f32 %v3233, 0.0
        %v3362 = vmax.f32 %v3234, 0.0
        %v3363 = vmax.f32 %v3235, 0.0
        %v3364 = vmax.f32 %v3236, 0.0
        %v3365 = vmax.f32 %v3237, 0.0
        %v3366 = vmax.f32 %v3238, 0.0
        %v3367 = vmax.f32 %v3239, 0.0
        %v3368 = vmax.f32 %v3240, 0.0
        %v3369 = vmax.f32 %v3241, 0.0
        %v3370 = vmax.f32 %v3242, 0.0
        %v3371 = vmax.f32 %v3243, 0.0
        %v3372 = vmax.f32 %v3244, 0.0
        %v3373 = vmax.f32 %v3245, 0.0
        %v3374 = vmax.f32 %v3246, 0.0
        %v3375 = vmax.f32 %v3247, 0.0
        %v3376 = vmax.f32 %v3248, 0.0
        %v3377 = vmax.f32 %v3249, 0.0
        %v3378 = vmax.f32 %v3250, 0.0
        %v3379 = vmax.f32 %v3251, 0.0
        %v3380 = vmax.f32 %v3252, 0.0
        %v3381 = vmax.f32 %v3253, 0.0
        %v3382 = vmax.f32 %v3254, 0.0
        %v3383 = vmax.f32 %v3255, 0.0
        %v3384 = vmax.f32 %v3256, 0.0
        %v3385 = vmax.f32 %v3257, 0.0
        %v3386 = vmax.f32 %v3258, 0.0
        %v3387 = vmax.f32 %v3259, 0.0
        %v3388 = vmax.f32 %v3260, 0.0
        %v3389 = vmax.f32 %v3261, 0.0
        %v3390 = vmax.f32 %v3262, 0.0
        %v3391 = vmax.f32 %v3263, 0.0
        %v3392 = vmax.f32 %v3264, 0.0
        %v3393 = vmax.f32 %v3265, 0.0
        %v3394 = vmax.f32 %v3266, 0.0
        %v3395 = vmax.f32 %v3267, 0.0
        %v3396 = vmax.f32 %v3268, 0.0
        %v3397 = vmax.f32 %v3269, 0.0
        %v3398 = vmax.f32 %v3270, 0.0
        %v3399 = vmax.f32 %v3271, 0.0
        %v3400 = vmax.f32 %v3272, 0.0
        %v3401 = vmax.f32 %v3273, 0.0
        %v3402 = vmax.f32 %v3274, 0.0
        %v3403 = vmax.f32 %v3275, 0.0
        %v3404 = vmax.f32 %v3276, 0.0
        %v3405 = vmax.f32 %v3277, 0.0
        %v3406 = vmax.f32 %v3278, 0.0
        %v3407 = vmax.f32 %v3279, 0.0
        %v3408 = vmax.f32 %v3280, 0.0
        %v3409 = vmax.f32 %v3281, 0.0
        %v3410 = vmax.f32 %v3282, 0.0
        %v3411 = vmax.f32 %v3283, 0.0
        %v3412 = vmax.f32 %v3284, 0.0
        %v3413 = vmax.f32 %v3285, 0.0
        %v3414 = vmax.f32 %v3286, 0.0
        %v3415 = vmax.f32 %v3287, 0.0
        %v3416 = vmax.f32 %v3288, 0.0
        %v3417 = vmax.f32 %v3289, 0.0
        %v3418 = vmax.f32 %v3290, 0.0
        %v3419 = vmax.f32 %v3291, 0.0
        %v3420 = vmax.f32 %v3292, 0.0
        %v3421 = vmax.f32 %v3293, 0.0
        %v3422 = vmax.f32 %v3294, 0.0
        %v3423 = vmax.f32 %v3295, 0.0
        %v3424 = vmax.f32 %v3296, 0.0
        %v3425 = vmax.f32 %v3297, 0.0
        %v3426 = vmax.f32 %v3298, 0.0
        %v3427 = vmax.f32 %v3299, 0.0
        %v3428 = vmax.f32 %v3300, 0.0
        %v3429 = vmax.f32 %v3301, 0.0
        %v3430 = vmax.f32 %v3302, 0.0
        %v3431 = vmax.f32 %v3303, 0.0
        %v3432 = vmax.f32 %v3304, 0.0
        %v3433 = vmax.f32 %v3305, 0.0
        %v3434 = vmax.f32 %v3306, 0.0
        %v3435 = vmax.f32 %v3307, 0.0
        %v3436 = vmax.f32 %v3308, 0.0
        %v3437 = vmax.f32 %v3309, 0.0
        %v3438 = vmax.f32 %v3310, 0.0
        %v3439 = vmax.f32 %v3311, 0.0
        %v3440 = vmax.f32 %v3312, 0.0
        %v3441 = vmax.f32 %v3313, 0.0
        %v3442 = vmax.f32 %v3314, 0.0
        %v3443 = vmax.f32 %v3315, 0.0
        %v3444 = vmax.f32 %v3316, 0.0
        %v3445 = vmax.f32 %v3317, 0.0
        %v3446 = vmax.f32 %v3318, 0.0
        %v3447 = vmax.f32 %v3319, 0.0
        %v3448 = vmax.f32 %v3320, 0.0
        %v3449 = vmax.f32 %v3321, 0.0
        %v3450 = vmax.f32 %v3322, 0.0
        %v3451 = vmax.f32 %v3323, 0.0
        %v3452 = vmax.f32 %v3324, 0.0
        %v3453 = vmax.f32 %v3325, 0.0
        %v3454 = vmax.f32 %v3326, 0.0
        %v3455 = vmax.f32 %v3327, 0.0
        %v3456 = vmax.f32 %v3328, 0.0
        %v3457 = vpack.c.bf16 %v3329, %v3329
        %v3458 = vpack.c.bf16 %v3330, %v3330
        %v3459 = vpack.c.bf16 %v3331, %v3331
        %v3460 = vpack.c.bf16 %v3332, %v3332
        %v3461 = vpack.c.bf16 %v3333, %v3333
        %v3462 = vpack.c.bf16 %v3334, %v3334
        %v3463 = vpack.c.bf16 %v3335, %v3335
        %v3464 = vpack.c.bf16 %v3336, %v3336
        %v3465 = vpack.c.bf16 %v3337, %v3337
        %v3466 = vpack.c.bf16 %v3338, %v3338
        %v3467 = vpack.c.bf16 %v3339, %v3339
        %v3468 = vpack.c.bf16 %v3340, %v3340
        %v3469 = vpack.c.bf16 %v3341, %v3341
        %v3470 = vpack.c.bf16 %v3342, %v3342
        %v3471 = vpack.c.bf16 %v3343, %v3343
        %v3472 = vpack.c.bf16 %v3344, %v3344
        %v3473 = vpack.c.bf16 %v3345, %v3345
        %v3474 = vpack.c.bf16 %v3346, %v3346
        %v3475 = vpack.c.bf16 %v3347, %v3347
        %v3476 = vpack.c.bf16 %v3348, %v3348
        %v3477 = vpack.c.bf16 %v3349, %v3349
        %v3478 = vpack.c.bf16 %v3350, %v3350
        %v3479 = vpack.c.bf16 %v3351, %v3351
        %v3480 = vpack.c.bf16 %v3352, %v3352
        %v3481 = vpack.c.bf16 %v3353, %v3353
        %v3482 = vpack.c.bf16 %v3354, %v3354
        %v3483 = vpack.c.bf16 %v3355, %v3355
        %v3484 = vpack.c.bf16 %v3356, %v3356
        %v3485 = vpack.c.bf16 %v3357, %v3357
        %v3486 = vpack.c.bf16 %v3358, %v3358
        %v3487 = vpack.c.bf16 %v3359, %v3359
        %v3488 = vpack.c.bf16 %v3360, %v3360
        %v3489 = vpack.c.bf16 %v3361, %v3361
        %v3490 = vpack.c.bf16 %v3362, %v3362
        %v3491 = vpack.c.bf16 %v3363, %v3363
        %v3492 = vpack.c.bf16 %v3364, %v3364
        %v3493 = vpack.c.bf16 %v3365, %v3365
        %v3494 = vpack.c.bf16 %v3366, %v3366
        %v3495 = vpack.c.bf16 %v3367, %v3367
        %v3496 = vpack.c.bf16 %v3368, %v3368
        %v3497 = vpack.c.bf16 %v3369, %v3369
        %v3498 = vpack.c.bf16 %v3370, %v3370
        %v3499 = vpack.c.bf16 %v3371, %v3371
        %v3500 = vpack.c.bf16 %v3372, %v3372
        %v3501 = vpack.c.bf16 %v3373, %v3373
        %v3502 = vpack.c.bf16 %v3374, %v3374
        %v3503 = vpack.c.bf16 %v3375, %v3375
        %v3504 = vpack.c.bf16 %v3376, %v3376
        %v3505 = vpack.c.bf16 %v3377, %v3377
        %v3506 = vpack.c.bf16 %v3378, %v3378
        %v3507 = vpack.c.bf16 %v3379, %v3379
        %v3508 = vpack.c.bf16 %v3380, %v3380
        %v3509 = vpack.c.bf16 %v3381, %v3381
        %v3510 = vpack.c.bf16 %v3382, %v3382
        %v3511 = vpack.c.bf16 %v3383, %v3383
        %v3512 = vpack.c.bf16 %v3384, %v3384
        %v3513 = vpack.c.bf16 %v3385, %v3385
        %v3514 = vpack.c.bf16 %v3386, %v3386
        %v3515 = vpack.c.bf16 %v3387, %v3387
        %v3516 = vpack.c.bf16 %v3388, %v3388
        %v3517 = vpack.c.bf16 %v3389, %v3389
        %v3518 = vpack.c.bf16 %v3390, %v3390
        %v3519 = vpack.c.bf16 %v3391, %v3391
        %v3520 = vpack.c.bf16 %v3392, %v3392
        %v3521 = vpack.c.bf16 %v3393, %v3393
        %v3522 = vpack.c.bf16 %v3394, %v3394
        %v3523 = vpack.c.bf16 %v3395, %v3395
        %v3524 = vpack.c.bf16 %v3396, %v3396
        %v3525 = vpack.c.bf16 %v3397, %v3397
        %v3526 = vpack.c.bf16 %v3398, %v3398
        %v3527 = vpack.c.bf16 %v3399, %v3399
        %v3528 = vpack.c.bf16 %v3400, %v3400
        %v3529 = vpack.c.bf16 %v3401, %v3401
        %v3530 = vpack.c.bf16 %v3402, %v3402
        %v3531 = vpack.c.bf16 %v3403, %v3403
        %v3532 = vpack.c.bf16 %v3404, %v3404
        %v3533 = vpack.c.bf16 %v3405, %v3405
        %v3534 = vpack.c.bf16 %v3406, %v3406
        %v3535 = vpack.c.bf16 %v3407, %v3407
        %v3536 = vpack.c.bf16 %v3408, %v3408
        %v3537 = vpack.c.bf16 %v3409, %v3409
        %v3538 = vpack.c.bf16 %v3410, %v3410
        %v3539 = vpack.c.bf16 %v3411, %v3411
        %v3540 = vpack.c.bf16 %v3412, %v3412
        %v3541 = vpack.c.bf16 %v3413, %v3413
        %v3542 = vpack.c.bf16 %v3414, %v3414
        %v3543 = vpack.c.bf16 %v3415, %v3415
        %v3544 = vpack.c.bf16 %v3416, %v3416
        %v3545 = vpack.c.bf16 %v3417, %v3417
        %v3546 = vpack.c.bf16 %v3418, %v3418
        %v3547 = vpack.c.bf16 %v3419, %v3419
        %v3548 = vpack.c.bf16 %v3420, %v3420
        %v3549 = vpack.c.bf16 %v3421, %v3421
        %v3550 = vpack.c.bf16 %v3422, %v3422
        %v3551 = vpack.c.bf16 %v3423, %v3423
        %v3552 = vpack.c.bf16 %v3424, %v3424
        %v3553 = vpack.c.bf16 %v3425, %v3425
        %v3554 = vpack.c.bf16 %v3426, %v3426
        %v3555 = vpack.c.bf16 %v3427, %v3427
        %v3556 = vpack.c.bf16 %v3428, %v3428
        %v3557 = vpack.c.bf16 %v3429, %v3429
        %v3558 = vpack.c.bf16 %v3430, %v3430
        %v3559 = vpack.c.bf16 %v3431, %v3431
        %v3560 = vpack.c.bf16 %v3432, %v3432
        %v3561 = vpack.c.bf16 %v3433, %v3433
        %v3562 = vpack.c.bf16 %v3434, %v3434
        %v3563 = vpack.c.bf16 %v3435, %v3435
        %v3564 = vpack.c.bf16 %v3436, %v3436
        %v3565 = vpack.c.bf16 %v3437, %v3437
        %v3566 = vpack.c.bf16 %v3438, %v3438
        %v3567 = vpack.c.bf16 %v3439, %v3439
        %v3568 = vpack.c.bf16 %v3440, %v3440
        %v3569 = vpack.c.bf16 %v3441, %v3441
        %v3570 = vpack.c.bf16 %v3442, %v3442
        %v3571 = vpack.c.bf16 %v3443, %v3443
        %v3572 = vpack.c.bf16 %v3444, %v3444
        %v3573 = vpack.c.bf16 %v3445, %v3445
        %v3574 = vpack.c.bf16 %v3446, %v3446
        %v3575 = vpack.c.bf16 %v3447, %v3447
        %v3576 = vpack.c.bf16 %v3448, %v3448
        %v3577 = vpack.c.bf16 %v3449, %v3449
        %v3578 = vpack.c.bf16 %v3450, %v3450
        %v3579 = vpack.c.bf16 %v3451, %v3451
        %v3580 = vpack.c.bf16 %v3452, %v3452
        %v3581 = vpack.c.bf16 %v3453, %v3453
        %v3582 = vpack.c.bf16 %v3454, %v3454
        %v3583 = vpack.c.bf16 %v3455, %v3455
        %v3584 = vpack.c.bf16 %v3456, %v3456
        %v3587 = vunpack.c.l.b16 %v3475
        %v3588 = vunpack.c.l.b16 %v3476
        %v3589 = vpack.c.b16 %v3588, %v3587
        %v3592 = vunpack.c.l.b16 %v3479
        %v3593 = vunpack.c.l.b16 %v3480
        %v3594 = vpack.c.b16 %v3593, %v3592
        %v3597 = vunpack.c.l.b16 %v3483
        %v3598 = vunpack.c.l.b16 %v3484
        %v3599 = vpack.c.b16 %v3598, %v3597
        %v3602 = vunpack.c.l.b16 %v3507
        %v3603 = vunpack.c.l.b16 %v3508
        %v3604 = vpack.c.b16 %v3603, %v3602
        %v3607 = vunpack.c.l.b16 %v3511
        %v3608 = vunpack.c.l.b16 %v3512
        %v3609 = vpack.c.b16 %v3608, %v3607
        %v3612 = vunpack.c.l.b16 %v3515
        %v3613 = vunpack.c.l.b16 %v3516
        %v3614 = vpack.c.b16 %v3613, %v3612
        %v3617 = vunpack.c.l.b16 %v3539
        %v3618 = vunpack.c.l.b16 %v3540
        %v3619 = vpack.c.b16 %v3618, %v3617
        %v3622 = vunpack.c.l.b16 %v3543
        %v3623 = vunpack.c.l.b16 %v3544
        %v3624 = vpack.c.b16 %v3623, %v3622
        %v3627 = vunpack.c.l.b16 %v3547
        %v3628 = vunpack.c.l.b16 %v3548
        %v3629 = vpack.c.b16 %v3628, %v3627
        %v3632 = vunpack.c.l.b16 %v3473
        %v3633 = vunpack.c.l.b16 %v3474
        %v3634 = vpack.c.b16 %v3633, %v3632
        %v3637 = vunpack.c.l.b16 %v3477
        %v3638 = vunpack.c.l.b16 %v3478
        %v3639 = vpack.c.b16 %v3638, %v3637
        %v3642 = vunpack.c.l.b16 %v3481
        %v3643 = vunpack.c.l.b16 %v3482
        %v3644 = vpack.c.b16 %v3643, %v3642
        %v3647 = vunpack.c.l.b16 %v3485
        %v3648 = vunpack.c.l.b16 %v3486
        %v3649 = vpack.c.b16 %v3648, %v3647
        %v3652 = vunpack.c.l.b16 %v3505
        %v3653 = vunpack.c.l.b16 %v3506
        %v3654 = vpack.c.b16 %v3653, %v3652
        %v3657 = vunpack.c.l.b16 %v3509
        %v3658 = vunpack.c.l.b16 %v3510
        %v3659 = vpack.c.b16 %v3658, %v3657
        %v3662 = vunpack.c.l.b16 %v3513
        %v3663 = vunpack.c.l.b16 %v3514
        %v3664 = vpack.c.b16 %v3663, %v3662
        %v3667 = vunpack.c.l.b16 %v3517
        %v3668 = vunpack.c.l.b16 %v3518
        %v3669 = vpack.c.b16 %v3668, %v3667
        %v3672 = vunpack.c.l.b16 %v3537
        %v3673 = vunpack.c.l.b16 %v3538
        %v3674 = vpack.c.b16 %v3673, %v3672
        %v3677 = vunpack.c.l.b16 %v3541
        %v3678 = vunpack.c.l.b16 %v3542
        %v3679 = vpack.c.b16 %v3678, %v3677
        %v3682 = vunpack.c.l.b16 %v3545
        %v3683 = vunpack.c.l.b16 %v3546
        %v3684 = vpack.c.b16 %v3683, %v3682
        %v3687 = vunpack.c.l.b16 %v3549
        %v3688 = vunpack.c.l.b16 %v3550
        %v3689 = vpack.c.b16 %v3688, %v3687
        %v3692 = vunpack.c.l.b16 %v3487
        %v3693 = vunpack.c.l.b16 %v3488
        %v3694 = vpack.c.b16 %v3693, %v3692
        %v3697 = vunpack.c.l.b16 %v3519
        %v3698 = vunpack.c.l.b16 %v3520
        %v3699 = vpack.c.b16 %v3698, %v3697
        %v3702 = vunpack.c.l.b16 %v3551
        %v3703 = vunpack.c.l.b16 %v3552
        %v3704 = vpack.c.b16 %v3703, %v3702
        %v3707 = vunpack.c.l.b16 %v3459
        %v3708 = vunpack.c.l.b16 %v3460
        %v3709 = vpack.c.b16 %v3708, %v3707
        %v3712 = vunpack.c.l.b16 %v3463
        %v3713 = vunpack.c.l.b16 %v3464
        %v3714 = vpack.c.b16 %v3713, %v3712
        %v3717 = vunpack.c.l.b16 %v3467
        %v3718 = vunpack.c.l.b16 %v3468
        %v3719 = vpack.c.b16 %v3718, %v3717
        %v3722 = vunpack.c.l.b16 %v3491
        %v3723 = vunpack.c.l.b16 %v3492
        %v3724 = vpack.c.b16 %v3723, %v3722
        %v3727 = vunpack.c.l.b16 %v3495
        %v3728 = vunpack.c.l.b16 %v3496
        %v3729 = vpack.c.b16 %v3728, %v3727
        %v3732 = vunpack.c.l.b16 %v3499
        %v3733 = vunpack.c.l.b16 %v3500
        %v3734 = vpack.c.b16 %v3733, %v3732
        %v3737 = vunpack.c.l.b16 %v3523
        %v3738 = vunpack.c.l.b16 %v3524
        %v3739 = vpack.c.b16 %v3738, %v3737
        %v3742 = vunpack.c.l.b16 %v3527
        %v3743 = vunpack.c.l.b16 %v3528
        %v3744 = vpack.c.b16 %v3743, %v3742
        %v3747 = vunpack.c.l.b16 %v3531
        %v3748 = vunpack.c.l.b16 %v3532
        %v3749 = vpack.c.b16 %v3748, %v3747
        %v3752 = vunpack.c.l.b16 %v3555
        %v3753 = vunpack.c.l.b16 %v3556
        %v3754 = vpack.c.b16 %v3753, %v3752
        %v3757 = vunpack.c.l.b16 %v3559
        %v3758 = vunpack.c.l.b16 %v3560
        %v3759 = vpack.c.b16 %v3758, %v3757
        %v3762 = vunpack.c.l.b16 %v3563
        %v3763 = vunpack.c.l.b16 %v3564
        %v3764 = vpack.c.b16 %v3763, %v3762
        %v3767 = vunpack.c.l.b16 %v3457
        %v3768 = vunpack.c.l.b16 %v3458
        %v3769 = vpack.c.b16 %v3768, %v3767
        %v3772 = vunpack.c.l.b16 %v3461
        %v3773 = vunpack.c.l.b16 %v3462
        %v3774 = vpack.c.b16 %v3773, %v3772
        %v3777 = vunpack.c.l.b16 %v3465
        %v3778 = vunpack.c.l.b16 %v3466
        %v3779 = vpack.c.b16 %v3778, %v3777
        %v3782 = vunpack.c.l.b16 %v3469
        %v3783 = vunpack.c.l.b16 %v3470
        %v3784 = vpack.c.b16 %v3783, %v3782
        %v3787 = vunpack.c.l.b16 %v3489
        %v3788 = vunpack.c.l.b16 %v3490
        %v3789 = vpack.c.b16 %v3788, %v3787
        %v3792 = vunpack.c.l.b16 %v3493
        %v3793 = vunpack.c.l.b16 %v3494
        %v3794 = vpack.c.b16 %v3793, %v3792
        %v3797 = vunpack.c.l.b16 %v3497
        %v3798 = vunpack.c.l.b16 %v3498
        %v3799 = vpack.c.b16 %v3798, %v3797
        %v3802 = vunpack.c.l.b16 %v3501
        %v3803 = vunpack.c.l.b16 %v3502
        %v3804 = vpack.c.b16 %v3803, %v3802
        %v3807 = vunpack.c.l.b16 %v3521
        %v3808 = vunpack.c.l.b16 %v3522
        %v3809 = vpack.c.b16 %v3808, %v3807
        %v3812 = vunpack.c.l.b16 %v3525
        %v3813 = vunpack.c.l.b16 %v3526
        %v3814 = vpack.c.b16 %v3813, %v3812
        %v3817 = vunpack.c.l.b16 %v3529
        %v3818 = vunpack.c.l.b16 %v3530
        %v3819 = vpack.c.b16 %v3818, %v3817
        %v3822 = vunpack.c.l.b16 %v3533
        %v3823 = vunpack.c.l.b16 %v3534
        %v3824 = vpack.c.b16 %v3823, %v3822
        %v3827 = vunpack.c.l.b16 %v3553
        %v3828 = vunpack.c.l.b16 %v3554
        %v3829 = vpack.c.b16 %v3828, %v3827
        %v3832 = vunpack.c.l.b16 %v3557
        %v3833 = vunpack.c.l.b16 %v3558
        %v3834 = vpack.c.b16 %v3833, %v3832
        %v3837 = vunpack.c.l.b16 %v3561
        %v3838 = vunpack.c.l.b16 %v3562
        %v3839 = vpack.c.b16 %v3838, %v3837
        %v3842 = vunpack.c.l.b16 %v3565
        %v3843 = vunpack.c.l.b16 %v3566
        %v3844 = vpack.c.b16 %v3843, %v3842
        %v3847 = vunpack.c.l.b16 %v3471
        %v3848 = vunpack.c.l.b16 %v3472
        %v3849 = vpack.c.b16 %v3848, %v3847
        %v3852 = vunpack.c.l.b16 %v3503
        %v3853 = vunpack.c.l.b16 %v3504
        %v3854 = vpack.c.b16 %v3853, %v3852
        %v3857 = vunpack.c.l.b16 %v3535
        %v3858 = vunpack.c.l.b16 %v3536
        %v3859 = vpack.c.b16 %v3858, %v3857
        %v3862 = vunpack.c.l.b16 %v3567
        %v3863 = vunpack.c.l.b16 %v3568
        %v3864 = vpack.c.b16 %v3863, %v3862
        %v3867 = vunpack.c.l.b16 %v3571
        %v3868 = vunpack.c.l.b16 %v3572
        %v3869 = vpack.c.b16 %v3868, %v3867
        %v3872 = vunpack.c.l.b16 %v3575
        %v3873 = vunpack.c.l.b16 %v3576
        %v3874 = vpack.c.b16 %v3873, %v3872
        %v3877 = vunpack.c.l.b16 %v3579
        %v3878 = vunpack.c.l.b16 %v3580
        %v3879 = vpack.c.b16 %v3878, %v3877
        %v3882 = vunpack.c.l.b16 %v3569
        %v3883 = vunpack.c.l.b16 %v3570
        %v3884 = vpack.c.b16 %v3883, %v3882
        %v3887 = vunpack.c.l.b16 %v3573
        %v3888 = vunpack.c.l.b16 %v3574
        %v3889 = vpack.c.b16 %v3888, %v3887
        %v3892 = vunpack.c.l.b16 %v3577
        %v3893 = vunpack.c.l.b16 %v3578
        %v3894 = vpack.c.b16 %v3893, %v3892
        %v3897 = vunpack.c.l.b16 %v3581
        %v3898 = vunpack.c.l.b16 %v3582
        %v3899 = vpack.c.b16 %v3898, %v3897
        %v3902 = vunpack.c.l.b16 %v3583
        %v3903 = vunpack.c.l.b16 %v3584
        %v3904 = vpack.c.b16 %v3903, %v3902
        %3906 = vrot.lane.b32.xlu0 0, 16
        %v3907 = vpop.permute.xlu0 %3906
        %3908 = vrot.lane.b32.xlu0 %v3634, 16
        %v3909 = vpop.permute.xlu0 %3908
        %3910 = vrot.lane.b32.xlu0 %v3639, 16
        %v3911 = vpop.permute.xlu0 %3910
        %3912 = vrot.lane.b32.xlu0 %v3644, 16
        %v3913 = vpop.permute.xlu0 %3912
        %3914 = vrot.lane.b32.xlu0 %v3649, 16
        %v3915 = vpop.permute.xlu0 %3914
        %3916 = vrot.lane.b32.xlu0 %v3654, 16
        %v3917 = vpop.permute.xlu0 %3916
        %3918 = vrot.lane.b32.xlu0 %v3659, 16
        %v3919 = vpop.permute.xlu0 %3918
        %3920 = vrot.lane.b32.xlu0 %v3664, 16
        %v3921 = vpop.permute.xlu0 %3920
        %3922 = vrot.lane.b32.xlu0 %v3669, 16
        %v3923 = vpop.permute.xlu0 %3922
        %3924 = vrot.lane.b32.xlu0 %v3674, 16
        %v3925 = vpop.permute.xlu0 %3924
        %3926 = vrot.lane.b32.xlu0 %v3679, 16
        %v3927 = vpop.permute.xlu0 %3926
        %3928 = vrot.lane.b32.xlu0 %v3684, 16
        %v3929 = vpop.permute.xlu0 %3928
        %3930 = vrot.lane.b32.xlu0 %v3689, 16
        %v3931 = vpop.permute.xlu0 %3930
        %3932 = vrot.lane.b32.xlu0 0, 32
        %v3933 = vpop.permute.xlu0 %3932
        %3934 = vrot.lane.b32.xlu0 %v3589, 32
        %v3935 = vpop.permute.xlu0 %3934
        %3936 = vrot.lane.b32.xlu0 %v3594, 32
        %v3937 = vpop.permute.xlu0 %3936
        %3938 = vrot.lane.b32.xlu0 %v3599, 32
        %v3939 = vpop.permute.xlu0 %3938
        %3940 = vrot.lane.b32.xlu0 %v3694, 32
        %v3941 = vpop.permute.xlu0 %3940
        %3942 = vrot.lane.b32.xlu0 %v3604, 32
        %v3943 = vpop.permute.xlu0 %3942
        %3944 = vrot.lane.b32.xlu0 %v3609, 32
        %v3945 = vpop.permute.xlu0 %3944
        %3946 = vrot.lane.b32.xlu0 %v3614, 32
        %v3947 = vpop.permute.xlu0 %3946
        %3948 = vrot.lane.b32.xlu0 %v3699, 32
        %v3949 = vpop.permute.xlu0 %3948
        %3950 = vrot.lane.b32.xlu0 %v3619, 32
        %v3951 = vpop.permute.xlu0 %3950
        %3952 = vrot.lane.b32.xlu0 %v3624, 32
        %v3953 = vpop.permute.xlu0 %3952
        %3954 = vrot.lane.b32.xlu0 %v3629, 32
        %v3955 = vpop.permute.xlu0 %3954
        %3956 = vrot.lane.b32.xlu0 %v3704, 32
        %v3957 = vpop.permute.xlu0 %3956
        %3958 = vrot.lane.b32.xlu0 0, 48
        %v3959 = vpop.permute.xlu0 %3958
        %3960 = vrot.lane.b32.xlu0 %v3709, 48
        %v3961 = vpop.permute.xlu0 %3960
        %3962 = vrot.lane.b32.xlu0 %v3714, 48
        %v3963 = vpop.permute.xlu0 %3962
        %3964 = vrot.lane.b32.xlu0 %v3719, 48
        %v3965 = vpop.permute.xlu0 %3964
        %3966 = vrot.lane.b32.xlu0 %v3724, 48
        %v3967 = vpop.permute.xlu0 %3966
        %3968 = vrot.lane.b32.xlu0 %v3729, 48
        %v3969 = vpop.permute.xlu0 %3968
        %3970 = vrot.lane.b32.xlu0 %v3734, 48
        %v3971 = vpop.permute.xlu0 %3970
        %3972 = vrot.lane.b32.xlu0 %v3739, 48
        %v3973 = vpop.permute.xlu0 %3972
        %3974 = vrot.lane.b32.xlu0 %v3744, 48
        %v3975 = vpop.permute.xlu0 %3974
        %3976 = vrot.lane.b32.xlu0 %v3749, 48
        %v3977 = vpop.permute.xlu0 %3976
        %3978 = vrot.lane.b32.xlu0 %v3754, 48
        %v3979 = vpop.permute.xlu0 %3978
        %3980 = vrot.lane.b32.xlu0 %v3759, 48
        %v3981 = vpop.permute.xlu0 %3980
        %3982 = vrot.lane.b32.xlu0 %v3764, 48
        %v3983 = vpop.permute.xlu0 %3982
        %3984 = vrot.lane.b32.xlu0 %v3769, 64
        %v3985 = vpop.permute.xlu0 %3984
        %3986 = vrot.lane.b32.xlu0 %v3774, 64
        %v3987 = vpop.permute.xlu0 %3986
        %3988 = vrot.lane.b32.xlu0 %v3779, 64
        %v3989 = vpop.permute.xlu0 %3988
        %3990 = vrot.lane.b32.xlu0 %v3784, 64
        %v3991 = vpop.permute.xlu0 %3990
        %3992 = vrot.lane.b32.xlu0 %v3789, 64
        %v3993 = vpop.permute.xlu0 %3992
        %3994 = vrot.lane.b32.xlu0 %v3794, 64
        %v3995 = vpop.permute.xlu0 %3994
        %3996 = vrot.lane.b32.xlu0 %v3799, 64
        %v3997 = vpop.permute.xlu0 %3996
        %3998 = vrot.lane.b32.xlu0 %v3804, 64
        %v3999 = vpop.permute.xlu0 %3998
        %4000 = vrot.lane.b32.xlu0 %v3809, 64
        %v4001 = vpop.permute.xlu0 %4000
        %4002 = vrot.lane.b32.xlu0 %v3814, 64
        %v4003 = vpop.permute.xlu0 %4002
        %4004 = vrot.lane.b32.xlu0 %v3819, 64
        %v4005 = vpop.permute.xlu0 %4004
        %4006 = vrot.lane.b32.xlu0 %v3824, 64
        %v4007 = vpop.permute.xlu0 %4006
        %4008 = vrot.lane.b32.xlu0 %v3829, 64
        %v4009 = vpop.permute.xlu0 %4008
        %4010 = vrot.lane.b32.xlu0 %v3834, 64
        %v4011 = vpop.permute.xlu0 %4010
        %4012 = vrot.lane.b32.xlu0 %v3839, 64
        %v4013 = vpop.permute.xlu0 %4012
        %4014 = vrot.lane.b32.xlu0 %v3844, 64
        %v4015 = vpop.permute.xlu0 %4014
        %4016 = vrot.lane.b32.xlu0 %v3709, 80
        %v4017 = vpop.permute.xlu0 %4016
        %4018 = vrot.lane.b32.xlu0 %v3714, 80
        %v4019 = vpop.permute.xlu0 %4018
        %4020 = vrot.lane.b32.xlu0 %v3719, 80
        %v4021 = vpop.permute.xlu0 %4020
        %4022 = vrot.lane.b32.xlu0 %v3849, 80
        %v4023 = vpop.permute.xlu0 %4022
        %4024 = vrot.lane.b32.xlu0 %v3724, 80
        %v4025 = vpop.permute.xlu0 %4024
        %4026 = vrot.lane.b32.xlu0 %v3729, 80
        %v4027 = vpop.permute.xlu0 %4026
        %4028 = vrot.lane.b32.xlu0 %v3734, 80
        %v4029 = vpop.permute.xlu0 %4028
        %4030 = vrot.lane.b32.xlu0 %v3854, 80
        %v4031 = vpop.permute.xlu0 %4030
        %4032 = vrot.lane.b32.xlu0 %v3739, 80
        %v4033 = vpop.permute.xlu0 %4032
        %4034 = vrot.lane.b32.xlu0 %v3744, 80
        %v4035 = vpop.permute.xlu0 %4034
        %4036 = vrot.lane.b32.xlu0 %v3749, 80
        %v4037 = vpop.permute.xlu0 %4036
        %4038 = vrot.lane.b32.xlu0 %v3859, 80
        %v4039 = vpop.permute.xlu0 %4038
        %4040 = vrot.lane.b32.xlu0 %v3754, 80
        %v4041 = vpop.permute.xlu0 %4040
        %4042 = vrot.lane.b32.xlu0 %v3759, 80
        %v4043 = vpop.permute.xlu0 %4042
        %4044 = vrot.lane.b32.xlu0 %v3764, 80
        %v4045 = vpop.permute.xlu0 %4044
        %4046 = vrot.lane.b32.xlu0 %v3864, 80
        %v4047 = vpop.permute.xlu0 %4046
        %4048 = vrot.lane.b32.xlu0 0, 96
        %v4049 = vpop.permute.xlu0 %4048
        %4050 = vrot.lane.b32.xlu0 %v3589, 96
        %v4051 = vpop.permute.xlu0 %4050
        %4052 = vrot.lane.b32.xlu0 %v3594, 96
        %v4053 = vpop.permute.xlu0 %4052
        %4054 = vrot.lane.b32.xlu0 %v3599, 96
        %v4055 = vpop.permute.xlu0 %4054
        %4056 = vrot.lane.b32.xlu0 %v3604, 96
        %v4057 = vpop.permute.xlu0 %4056
        %4058 = vrot.lane.b32.xlu0 %v3609, 96
        %v4059 = vpop.permute.xlu0 %4058
        %4060 = vrot.lane.b32.xlu0 %v3614, 96
        %v4061 = vpop.permute.xlu0 %4060
        %4062 = vrot.lane.b32.xlu0 %v3619, 96
        %v4063 = vpop.permute.xlu0 %4062
        %4064 = vrot.lane.b32.xlu0 %v3624, 96
        %v4065 = vpop.permute.xlu0 %4064
        %4066 = vrot.lane.b32.xlu0 %v3629, 96
        %v4067 = vpop.permute.xlu0 %4066
        %4068 = vrot.lane.b32.xlu0 %v3869, 96
        %v4069 = vpop.permute.xlu0 %4068
        %4070 = vrot.lane.b32.xlu0 %v3874, 96
        %v4071 = vpop.permute.xlu0 %4070
        %4072 = vrot.lane.b32.xlu0 %v3879, 96
        %v4073 = vpop.permute.xlu0 %4072
        %4074 = vrot.lane.b32.xlu0 %v3634, 112
        %v4075 = vpop.permute.xlu0 %4074
        %4076 = vrot.lane.b32.xlu0 %v3639, 112
        %v4077 = vpop.permute.xlu0 %4076
        %4078 = vrot.lane.b32.xlu0 %v3644, 112
        %v4079 = vpop.permute.xlu0 %4078
        %4080 = vrot.lane.b32.xlu0 %v3649, 112
        %v4081 = vpop.permute.xlu0 %4080
        %4082 = vrot.lane.b32.xlu0 %v3654, 112
        %v4083 = vpop.permute.xlu0 %4082
        %4084 = vrot.lane.b32.xlu0 %v3659, 112
        %v4085 = vpop.permute.xlu0 %4084
        %4086 = vrot.lane.b32.xlu0 %v3664, 112
        %v4087 = vpop.permute.xlu0 %4086
        %4088 = vrot.lane.b32.xlu0 %v3669, 112
        %v4089 = vpop.permute.xlu0 %4088
        %4090 = vrot.lane.b32.xlu0 %v3674, 112
        %v4091 = vpop.permute.xlu0 %4090
        %4092 = vrot.lane.b32.xlu0 %v3679, 112
        %v4093 = vpop.permute.xlu0 %4092
        %4094 = vrot.lane.b32.xlu0 %v3684, 112
        %v4095 = vpop.permute.xlu0 %4094
        %4096 = vrot.lane.b32.xlu0 %v3689, 112
        %v4097 = vpop.permute.xlu0 %4096
        %4098 = vrot.lane.b32.xlu0 %v3884, 112
        %v4099 = vpop.permute.xlu0 %4098
        %4100 = vrot.lane.b32.xlu0 %v3889, 112
        %v4101 = vpop.permute.xlu0 %4100
        %4102 = vrot.lane.b32.xlu0 %v3894, 112
        %v4103 = vpop.permute.xlu0 %4102
        %4104 = vrot.lane.b32.xlu0 %v3899, 112
        %v4105 = vpop.permute.xlu0 %4104
        %vm4106 = vcmask 130048
        %v4109 = vsel %vm4106, 0, %v3907
        %v4111 = vsel %vm4106, 0, %v3909
        %v4114 = vsel %vm4106, %v3589, %v3911
        %v4117 = vsel %vm4106, %v3594, %v3913
        %v4120 = vsel %vm4106, %v3599, %v3915
        %v4122 = vsel %vm4106, 0, %v3917
        %v4125 = vsel %vm4106, %v3604, %v3919
        %v4128 = vsel %vm4106, %v3609, %v3921
        %v4131 = vsel %vm4106, %v3614, %v3923
        %v4133 = vsel %vm4106, 0, %v3925
        %v4136 = vsel %vm4106, %v3619, %v3927
        %v4139 = vsel %vm4106, %v3624, %v3929
        %v4142 = vsel %vm4106, %v3629, %v3931
        %vm4143 = vcmask 261120
        %v4145 = vsel %vm4143, %v4109, %v3933
        %v4147 = vsel %vm4143, %v4111, %v3935
        %v4149 = vsel %vm4143, %v4114, %v3937
        %v4151 = vsel %vm4143, %v4117, %v3939
        %v4153 = vsel %vm4143, %v4120, %v3941
        %v4155 = vsel %vm4143, %v4122, %v3943
        %v4157 = vsel %vm4143, %v4125, %v3945
        %v4159 = vsel %vm4143, %v4128, %v3947
        %v4161 = vsel %vm4143, %v4131, %v3949
        %v4163 = vsel %vm4143, %v4133, %v3951
        %v4165 = vsel %vm4143, %v4136, %v3953
        %v4167 = vsel %vm4143, %v4139, %v3955
        %v4169 = vsel %vm4143, %v4142, %v3957
        %vm4170 = vcmask 392192
        %v4172 = vsel %vm4170, %v4145, %v3959
        %v4174 = vsel %vm4170, %v4145, %v3961
        %v4176 = vsel %vm4170, %v4145, %v3963
        %v4178 = vsel %vm4170, %v4145, %v3965
        %v4179 = vsel %vm4170, %v4147, %v3959
        %v4181 = vsel %vm4170, %v4149, %v3967
        %v4183 = vsel %vm4170, %v4151, %v3969
        %v4185 = vsel %vm4170, %v4153, %v3971
        %v4186 = vsel %vm4170, %v4155, %v3959
        %v4188 = vsel %vm4170, %v4157, %v3973
        %v4190 = vsel %vm4170, %v4159, %v3975
        %v4192 = vsel %vm4170, %v4161, %v3977
        %v4193 = vsel %vm4170, %v4163, %v3959
        %v4195 = vsel %vm4170, %v4165, %v3979
        %v4197 = vsel %vm4170, %v4167, %v3981
        %v4199 = vsel %vm4170, %v4169, %v3983
        %vm4200 = vcmask 523264
        %v4202 = vsel %vm4200, %v4172, %v3985
        %v4204 = vsel %vm4200, %v4174, %v3987
        %v4206 = vsel %vm4200, %v4176, %v3989
        %v4208 = vsel %vm4200, %v4178, %v3991
        %v4210 = vsel %vm4200, %v4179, %v3993
        %v4212 = vsel %vm4200, %v4181, %v3995
        %v4214 = vsel %vm4200, %v4183, %v3997
        %v4216 = vsel %vm4200, %v4185, %v3999
        %v4218 = vsel %vm4200, %v4186, %v4001
        %v4220 = vsel %vm4200, %v4188, %v4003
        %v4222 = vsel %vm4200, %v4190, %v4005
        %v4224 = vsel %vm4200, %v4192, %v4007
        %v4226 = vsel %vm4200, %v4193, %v4009
        %v4228 = vsel %vm4200, %v4195, %v4011
        %v4230 = vsel %vm4200, %v4197, %v4013
        %v4232 = vsel %vm4200, %v4199, %v4015
        %vm4233 = vcmask 654336
        %v4235 = vsel %vm4233, %v4202, %v4017
        %v4237 = vsel %vm4233, %v4204, %v4019
        %v4239 = vsel %vm4233, %v4206, %v4021
        %v4241 = vsel %vm4233, %v4208, %v4023
        %v4243 = vsel %vm4233, %v4210, %v4025
        %v4245 = vsel %vm4233, %v4212, %v4027
        %v4247 = vsel %vm4233, %v4214, %v4029
        %v4249 = vsel %vm4233, %v4216, %v4031
        %v4251 = vsel %vm4233, %v4218, %v4033
        %v4253 = vsel %vm4233, %v4220, %v4035
        %v4255 = vsel %vm4233, %v4222, %v4037
        %v4257 = vsel %vm4233, %v4224, %v4039
        %v4259 = vsel %vm4233, %v4226, %v4041
        %v4261 = vsel %vm4233, %v4228, %v4043
        %v4263 = vsel %vm4233, %v4230, %v4045
        %v4265 = vsel %vm4233, %v4232, %v4047
        %vm4266 = vcmask 785408
        %v4268 = vsel %vm4266, %v4235, %v4049
        %v4270 = vsel %vm4266, %v4237, %v4051
        %v4272 = vsel %vm4266, %v4239, %v4053
        %v4274 = vsel %vm4266, %v4241, %v4055
        %v4275 = vsel %vm4266, %v4243, %v4049
        %v4277 = vsel %vm4266, %v4245, %v4057
        %v4279 = vsel %vm4266, %v4247, %v4059
        %v4281 = vsel %vm4266, %v4249, %v4061
        %v4282 = vsel %vm4266, %v4251, %v4049
        %v4284 = vsel %vm4266, %v4253, %v4063
        %v4286 = vsel %vm4266, %v4255, %v4065
        %v4288 = vsel %vm4266, %v4257, %v4067
        %v4289 = vsel %vm4266, %v4259, %v4049
        %v4291 = vsel %vm4266, %v4261, %v4069
        %v4293 = vsel %vm4266, %v4263, %v4071
        %v4295 = vsel %vm4266, %v4265, %v4073
        %vm4296 = vcmask 916480
        %v4298 = vsel %vm4296, %v4268, %v4075
        %v4301 = vsel %vm4296, %v4270, %v4077
        %v4304 = vsel %vm4296, %v4272, %v4079
        %v4307 = vsel %vm4296, %v4274, %v4081
        %v4310 = vsel %vm4296, %v4275, %v4083
        %v4313 = vsel %vm4296, %v4277, %v4085
        %v4316 = vsel %vm4296, %v4279, %v4087
        %v4319 = vsel %vm4296, %v4281, %v4089
        %v4322 = vsel %vm4296, %v4282, %v4091
        %v4325 = vsel %vm4296, %v4284, %v4093
        %v4328 = vsel %vm4296, %v4286, %v4095
        %v4331 = vsel %vm4296, %v4288, %v4097
        %v4334 = vsel %vm4296, %v4289, %v4099
        %v4337 = vsel %vm4296, %v4291, %v4101
        %v4340 = vsel %vm4296, %v4293, %v4103
        %v4343 = vsel %vm4296, %v4295, %v4105
        %v4345 = vld [vmem:[%s3] sm:$0xf]
        %v4346 = vld [vmem:[%s3 + $0x4] sm:$0xf]
        %v4347 = vld [vmem:[%s3 + $0x8] sm:$0xf]
        %v4348 = vld [vmem:[%s3 + $0xc] sm:$0xf]
        %v4349 = vld [vmem:[%s3 + $0x10] sm:$0xf]
        %v4350 = vld [vmem:[%s3 + $0x14] sm:$0xf]
        %v4351 = vld [vmem:[%s3 + $0x18] sm:$0xf]
        %v4352 = vld [vmem:[%s3 + $0x1c] sm:$0xf]
        %v4353 = vld [vmem:[%s3 + $0x20] sm:$0xf]
        %v4354 = vld [vmem:[%s3 + $0x24] sm:$0xf]
        %v4355 = vld [vmem:[%s3 + $0x28] sm:$0xf]
        %v4356 = vld [vmem:[%s3 + $0x2c] sm:$0xf]
        %v4357 = vld [vmem:[%s3 + $0x30] sm:$0xf]
        %v4358 = vld [vmem:[%s3 + $0x34] sm:$0xf]
        %v4359 = vld [vmem:[%s3 + $0x38] sm:$0xf]
        %v4360 = vld [vmem:[%s3 + $0x3c] sm:$0xf]
        %v4361 = vld [vmem:[%s3 + $0x40] sm:$0xf]
        %v4362 = vld [vmem:[%s3 + $0x44] sm:$0xf]
        %v4381 = vunpack.c.l.b16 %v4345
        %v4382 = vunpack.c.l.b16 %v4346
        %v4383 = vunpack.c.l.b16 %v4347
        %v4384 = vunpack.c.l.b16 %v4348
        %v4385 = vunpack.c.l.b16 %v4349
        %v4386 = vunpack.c.l.b16 %v4350
        %v4387 = vunpack.c.l.b16 %v4351
        %v4388 = vunpack.c.l.b16 %v4352
        %v4389 = vunpack.c.l.b16 %v4353
        %v4390 = vunpack.c.l.b16 %v4354
        %v4391 = vunpack.c.l.b16 %v4355
        %v4392 = vunpack.c.l.b16 %v4356
        %v4393 = vunpack.c.l.b16 %v4357
        %v4394 = vunpack.c.l.b16 %v4358
        %v4395 = vunpack.c.l.b16 %v4359
        %v4396 = vunpack.c.l.b16 %v4360
        %v4397 = vunpack.c.l.b16 %v4361
        %v4398 = vunpack.c.l.b16 %v4362
        %v4399 = vpack.c.b16 %v4382, %v4381
        %v4400 = vpack.c.b16 %v4384, %v4383
        %v4401 = vpack.c.b16 %v4386, %v4385
        %v4402 = vpack.c.b16 %v4388, %v4387
        %v4403 = vpack.c.b16 %v4390, %v4389
        %v4404 = vpack.c.b16 %v4392, %v4391
        %v4405 = vpack.c.b16 %v4394, %v4393
        %v4406 = vpack.c.b16 %v4396, %v4395
        %v4407 = vpack.c.b16 %v4398, %v4397
        %v4417 = vsel %vm4106, %v3589, 0
        %v4419 = vsel %vm4106, %v3594, 0
        %v4421 = vsel %vm4106, %v3599, 0
        %v4424 = vsel %vm4106, %v3694, 0
        %v4426 = vsel %vm4106, %v3604, 0
        %v4428 = vsel %vm4106, %v3609, 0
        %v4430 = vsel %vm4106, %v3614, 0
        %v4433 = vsel %vm4106, %v3699, 0
        %v4435 = vsel %vm4106, %v3619, 0
        %v4437 = vsel %vm4106, %v3624, 0
        %v4439 = vsel %vm4106, %v3629, 0
        %v4442 = vsel %vm4106, %v3704, 0
        %v4445 = vsel %vm4106, %v3869, 0
        %v4448 = vsel %vm4106, %v3874, 0
        %v4451 = vsel %vm4106, %v3879, 0
        %v4454 = vsel %vm4106, %v3904, 0
        %4456 = vmatpush.bf16.msra.mxu0 %v4406
        %4457 = vmatpush.bf16.msra.mxu0 %v4405
        %4458 = vmatpush.bf16.msra.mxu0 %v4404
        %4459 = vmatpush.bf16.msra.mxu0 %v4403
        %4460 = vmatpush.bf16.msra.mxu0 %v4402
        %4461 = vmatpush.bf16.msra.mxu0 %v4401
        %4462 = vmatpush.bf16.msra.mxu0 %v4400
        %4463 = vmatpush.bf16.msra.mxu0 %v4399
        %4464 = vmatmul.bf16.gmra.mxu0 %v4298
        %v4465 = vpop.f32.mrf.mxu0
        %v4466 = vadd.f32 0.0, %v4465
        %v4467 = vpop.f32.mrf.mxu0
        %v4468 = vadd.f32 0.0, %v4467
        %4469 = vmatmul.bf16.gmra.mxu0 %v4301
        %v4470 = vpop.f32.mrf.mxu0
        %v4471 = vadd.f32 0.0, %v4470
        %v4472 = vpop.f32.mrf.mxu0
        %v4473 = vadd.f32 0.0, %v4472
        %4474 = vmatmul.bf16.gmra.mxu0 %v4304
        %v4475 = vpop.f32.mrf.mxu0
        %v4476 = vadd.f32 0.0, %v4475
        %v4477 = vpop.f32.mrf.mxu0
        %v4478 = vadd.f32 0.0, %v4477
        %4479 = vmatmul.bf16.gmra.mxu0 %v4307
        %v4480 = vpop.f32.mrf.mxu0
        %v4481 = vadd.f32 0.0, %v4480
        %v4482 = vpop.f32.mrf.mxu0
        %v4483 = vadd.f32 0.0, %v4482
        %4484 = vmatmul.bf16.gmra.mxu0 %v4310
        %v4485 = vpop.f32.mrf.mxu0
        %v4486 = vadd.f32 0.0, %v4485
        %v4487 = vpop.f32.mrf.mxu0
        %v4488 = vadd.f32 0.0, %v4487
        %4489 = vmatmul.bf16.gmra.mxu0 %v4313
        %v4490 = vpop.f32.mrf.mxu0
        %v4491 = vadd.f32 0.0, %v4490
        %v4492 = vpop.f32.mrf.mxu0
        %v4493 = vadd.f32 0.0, %v4492
        %4494 = vmatmul.bf16.gmra.mxu0 %v4316
        %v4495 = vpop.f32.mrf.mxu0
        %v4496 = vadd.f32 0.0, %v4495
        %v4497 = vpop.f32.mrf.mxu0
        %v4498 = vadd.f32 0.0, %v4497
        %4499 = vmatmul.bf16.gmra.mxu0 %v4319
        %v4500 = vpop.f32.mrf.mxu0
        %v4501 = vadd.f32 0.0, %v4500
        %v4502 = vpop.f32.mrf.mxu0
        %v4503 = vadd.f32 0.0, %v4502
        %4504 = vmatmul.bf16.gmra.mxu0 %v4322
        %v4505 = vpop.f32.mrf.mxu0
        %v4506 = vadd.f32 0.0, %v4505
        %v4507 = vpop.f32.mrf.mxu0
        %v4508 = vadd.f32 0.0, %v4507
        %4509 = vmatmul.bf16.gmra.mxu0 %v4325
        %v4510 = vpop.f32.mrf.mxu0
        %v4511 = vadd.f32 0.0, %v4510
        %v4512 = vpop.f32.mrf.mxu0
        %v4513 = vadd.f32 0.0, %v4512
        %4514 = vmatmul.bf16.gmra.mxu0 %v4328
        %v4515 = vpop.f32.mrf.mxu0
        %v4516 = vadd.f32 0.0, %v4515
        %v4517 = vpop.f32.mrf.mxu0
        %v4518 = vadd.f32 0.0, %v4517
        %4519 = vmatmul.bf16.gmra.mxu0 %v4331
        %v4520 = vpop.f32.mrf.mxu0
        %v4521 = vadd.f32 0.0, %v4520
        %v4522 = vpop.f32.mrf.mxu0
        %v4523 = vadd.f32 0.0, %v4522
        %4524 = vmatmul.bf16.gmra.mxu0 %v4334
        %v4525 = vpop.f32.mrf.mxu0
        %v4526 = vadd.f32 0.0, %v4525
        %v4527 = vpop.f32.mrf.mxu0
        %v4528 = vadd.f32 0.0, %v4527
        %4529 = vmatmul.bf16.gmra.mxu0 %v4337
        %v4530 = vpop.f32.mrf.mxu0
        %v4531 = vadd.f32 0.0, %v4530
        %v4532 = vpop.f32.mrf.mxu0
        %v4533 = vadd.f32 0.0, %v4532
        %4534 = vmatmul.bf16.gmra.mxu0 %v4340
        %v4535 = vpop.f32.mrf.mxu0
        %v4536 = vadd.f32 0.0, %v4535
        %v4537 = vpop.f32.mrf.mxu0
        %v4538 = vadd.f32 0.0, %v4537
        %4539 = vmatmul.bf16.gmra.mxu0 %v4343
        %v4540 = vpop.f32.mrf.mxu0
        %v4541 = vadd.f32 0.0, %v4540
        %v4542 = vpop.f32.mrf.mxu0
        %v4543 = vadd.f32 0.0, %v4542
        %4544 = vdwg.mxu0
        %4545 = vmatpush.bf16.msra.mxu0 0
        %4546 = vmatpush.bf16.msra.mxu0 0
        %4547 = vmatpush.bf16.msra.mxu0 0
        %4548 = vmatpush.bf16.msra.mxu0 0
        %4549 = vmatpush.bf16.msra.mxu0 0
        %4550 = vmatpush.bf16.msra.mxu0 0
        %4551 = vmatpush.bf16.msra.mxu0 0
        %4552 = vmatpush.bf16.msra.mxu0 %v4407
        %4553 = vmatmul.bf16.gmra.mxu0 %v4417
        %v4554 = vpop.f32.mrf.mxu0
        %v4555 = vadd.f32 %v4466, %v4554
        %v4556 = vpop.f32.mrf.mxu0
        %v4557 = vadd.f32 %v4468, %v4556
        %4558 = vmatmul.bf16.gmra.mxu0 %v4419
        %v4559 = vpop.f32.mrf.mxu0
        %v4560 = vadd.f32 %v4471, %v4559
        %v4561 = vpop.f32.mrf.mxu0
        %v4562 = vadd.f32 %v4473, %v4561
        %4563 = vmatmul.bf16.gmra.mxu0 %v4421
        %v4564 = vpop.f32.mrf.mxu0
        %v4565 = vadd.f32 %v4476, %v4564
        %v4566 = vpop.f32.mrf.mxu0
        %v4567 = vadd.f32 %v4478, %v4566
        %4568 = vmatmul.bf16.gmra.mxu0 %v4424
        %v4569 = vpop.f32.mrf.mxu0
        %v4570 = vadd.f32 %v4481, %v4569
        %v4571 = vpop.f32.mrf.mxu0
        %v4572 = vadd.f32 %v4483, %v4571
        %4573 = vmatmul.bf16.gmra.mxu0 %v4426
        %v4574 = vpop.f32.mrf.mxu0
        %v4575 = vadd.f32 %v4486, %v4574
        %v4576 = vpop.f32.mrf.mxu0
        %v4577 = vadd.f32 %v4488, %v4576
        %4578 = vmatmul.bf16.gmra.mxu0 %v4428
        %v4579 = vpop.f32.mrf.mxu0
        %v4580 = vadd.f32 %v4491, %v4579
        %v4581 = vpop.f32.mrf.mxu0
        %v4582 = vadd.f32 %v4493, %v4581
        %4583 = vmatmul.bf16.gmra.mxu0 %v4430
        %v4584 = vpop.f32.mrf.mxu0
        %v4585 = vadd.f32 %v4496, %v4584
        %v4586 = vpop.f32.mrf.mxu0
        %v4587 = vadd.f32 %v4498, %v4586
        %4588 = vmatmul.bf16.gmra.mxu0 %v4433
        %v4589 = vpop.f32.mrf.mxu0
        %v4590 = vadd.f32 %v4501, %v4589
        %v4591 = vpop.f32.mrf.mxu0
        %v4592 = vadd.f32 %v4503, %v4591
        %4593 = vmatmul.bf16.gmra.mxu0 %v4435
        %v4594 = vpop.f32.mrf.mxu0
        %v4595 = vadd.f32 %v4506, %v4594
        %v4596 = vpop.f32.mrf.mxu0
        %v4597 = vadd.f32 %v4508, %v4596
        %4598 = vmatmul.bf16.gmra.mxu0 %v4437
        %v4599 = vpop.f32.mrf.mxu0
        %v4600 = vadd.f32 %v4511, %v4599
        %v4601 = vpop.f32.mrf.mxu0
        %v4602 = vadd.f32 %v4513, %v4601
        %4603 = vmatmul.bf16.gmra.mxu0 %v4439
        %v4604 = vpop.f32.mrf.mxu0
        %v4605 = vadd.f32 %v4516, %v4604
        %v4606 = vpop.f32.mrf.mxu0
        %v4607 = vadd.f32 %v4518, %v4606
        %4608 = vmatmul.bf16.gmra.mxu0 %v4442
        %v4609 = vpop.f32.mrf.mxu0
        %v4610 = vadd.f32 %v4521, %v4609
        %v4611 = vpop.f32.mrf.mxu0
        %v4612 = vadd.f32 %v4523, %v4611
        %4613 = vmatmul.bf16.gmra.mxu0 %v4445
        %v4614 = vpop.f32.mrf.mxu0
        %v4615 = vadd.f32 %v4526, %v4614
        %v4616 = vpop.f32.mrf.mxu0
        %v4617 = vadd.f32 %v4528, %v4616
        %4618 = vmatmul.bf16.gmra.mxu0 %v4448
        %v4619 = vpop.f32.mrf.mxu0
        %v4620 = vadd.f32 %v4531, %v4619
        %v4621 = vpop.f32.mrf.mxu0
        %v4622 = vadd.f32 %v4533, %v4621
        %4623 = vmatmul.bf16.gmra.mxu0 %v4451
        %v4624 = vpop.f32.mrf.mxu0
        %v4625 = vadd.f32 %v4536, %v4624
        %v4626 = vpop.f32.mrf.mxu0
        %v4627 = vadd.f32 %v4538, %v4626
        %4628 = vmatmul.bf16.gmra.mxu0 %v4454
        %v4629 = vpop.f32.mrf.mxu0
        %v4630 = vadd.f32 %v4541, %v4629
        %v4631 = vpop.f32.mrf.mxu0
        %v4632 = vadd.f32 %v4543, %v4631
        %4633 = vdwg.mxu0
        %v4634 = vmax.f32 %v4555, %v4560
        %v4635 = vmax.f32 %v4557, %v4562
        %v4636 = vmax.f32 %v4575, %v4580
        %v4637 = vmax.f32 %v4577, %v4582
        %v4638 = vmax.f32 %v4634, %v4636
        %v4639 = vmax.f32 %v4635, %v4637
        %v4640 = vmax.f32 %v4565, %v4570
        %v4641 = vmax.f32 %v4567, %v4572
        %v4642 = vmax.f32 %v4585, %v4590
        %v4643 = vmax.f32 %v4587, %v4592
        %v4644 = vmax.f32 %v4640, %v4642
        %v4645 = vmax.f32 %v4641, %v4643
        %v4646 = vmax.f32 %v4595, %v4600
        %v4647 = vmax.f32 %v4597, %v4602
        %v4648 = vmax.f32 %v4615, %v4620
        %v4649 = vmax.f32 %v4617, %v4622
        %v4650 = vmax.f32 %v4646, %v4648
        %v4651 = vmax.f32 %v4647, %v4649
        %v4652 = vmax.f32 %v4605, %v4610
        %v4653 = vmax.f32 %v4607, %v4612
        %v4654 = vmax.f32 %v4625, %v4630
        %v4655 = vmax.f32 %v4627, %v4632
        %v4656 = vmax.f32 %v4652, %v4654
        %v4657 = vmax.f32 %v4653, %v4655
        %4660 = vrot.lane.b32.xlu0 %v4644, 32
        %v4661 = vpop.permute.xlu0 %4660
        %4662 = vrot.lane.b32.xlu0 %v4645, 32
        %v4663 = vpop.permute.xlu0 %4662
        %4668 = vrot.lane.b32.xlu0 %v4650, 64
        %v4669 = vpop.permute.xlu0 %4668
        %4670 = vrot.lane.b32.xlu0 %v4651, 64
        %v4671 = vpop.permute.xlu0 %4670
        %4676 = vrot.lane.b32.xlu0 %v4656, 96
        %v4677 = vpop.permute.xlu0 %4676
        %4678 = vrot.lane.b32.xlu0 %v4657, 96
        %v4679 = vpop.permute.xlu0 %4678
        %v4682 = vsel %vm4143, %v4638, %v4661
        %v4683 = vsel %vm4143, %v4639, %v4663
        %v4684 = vsel %vm4200, %v4682, %v4669
        %v4685 = vsel %vm4200, %v4683, %v4671
        %v4686 = vsel %vm4266, %v4684, %v4677
        %v4687 = vsel %vm4266, %v4685, %v4679
        %v4688 = vld [vmem:[%s4] sm:$0x1]
        %v4690 = vperm.slane %v4688, 0
        %v4692 = vadd.f32 %v4686, %v4690
        %v4693 = vadd.f32 %v4687, %v4690
        %v4694 = vmax.f32 %v4692, 0.0
        %v4695 = vmax.f32 %v4693, 0.0
        %v4696 = vpack.c.bf16 %v4695, %v4694
        %v4697 = vld [vmem:[%s5] sm:$0xf]
        %v4698 = vld [vmem:[%s5 + $0x4] sm:$0xf]
        %v4699 = vld [vmem:[%s5 + $0x8] sm:$0xf]
        %v4700 = vld [vmem:[%s5 + $0xc] sm:$0xf]
        %v4701 = vld [vmem:[%s5 + $0x10] sm:$0xf]
        %v4702 = vld [vmem:[%s5 + $0x14] sm:$0xf]
        %v4703 = vld [vmem:[%s5 + $0x18] sm:$0xf]
        %v4704 = vld [vmem:[%s5 + $0x1c] sm:$0xf]
        %v4705 = vld [vmem:[%s5 + $0x20] sm:$0xf]
        %v4706 = vld [vmem:[%s5 + $0x24] sm:$0xf]
        %v4707 = vld [vmem:[%s5 + $0x28] sm:$0xf]
        %v4708 = vld [vmem:[%s5 + $0x2c] sm:$0xf]
        %v4709 = vld [vmem:[%s5 + $0x30] sm:$0xf]
        %v4710 = vld [vmem:[%s5 + $0x34] sm:$0xf]
        %v4711 = vld [vmem:[%s5 + $0x38] sm:$0xf]
        %v4712 = vld [vmem:[%s5 + $0x3c] sm:$0xf]
        %v4713 = vld [vmem:[%s6] sm:$0x1]
        %v4715 = vperm.slane %v4713, 0
        %v4733 = vunpack.c.l.b16 %v4697
        %v4734 = vunpack.c.l.b16 %v4698
        %v4735 = vunpack.c.l.b16 %v4699
        %v4736 = vunpack.c.l.b16 %v4700
        %v4737 = vunpack.c.l.b16 %v4701
        %v4738 = vunpack.c.l.b16 %v4702
        %v4739 = vunpack.c.l.b16 %v4703
        %v4740 = vunpack.c.l.b16 %v4704
        %v4741 = vunpack.c.l.b16 %v4705
        %v4742 = vunpack.c.l.b16 %v4706
        %v4743 = vunpack.c.l.b16 %v4707
        %v4744 = vunpack.c.l.b16 %v4708
        %v4745 = vunpack.c.l.b16 %v4709
        %v4746 = vunpack.c.l.b16 %v4710
        %v4747 = vunpack.c.l.b16 %v4711
        %v4748 = vunpack.c.l.b16 %v4712
        %v4749 = vpack.c.b16 %v4734, %v4733
        %v4750 = vpack.c.b16 %v4736, %v4735
        %v4751 = vpack.c.b16 %v4738, %v4737
        %v4752 = vpack.c.b16 %v4740, %v4739
        %v4753 = vpack.c.b16 %v4742, %v4741
        %v4754 = vpack.c.b16 %v4744, %v4743
        %v4755 = vpack.c.b16 %v4746, %v4745
        %v4756 = vpack.c.b16 %v4748, %v4747
        %4765 = vmatpush.bf16.msra.mxu0 %v4756
        %4766 = vmatpush.bf16.msra.mxu0 %v4755
        %4767 = vmatpush.bf16.msra.mxu0 %v4754
        %4768 = vmatpush.bf16.msra.mxu0 %v4753
        %4769 = vmatpush.bf16.msra.mxu0 %v4752
        %4770 = vmatpush.bf16.msra.mxu0 %v4751
        %4771 = vmatpush.bf16.msra.mxu0 %v4750
        %4772 = vmatpush.bf16.msra.mxu0 %v4749
        %4773 = vmatmul.bf16.gmra.mxu0 %v4696
        %v4774 = vpop.f32.mrf.mxu0
        %v4775 = vadd.f32 %v4715, %v4774
        %v4776 = vpop.f32.mrf.mxu0
        %v4777 = vadd.f32 %v4715, %v4776
        %4778 = vdwg.mxu0
        %v4779 = vmax.f32 %v4775, 0.0
        %v4780 = vmax.f32 %v4777, 0.0
        %v4781 = vpack.c.bf16 %v4780, %v4779
        %v4782 = vld [vmem:[%s7] sm:$0xf]
        %v4783 = vld [vmem:[%s7 + $0x4] sm:$0xf]
        %v4784 = vld [vmem:[%s7 + $0x8] sm:$0xf]
        %v4785 = vld [vmem:[%s7 + $0xc] sm:$0xf]
        %v4786 = vld [vmem:[%s7 + $0x10] sm:$0xf]
        %v4787 = vld [vmem:[%s7 + $0x14] sm:$0xf]
        %v4788 = vld [vmem:[%s7 + $0x18] sm:$0xf]
        %v4789 = vld [vmem:[%s7 + $0x1c] sm:$0xf]
        %v4790 = vld [vmem:[%s8] sm:$0x1]
        %v4792 = vperm.slane %v4790, 0
        %v4802 = vunpack.c.l.b16 %v4782
        %v4803 = vunpack.c.l.b16 %v4783
        %v4804 = vunpack.c.l.b16 %v4784
        %v4805 = vunpack.c.l.b16 %v4785
        %v4806 = vunpack.c.l.b16 %v4786
        %v4807 = vunpack.c.l.b16 %v4787
        %v4808 = vunpack.c.l.b16 %v4788
        %v4809 = vunpack.c.l.b16 %v4789
        %v4810 = vpack.c.b16 %v4803, %v4802
        %v4811 = vpack.c.b16 %v4805, %v4804
        %v4812 = vpack.c.b16 %v4807, %v4806
        %v4813 = vpack.c.b16 %v4809, %v4808
        %v4819 = vsel %vm4200, %v4781, 0
        %4821 = vmatpush.bf16.msra.mxu0 0
        %4822 = vmatpush.bf16.msra.mxu0 0
        %4823 = vmatpush.bf16.msra.mxu0 0
        %4824 = vmatpush.bf16.msra.mxu0 0
        %4825 = vmatpush.bf16.msra.mxu0 %v4813
        %4826 = vmatpush.bf16.msra.mxu0 %v4812
        %4827 = vmatpush.bf16.msra.mxu0 %v4811
        %4828 = vmatpush.bf16.msra.mxu0 %v4810
        %4829 = vmatmul.bf16.gmra.mxu0 %v4819
        %v4830 = vpop.f32.mrf.mxu0
        %v4831 = vadd.f32 %v4792, %v4830
        %v4832 = vpop.f32.mrf.mxu0
        %v4833 = vadd.f32 %v4792, %v4832
        %4834 = vdwg.mxu0
        %4835 = vst [vmem:[%s885] sm:$0xff] %v4831
        %4836 = vst [vmem:[%s885 + $0x8] sm:$0xff] %v4833
        %s4837 = smul.u32 2, %s20
        %p4838 = scmp.lt.s32.totalorder %s4837, 3
        %s4839 = scalar_select %p4838, %s4837, 3
        %s4840 = smul.addr %s4839, 8
        %s4841 = scalar_lea.vmem %s9, %s4840
        // Predicated region
        $region98: #{cifar_classifier_forward.1} parent=92 // pred_check
          %p4842 = pneg %p232
        $region99: #{cifar_classifier_forward.1} parent=92 // pred_check_branch
          %4844 = sbr.rel (%p4842) target = $region101
        $region100: #{cifar_classifier_forward.1} parent=92 // pred_region
          %s4845 = smul.u32 2, %s20
        $region101: #{cifar_classifier_forward.1} parent=92 // pred_fallthru
          _
      $region93: #{cifar_classifier_forward.1} parent=5 // pred_fallthru
        _
      %p4846 = scmp.le.s32.totalorder 2, %s15
      // Predicated region
      $region102: #{cifar_classifier_forward.1} parent=5 // pred_check
        %p4847 = pneg %p4846
      $region103: #{cifar_classifier_forward.1} parent=5 // pred_check_branch
        %4849 = sbr.rel (%p4847) target = $region105
      $region104: #{cifar_classifier_forward.1} parent=5 // pred_region
        %s4850 = ssub.s32 %s15, 2
        // Predicated region
        $region106: #{cifar_classifier_forward.1} parent=104 // pred_check
          %p4851 = pneg %p238
        $region107: #{cifar_classifier_forward.1} parent=104 // pred_check_branch
          %4853 = sbr.rel (%p4851) target = $region109
        $region108: #{cifar_classifier_forward.1} parent=104 // pred_region
          %s4854 = smul.u32 2, %s21
          %p4855 = scmp.lt.s32.totalorder %s4854, 3
          %s4856 = scalar_select %p4855, %s4854, 3
          %s4857 = smul.addr %s4856, 8
          %s4858 = scalar_lea.vmem %s9, %s4857
        $region109: #{cifar_classifier_forward.1} parent=104 // pred_fallthru
          _
      $region105: #{cifar_classifier_forward.1} parent=5 // pred_fallthru
        _
    $region6: #{cifar_classifier_forward.1} parent=1 // loop_footer
      %s19 = sadd.s32 1, %s15
    $region7: #{cifar_classifier_forward.1} parent=1 // loop_footer_branch
      %14 = sbr.rel target = $region3
    $region8: #{cifar_classifier_forward.1} parent=1 // loop_exit
      _

</llo_original>
